<compile_context>
chip_gen: v5e
topology: v5e:2x2
jax: 0.10.0
libtpu: 0.0.40
codegen_flags: <defaults>
</compile_context>

<pallas_src>
import functools

import numpy as np
import jax
import jax.numpy as jnp
from jax.experimental import pallas as pl
from jax.experimental.pallas import tpu as pltpu

_EPS = 1e-5
CHANNELS = (16, 32, 64)
STRIDES = (2, 2, 2)                       # total downsampling factor = 8
_FUSE_CLASSIFIER_MAX_LATENT_SPATIAL = 64

_GRID_PARAMS = pltpu.CompilerParams(
    dimension_semantics=("parallel",),    # batch grid -> v7x megacore + pipelining
    vmem_limit_bytes=64 * 1024 * 1024,    # headroom beyond the scoped default
)
_NO_GRID_PARAMS = pltpu.CompilerParams(vmem_limit_bytes=64 * 1024 * 1024)


# ----------------------------------------------------------------------------
# BlockSpec helpers (grid = (batch,)): per-sample activation blocks, resident
# weights (constant index_map), SMEM scalar for the learnable PReLU slope.
# ----------------------------------------------------------------------------
def _per_sample(shape):
    nd = len(shape)
    return pl.BlockSpec((1,) + tuple(shape[1:]), lambda i: (i,) + (0,) * (nd - 1))


def _resident(shape):
    nd = len(shape)
    return pl.BlockSpec(tuple(shape), lambda i: (0,) * nd)


def _smem_scalar():
    return pl.BlockSpec((1, 1), lambda i: (0, 0),
                        memory_space=pltpu.MemorySpace.SMEM)


# ----------------------------------------------------------------------------
# Pallas kernels
# ----------------------------------------------------------------------------
def _instance_norm(acc):
    """acc: (P, C) f32; normalize over the spatial axis per channel (one sample)."""
    mean = jnp.mean(acc, axis=0, keepdims=True)
    var = jnp.maximum(jnp.mean(acc * acc, axis=0, keepdims=True) - mean * mean, 0.0)
    return (acc - mean) * jax.lax.rsqrt(var + _EPS)


def _prelu(acc, slope):
    return jnp.where(acc > 0, acc, slope * acc)


def _enc_conv_kernel(p_ref, w_ref, b_ref, a_ref, o_ref):
    """One sample: (P, 9*Cin) x (9*Cin, Cout) GEMM + bias + InstanceNorm + PReLU."""
    acc = jnp.dot(p_ref[0], w_ref[...], preferred_element_type=jnp.float32)
    acc = acc + b_ref[...]
    acc = _prelu(_instance_norm(acc), a_ref[0, 0])
    o_ref[0] = acc.astype(o_ref.dtype)


def _enc_conv_classifier_kernel(p_ref, w_ref, b_ref, a_ref,
                                w1_ref, b1_ref, w2_ref, b2_ref,
                                enc_ref, cls_ref, *, latent_p):
    """Last encoder layer fused with the classifier head (Linear-ReLU-Linear)."""
    acc = jnp.dot(p_ref[0], w_ref[...], preferred_element_type=jnp.float32)
    acc = acc + b_ref[...]
    acc = _prelu(_instance_norm(acc), a_ref[0, 0])                 # (P, C) f32 latent
    enc_ref[0] = acc.astype(enc_ref.dtype)
    # h = relu(vec(latent) @ fc1 + b1); fc1 packed (P, C, 128): accumulate P small
    # (1,C)x(C,128) GEMMs in f32 — no flatten/concat of sublane slices.
    lat = acc.astype(w1_ref.dtype)
    h = b1_ref[...]                                                # (1, 128) f32
    for i in range(latent_p):
        h = h + jnp.dot(lat[i:i + 1, :], w1_ref[i],
                        preferred_element_type=jnp.float32)
    h = jnp.maximum(h, 0.0)
    # Dropout(0.5) is identity at inference.
    cls_ref[0] = (jnp.dot(h.astype(w2_ref.dtype), w2_ref[...],
                          preferred_element_type=jnp.float32) + b2_ref[...])


def _classifier_kernel(z_ref, w1_ref, b1_ref, w2_ref, b2_ref, o_ref):
    """Fallback standalone classifier (used only when the latent is large)."""
    h = jnp.dot(z_ref[...], w1_ref[...], preferred_element_type=jnp.float32) + b1_ref[...]
    h = jnp.maximum(h, 0.0)
    o_ref[...] = jnp.dot(h.astype(w2_ref.dtype), w2_ref[...],
                         preferred_element_type=jnp.float32) + b2_ref[...]


def _deconv_kernel(x_ref, xw_ref, xh_ref, xhw_ref,
                   wx_ref, ww_ref, wh_ref, whw_ref,
                   b_ref, a_ref, o_ref, *, cout, norm, act):
    """ConvTranspose2d(k=3, s=2, p=1, op=1), one sample, all 4 output parities at once.

    Inputs: x and its unit shifts x(w+1), x(h+1), x(h+1,w+1), each (1, h*w, Cin).
    Weights: (Cin, 4*Cout) with column groups = output parities [(0,0)|(0,1)|(1,0)|(1,1)].
    Output: parity-packed (1, h*w, 4*Cout) — lane-dense accumulator and store.
    InstanceNorm stats are pooled over all 4 parities (= full output spatial extent).
    """
    acc = jnp.dot(x_ref[0], wx_ref[...], preferred_element_type=jnp.float32)
    acc = acc + jnp.dot(xw_ref[0], ww_ref[...], preferred_element_type=jnp.float32)
    acc = acc + jnp.dot(xh_ref[0], wh_ref[...], preferred_element_type=jnp.float32)
    acc = acc + jnp.dot(xhw_ref[0], whw_ref[...], preferred_element_type=jnp.float32)
    acc = acc + b_ref[...]                                         # (1, 4*Cout)
    if norm:
        m = acc.shape[0]
        s = jnp.sum(acc, axis=0, keepdims=True)
        ss = jnp.sum(acc * acc, axis=0, keepdims=True)

        def fold(v):                                               # pool the 4 parities
            return (v[:, 0:cout] + v[:, cout:2 * cout]
                    + v[:, 2 * cout:3 * cout] + v[:, 3 * cout:4 * cout])

        cnt = 4.0 * m
        mean = fold(s) / cnt
        var = jnp.maximum(fold(ss) / cnt - mean * mean, 0.0)
        inv = jax.lax.rsqrt(var + _EPS)
        acc = (acc - jnp.tile(mean, (1, 4))) * jnp.tile(inv, (1, 4))
    if act:
        acc = _prelu(acc, a_ref[0, 0])
    o_ref[0] = acc.astype(o_ref.dtype)


# ----------------------------------------------------------------------------
# XLA glue (bf16) + layer wrappers
# ----------------------------------------------------------------------------
def _conv_s2_im2col(x):
    """NHWC stride-2, k=3, p=1 im2col: (N,H,W,C) -> ((N, Ho*Wo, 9*C), Ho, Wo).

    Patch feature order is (kh, kw, cin), matching pack_params' conv packing."""
    n, h, w, c = x.shape
    xp = jnp.pad(x, ((0, 0), (1, 1), (1, 1), (0, 0)))
    ho, wo = h // 2, w // 2
    taps = [xp[:, i:i + 2 * ho:2, j:j + 2 * wo:2, :] for i in range(3) for j in range(3)]
    patches = jnp.concatenate(taps, axis=-1)
    return patches.reshape(n, ho * wo, 9 * c), ho, wo


def _encoder_layer(x, wmat, bias, slope, *, interpret):
    n = x.shape[0]
    cout = wmat.shape[1]
    patches, ho, wo = _conv_s2_im2col(x)
    out = pl.pallas_call(
        _enc_conv_kernel,
        grid=(n,),
        out_shape=jax.ShapeDtypeStruct((n, ho * wo, cout), x.dtype),
        in_specs=[_per_sample(patches.shape), _resident(wmat.shape),
                  _resident(bias.shape), _smem_scalar()],
        out_specs=_per_sample((n, ho * wo, cout)),
        compiler_params=None if interpret else _GRID_PARAMS,
        interpret=interpret,
    )(patches, wmat, bias, slope)
    return out.reshape(n, ho, wo, cout)


def _encoder_layer_with_classifier(x, wmat, bias, slope,
                                   fc1_w, fc1_b, fc2_w, fc2_b, *, interpret):
    n = x.shape[0]
    cout = wmat.shape[1]
    patches, ho, wo = _conv_s2_im2col(x)
    p_lat = ho * wo
    n_cls = fc2_w.shape[1]
    enc, cls = pl.pallas_call(
        functools.partial(_enc_conv_classifier_kernel, latent_p=p_lat),
        grid=(n,),
        out_shape=(jax.ShapeDtypeStruct((n, p_lat, cout), x.dtype),
                   jax.ShapeDtypeStruct((n, 1, n_cls), jnp.float32)),
        in_specs=[_per_sample(patches.shape), _resident(wmat.shape),
                  _resident(bias.shape), _smem_scalar(),
                  _resident(fc1_w.shape), _resident(fc1_b.shape),
                  _resident(fc2_w.shape), _resident(fc2_b.shape)],
        out_specs=(_per_sample((n, p_lat, cout)), _per_sample((n, 1, n_cls))),
        compiler_params=None if interpret else _GRID_PARAMS,
        interpret=interpret,
    )(patches, wmat, bias, slope, fc1_w, fc1_b, fc2_w, fc2_b)
    return enc.reshape(n, ho, wo, cout), cls[:, 0, :]


def _classifier(z, fc1_w, fc1_b, fc2_w, fc2_b, *, interpret):
    n = z.shape[0]
    vmem = pl.BlockSpec(memory_space=pltpu.MemorySpace.VMEM)
    return pl.pallas_call(
        _classifier_kernel,
        out_shape=jax.ShapeDtypeStruct((n, fc2_w.shape[1]), jnp.float32),
        in_specs=[vmem] * 5,
        out_specs=vmem,
        compiler_params=None if interpret else _NO_GRID_PARAMS,
        interpret=interpret,
    )(z, fc1_w.reshape(-1, fc1_w.shape[-1]), fc1_b, fc2_w, fc2_b)


def _decoder_layer(x, wmats, bias, slope, *, norm, act, out_dtype, interpret):
    """ConvTranspose2d(k=3,s=2,p=1,op=1) [+ InstanceNorm + PReLU]: (N,H,W,Cin)->(N,2H,2W,Cout)."""
    n, h, w, c = x.shape
    wx, ww, wh, whw = wmats
    cout = wx.shape[1] // 4
    m = h * w
    # Unit-shifted taps (zero on the far boundary = the output_padding side); passed
    # separately in the compute dtype — no wide concats are materialized in XLA.
    xw = jnp.pad(x[:, :, 1:, :], ((0, 0), (0, 0), (0, 1), (0, 0)))
    xh = jnp.pad(x[:, 1:, :, :], ((0, 0), (0, 1), (0, 0), (0, 0)))
    xhw = jnp.pad(x[:, 1:, 1:, :], ((0, 0), (0, 1), (0, 1), (0, 0)))
    flat = lambda t: t.reshape(n, m, c)
    packed = pl.pallas_call(
        functools.partial(_deconv_kernel, cout=cout, norm=norm, act=act),
        grid=(n,),
        out_shape=jax.ShapeDtypeStruct((n, m, 4 * cout), out_dtype),
        in_specs=[_per_sample((n, m, c))] * 4 + [_resident(wx.shape)] * 4
                 + [_resident(bias.shape), _smem_scalar()],
        out_specs=_per_sample((n, m, 4 * cout)),
        compiler_params=None if interpret else _GRID_PARAMS,
        interpret=interpret,
    )(flat(x), flat(xw), flat(xh), flat(xhw), wx, ww, wh, whw, bias, slope)
    # parity interleave: packed[n, h*w, (a,b,c)] -> y[n, 2h+a, 2w+b, c]
    y = packed.reshape(n, h, w, 2, 2, cout).transpose(0, 1, 3, 2, 4, 5)
    return y.reshape(n, 2 * h, 2 * w, cout)


# ----------------------------------------------------------------------------
# Parameters (PyTorch-layout "raw" weights + one-time packing for the kernels)
# ----------------------------------------------------------------------------
def init_raw_params(key, *, in_channels=1, out_channels=1, image_size=16):
    """PyTorch-layout f32 params: Conv2d (Cout,Cin,3,3), ConvTranspose2d (Cin,Cout,3,3),
    Linear stored as (in, out). PReLU slopes are learnable scalars (init 0.25)."""
    assert image_size % 8 == 0
    c1, c2, c3 = CHANNELS
    es = image_size // 8                 # spatial size after 3 stride-2 convs
    flattened = c3 * es * es             # mirrors the dummy-input trick in __init__
    ks = jax.random.split(key, 16)

    def w(k, shape, fan_in):
        return jax.random.normal(k, shape, jnp.float32) / np.sqrt(fan_in)

    return {
        "e1_w": w(ks[0], (c1, in_channels, 3, 3), in_channels * 9),
        "e2_w": w(ks[1], (c2, c1, 3, 3), c1 * 9),
        "e3_w": w(ks[2], (c3, c2, 3, 3), c2 * 9),
        "d1_w": w(ks[3], (c3, c2, 3, 3), c3 * 9),
        "d2_w": w(ks[4], (c2, c1, 3, 3), c2 * 9),
        "d3_w": w(ks[5], (c1, out_channels, 3, 3), c1 * 9),
        "e1_b": 0.1 * jax.random.normal(ks[6], (c1,), jnp.float32),
        "e2_b": 0.1 * jax.random.normal(ks[7], (c2,), jnp.float32),
        "e3_b": 0.1 * jax.random.normal(ks[8], (c3,), jnp.float32),
        "d1_b": 0.1 * jax.random.normal(ks[9], (c2,), jnp.float32),
        "d2_b": 0.1 * jax.random.normal(ks[10], (c1,), jnp.float32),
        "d3_b": 0.1 * jax.random.normal(ks[11], (out_channels,), jnp.float32),
        "e1_a": jnp.float32(0.25), "e2_a": jnp.float32(0.25), "e3_a": jnp.float32(0.25),
        "d1_a": jnp.float32(0.25), "d2_a": jnp.float32(0.25),
        "fc1_w": w(ks[12], (flattened, 128), flattened),
        "fc1_b": jnp.zeros((128,), jnp.float32),
        "fc2_w": w(ks[13], (128, 2), 128),
        "fc2_b": jnp.zeros((2,), jnp.float32),
    }


def pack_params(raw, *, image_size=16, compute_dtype=jnp.bfloat16):
    """One-time packing of raw PyTorch-layout weights into kernel-ready GEMM matrices."""
    cd = compute_dtype
    c3 = CHANNELS[2]
    es = image_size // 8

    def pack_conv(wt):                    # (Cout,Cin,3,3) -> (9*Cin, Cout), rows (kh,kw,cin)
        cout = wt.shape[0]
        return wt.transpose(2, 3, 1, 0).reshape(-1, cout).astype(cd)

    def pack_deconv(wt):
        # ConvTranspose2d weight (Cin,Cout,3,3) -> 4 tap matrices (Cin, 4*Cout):
        # column groups are the output parities [(0,0)|(0,1)|(1,0)|(1,1)];
        # the 4 matrices correspond to taps x, x(w+1), x(h+1), x(h+1,w+1).
        cin, cout = wt.shape[0], wt.shape[1]
        z = jnp.zeros((cin, cout), wt.dtype)
        wx = jnp.concatenate([wt[:, :, 1, 1], wt[:, :, 1, 2],
                              wt[:, :, 2, 1], wt[:, :, 2, 2]], axis=1)
        ww = jnp.concatenate([z, wt[:, :, 1, 0], z, wt[:, :, 2, 0]], axis=1)
        wh = jnp.concatenate([z, z, wt[:, :, 0, 1], wt[:, :, 0, 2]], axis=1)
        whw = jnp.concatenate([z, z, z, wt[:, :, 0, 0]], axis=1)
        return tuple(mm.astype(cd) for mm in (wx, ww, wh, whw))

    def row(b):
        return b.reshape(1, -1).astype(jnp.float32)

    def row4(b):                           # deconv bias tiled over the 4 parity groups
        return jnp.tile(b.reshape(1, -1), (1, 4)).astype(jnp.float32)

    def scal(a):
        return jnp.asarray(a, jnp.float32).reshape(1, 1)

    # fc1 rows are (c,h,w)-ordered (PyTorch NCHW flatten); repack to (spatial, c, 128)
    # i.e. the (h, w, c) order produced by the NHWC kernel path (zero runtime cost).
    fc1 = raw["fc1_w"].reshape(c3, es, es, -1).transpose(1, 2, 0, 3).reshape(es * es, c3, -1)

    return {
        "e1_w": pack_conv(raw["e1_w"]), "e1_b": row(raw["e1_b"]), "e1_a": scal(raw["e1_a"]),
        "e2_w": pack_conv(raw["e2_w"]), "e2_b": row(raw["e2_b"]), "e2_a": scal(raw["e2_a"]),
        "e3_w": pack_conv(raw["e3_w"]), "e3_b": row(raw["e3_b"]), "e3_a": scal(raw["e3_a"]),
        "d1_w": pack_deconv(raw["d1_w"]), "d1_b": row4(raw["d1_b"]), "d1_a": scal(raw["d1_a"]),
        "d2_w": pack_deconv(raw["d2_w"]), "d2_b": row4(raw["d2_b"]), "d2_a": scal(raw["d2_a"]),
        "d3_w": pack_deconv(raw["d3_w"]), "d3_b": row4(raw["d3_b"]), "d3_a": scal(0.0),
        "fc1_w": fc1.astype(cd), "fc1_b": row(raw["fc1_b"]),
        "fc2_w": raw["fc2_w"].astype(cd), "fc2_b": row(raw["fc2_b"]),
    }


# ----------------------------------------------------------------------------
# Forward
# ----------------------------------------------------------------------------
@functools.partial(jax.jit, static_argnames=("interpret",))
def supervised_autoencoder_forward(params, x, interpret=False):
    """x: (N, Cin, H, W) f32 (PyTorch NCHW). Returns (reconstruction, classification)."""
    cdtype = params["e1_w"].dtype
    xh = jnp.transpose(x, (0, 2, 3, 1)).astype(cdtype)             # NCHW -> NHWC once

    h = _encoder_layer(xh, params["e1_w"], params["e1_b"], params["e1_a"],
                       interpret=interpret)
    h = _encoder_layer(h, params["e2_w"], params["e2_b"], params["e2_a"],
                       interpret=interpret)

    latent_spatial = (h.shape[1] // 2) * (h.shape[2] // 2)
    if latent_spatial <= _FUSE_CLASSIFIER_MAX_LATENT_SPATIAL:
        encoded, classification = _encoder_layer_with_classifier(
            h, params["e3_w"], params["e3_b"], params["e3_a"],
            params["fc1_w"], params["fc1_b"], params["fc2_w"], params["fc2_b"],
            interpret=interpret)
    else:
        encoded = _encoder_layer(h, params["e3_w"], params["e3_b"], params["e3_a"],
                                 interpret=interpret)
        z = encoded.reshape(encoded.shape[0], -1)
        classification = _classifier(z, params["fc1_w"], params["fc1_b"],
                                     params["fc2_w"], params["fc2_b"],
                                     interpret=interpret)

    d = _decoder_layer(encoded, params["d1_w"], params["d1_b"], params["d1_a"],
                       norm=True, act=True, out_dtype=cdtype, interpret=interpret)
    d = _decoder_layer(d, params["d2_w"], params["d2_b"], params["d2_a"],
                       norm=True, act=True, out_dtype=cdtype, interpret=interpret)
    rec = _decoder_layer(d, params["d3_w"], params["d3_b"], params["d3_a"],
                         norm=False, act=False, out_dtype=jnp.float32,
                         interpret=interpret)
    return jnp.transpose(rec, (0, 3, 1, 2)).astype(jnp.float32), classification


# ----------------------------------------------------------------------------
# Pure-JAX (XLA) reference with PyTorch semantics, for validation
# ----------------------------------------------------------------------------
def _reference_forward(raw, x):
    def inorm(y):
        mean = y.mean(axis=(2, 3), keepdims=True)
        var = ((y - mean) ** 2).mean(axis=(2, 3), keepdims=True)
        return (y - mean) / jnp.sqrt(var + _EPS)

    def prelu(y, a):
        return jnp.where(y > 0, y, a * y)

    dn = ("NCHW", "OIHW", "NCHW")
    hp = jax.lax.Precision.HIGHEST

    def conv(y, w, b):
        out = jax.lax.conv_general_dilated(y, w, (2, 2), ((1, 1), (1, 1)),
                                           dimension_numbers=dn, precision=hp)
        return out + b[None, :, None, None]

    def deconv(y, w, b):    # ConvTranspose2d(k=3, s=2, p=1, op=1) via dilated-input conv
        wf = jnp.flip(w, (2, 3)).transpose(1, 0, 2, 3)
        out = jax.lax.conv_general_dilated(y, wf, (1, 1), ((1, 2), (1, 2)),
                                           lhs_dilation=(2, 2),
                                           dimension_numbers=dn, precision=hp)
        return out + b[None, :, None, None]

    h = prelu(inorm(conv(x, raw["e1_w"], raw["e1_b"])), raw["e1_a"])
    h = prelu(inorm(conv(h, raw["e2_w"], raw["e2_b"])), raw["e2_a"])
    enc = prelu(inorm(conv(h, raw["e3_w"], raw["e3_b"])), raw["e3_a"])
    z = enc.reshape(enc.shape[0], -1)
    c = jnp.maximum(z @ raw["fc1_w"] + raw["fc1_b"], 0.0)
    cls = c @ raw["fc2_w"] + raw["fc2_b"]
    d = prelu(inorm(deconv(enc, raw["d1_w"], raw["d1_b"])), raw["d1_a"])
    d = prelu(inorm(deconv(d, raw["d2_w"], raw["d2_b"])), raw["d2_a"])
    rec = deconv(d, raw["d3_w"], raw["d3_b"])
    return rec, cls


if __name__ == "__main__":
    N, CIN, H, W = 2, 1, 16, 16
    x = jax.random.normal(jax.random.PRNGKey(0), (N, CIN, H, W), jnp.float32)

    raw = init_raw_params(jax.random.PRNGKey(42), in_channels=CIN, out_channels=1,
                          image_size=H)
    rec_ref, cls_ref = _reference_forward(raw, x)

    def rel_l2(a, b):
        return float(jnp.linalg.norm(a - b) / (jnp.linalg.norm(b) + 1e-12))

    # 1) Production path: bf16 GEMM inputs, compiled TPU kernels.
    params = pack_params(raw, image_size=H, compute_dtype=jnp.bfloat16)
    recon, cls = supervised_autoencoder_forward(params, x)
    jax.block_until_ready((recon, cls))

    assert recon.shape == (N, 1, H, W), recon.shape
    assert cls.shape == (N, 2), cls.shape
    assert bool(jnp.all(jnp.isfinite(recon))) and bool(jnp.all(jnp.isfinite(cls)))
    assert rel_l2(recon, rec_ref) < 0.15, rel_l2(recon, rec_ref)
    assert rel_l2(cls, cls_ref) < 0.25, rel_l2(cls, cls_ref)

    # 2) Tight-tolerance structural check: f32 weights + interpret mode (exact f32
    #    dots) — catches any parity / tap-packing bug the bf16 tolerance could hide.
    params32 = pack_params(raw, image_size=H, compute_dtype=jnp.float32)
    recon32, cls32 = supervised_autoencoder_forward(params32, x, interpret=True)
    jax.block_until_ready((recon32, cls32))
    assert rel_l2(recon32, rec_ref) < 1e-3, rel_l2(recon32, rec_ref)
    assert rel_l2(cls32, cls_ref) < 1e-3, rel_l2(cls32, cls_ref)

    print("KERNEL_OK")
</pallas_src>

<mosaic_0001>
module attributes {stable_mosaic.version = 11 : i64} {
  func.func @_enc_conv_kernel(%arg0: i32, %arg1: memref<1x64x9xbf16, #tpu.memory_space<vmem>>, %arg2: memref<9x16xbf16, #tpu.memory_space<vmem>>, %arg3: memref<1x16xf32, #tpu.memory_space<vmem>>, %arg4: memref<1x1xf32, #tpu.memory_space<smem>>, %arg5: memref<1x64x16xbf16, #tpu.memory_space<vmem>>) attributes {dimension_semantics = [#tpu.dimension_semantics<parallel>], iteration_bounds = array<i64: 2>, scalar_prefetch = 0 : i64, scratch_operands = 0 : i64, tpu.core_type = #tpu.core_type<tc>, window_params = [{transform_indices = @transform_0, window_bounds = array<i64: 1, 64, 9>}, {pipeline_mode = #tpu.pipeline_mode<synchronous>, transform_indices = @transform_1, window_bounds = array<i64: 9, 16>}, {pipeline_mode = #tpu.pipeline_mode<synchronous>, transform_indices = @transform_2, window_bounds = array<i64: 1, 16>}, {transform_indices = @transform_3, window_bounds = array<i64: 1, 1>}, {transform_indices = @transform_4, window_bounds = array<i64: 1, 64, 16>}]} {
    %c0 = arith.constant 0 : index
    %c0_0 = arith.constant 0 : index
    %c0_1 = arith.constant 0 : index
    %0 = vector.load %arg1[%c0, %c0_0, %c0_1] : memref<1x64x9xbf16, #tpu.memory_space<vmem>>, vector<1x64x9xbf16>
    %1 = vector.shape_cast %0 : vector<1x64x9xbf16> to vector<64x9xbf16>
    %c0_2 = arith.constant 0 : index
    %c0_3 = arith.constant 0 : index
    %2 = vector.load %arg2[%c0_2, %c0_3] : memref<9x16xbf16, #tpu.memory_space<vmem>>, vector<9x16xbf16>
    %cst = arith.constant dense<0.000000e+00> : vector<64x16xf32>
    %3 = tpu.matmul %1, %2, %cst {dimension_numbers = #tpu.dot_dimension_numbers<[1], [0], [0], [1], [0, 0, 1, 1], [], []>} : vector<64x9xbf16>, vector<9x16xbf16>, vector<64x16xf32> -> vector<64x16xf32>
    %c0_4 = arith.constant 0 : index
    %c0_5 = arith.constant 0 : index
    %4 = vector.load %arg3[%c0_4, %c0_5] : memref<1x16xf32, #tpu.memory_space<vmem>>, vector<1x16xf32>
    %5 = vector.broadcast %4 : vector<1x16xf32> to vector<64x16xf32>
    %6 = arith.addf %3, %5 : vector<64x16xf32>
    %cst_6 = arith.constant dense<0.000000e+00> : vector<16xf32>
    %7 = vector.multi_reduction <add>, %6, %cst_6 [0] : vector<64x16xf32> to vector<16xf32>
    %8 = vector.shape_cast %7 : vector<16xf32> to vector<1x16xf32>
    %cst_7 = arith.constant 6.400000e+01 : f32
    %9 = vector.broadcast %cst_7 : f32 to vector<1x16xf32>
    %10 = arith.divf %8, %9 : vector<1x16xf32>
    %11 = arith.mulf %6, %6 : vector<64x16xf32>
    %cst_8 = arith.constant dense<0.000000e+00> : vector<16xf32>
    %12 = vector.multi_reduction <add>, %11, %cst_8 [0] : vector<64x16xf32> to vector<16xf32>
    %13 = vector.shape_cast %12 : vector<16xf32> to vector<1x16xf32>
    %cst_9 = arith.constant 6.400000e+01 : f32
    %14 = vector.broadcast %cst_9 : f32 to vector<1x16xf32>
    %15 = arith.divf %13, %14 : vector<1x16xf32>
    %16 = arith.mulf %10, %10 : vector<1x16xf32>
    %17 = arith.subf %15, %16 : vector<1x16xf32>
    %cst_10 = arith.constant 0.000000e+00 : f32
    %18 = vector.broadcast %cst_10 : f32 to vector<1x16xf32>
    %19 = arith.maximumf %17, %18 : vector<1x16xf32>
    %20 = vector.broadcast %10 : vector<1x16xf32> to vector<64x16xf32>
    %21 = arith.subf %6, %20 : vector<64x16xf32>
    %cst_11 = arith.constant 9.99999974E-6 : f32
    %22 = vector.broadcast %cst_11 : f32 to vector<1x16xf32>
    %23 = arith.addf %19, %22 : vector<1x16xf32>
    %24 = math.rsqrt %23 : vector<1x16xf32>
    %25 = vector.broadcast %24 : vector<1x16xf32> to vector<64x16xf32>
    %26 = arith.mulf %21, %25 : vector<64x16xf32>
    %c0_12 = arith.constant 0 : index
    %c0_13 = arith.constant 0 : index
    %27 = memref.load %arg4[%c0_12, %c0_13] : memref<1x1xf32, #tpu.memory_space<smem>>
    %cst_14 = arith.constant 0.000000e+00 : f32
    %28 = vector.broadcast %cst_14 : f32 to vector<64x16xf32>
    %29 = arith.cmpf ogt, %26, %28 : vector<64x16xf32>
    %30 = vector.broadcast %27 : f32 to vector<64x16xf32>
    %31 = arith.mulf %30, %26 : vector<64x16xf32>
    %32 = arith.select %29, %26, %31 : vector<64x16xi1>, vector<64x16xf32>
    %33 = arith.truncf %32 : vector<64x16xf32> to vector<64x16xbf16>
    %c0_15 = arith.constant 0 : index
    %c0_16 = arith.constant 0 : index
    %c0_17 = arith.constant 0 : index
    %34 = vector.load %arg5[%c0_15, %c0_16, %c0_17] : memref<1x64x16xbf16, #tpu.memory_space<vmem>>, vector<1x64x16xbf16>
    %35 = vector.shape_cast %34 : vector<1x64x16xbf16> to vector<64x16xbf16>
    %36 = vector.shape_cast %33 : vector<64x16xbf16> to vector<1x64x16xbf16>
    tpu.vector_store %arg5[%c0_15, %c0_16, %c0_17], %36 {strides = array<i32>} : memref<1x64x16xbf16, #tpu.memory_space<vmem>>, vector<1x64x16xbf16>,
    return
  }
  func.func @transform_0(%arg0: i32) -> (i32, i32, i32) {
    %c0_i32 = arith.constant 0 : i32
    %c0_i32_0 = arith.constant 0 : i32
    %c0_i32_1 = arith.constant 0 : i32
    return %arg0, %c0_i32, %c0_i32_0 : i32, i32, i32
  }
  func.func @transform_1(%arg0: i32) -> (i32, i32) {
    %c0_i32 = arith.constant 0 : i32
    %c0_i32_0 = arith.constant 0 : i32
    %c0_i32_1 = arith.constant 0 : i32
    return %c0_i32, %c0_i32_0 : i32, i32
  }
  func.func @transform_2(%arg0: i32) -> (i32, i32) {
    %c0_i32 = arith.constant 0 : i32
    %c0_i32_0 = arith.constant 0 : i32
    %c0_i32_1 = arith.constant 0 : i32
    return %c0_i32, %c0_i32_0 : i32, i32
  }
  func.func @transform_3(%arg0: i32) -> (i32, i32) {
    %c0_i32 = arith.constant 0 : i32
    %c0_i32_0 = arith.constant 0 : i32
    %c0_i32_1 = arith.constant 0 : i32
    return %c0_i32, %c0_i32_0 : i32, i32
  }
  func.func @transform_4(%arg0: i32) -> (i32, i32, i32) {
    %c0_i32 = arith.constant 0 : i32
    %c0_i32_0 = arith.constant 0 : i32
    %c0_i32_1 = arith.constant 0 : i32
    return %arg0, %c0_i32, %c0_i32_0 : i32, i32, i32
  }
}

module attributes {stable_mosaic.version = 11 : i64} {
  func.func @_enc_conv_kernel(%arg0: i32, %arg1: memref<1x16x144xbf16, #tpu.memory_space<vmem>>, %arg2: memref<144x32xbf16, #tpu.memory_space<vmem>>, %arg3: memref<1x32xf32, #tpu.memory_space<vmem>>, %arg4: memref<1x1xf32, #tpu.memory_space<smem>>, %arg5: memref<1x16x32xbf16, #tpu.memory_space<vmem>>) attributes {dimension_semantics = [#tpu.dimension_semantics<parallel>], iteration_bounds = array<i64: 2>, scalar_prefetch = 0 : i64, scratch_operands = 0 : i64, tpu.core_type = #tpu.core_type<tc>, window_params = [{transform_indices = @transform_0, window_bounds = array<i64: 1, 16, 144>}, {pipeline_mode = #tpu.pipeline_mode<synchronous>, transform_indices = @transform_1, window_bounds = array<i64: 144, 32>}, {pipeline_mode = #tpu.pipeline_mode<synchronous>, transform_indices = @transform_2, window_bounds = array<i64: 1, 32>}, {transform_indices = @transform_3, window_bounds = array<i64: 1, 1>}, {transform_indices = @transform_4, window_bounds = array<i64: 1, 16, 32>}]} {
    %c0 = arith.constant 0 : index
    %c0_0 = arith.constant 0 : index
    %c0_1 = arith.constant 0 : index
    %0 = vector.load %arg1[%c0, %c0_0, %c0_1] : memref<1x16x144xbf16, #tpu.memory_space<vmem>>, vector<1x16x144xbf16>
    %1 = vector.shape_cast %0 : vector<1x16x144xbf16> to vector<16x144xbf16>
    %c0_2 = arith.constant 0 : index
    %c0_3 = arith.constant 0 : index
    %2 = vector.load %arg2[%c0_2, %c0_3] : memref<144x32xbf16, #tpu.memory_space<vmem>>, vector<144x32xbf16>
    %cst = arith.constant dense<0.000000e+00> : vector<16x32xf32>
    %3 = tpu.matmul %1, %2, %cst {dimension_numbers = #tpu.dot_dimension_numbers<[1], [0], [0], [1], [0, 0, 1, 1], [], []>} : vector<16x144xbf16>, vector<144x32xbf16>, vector<16x32xf32> -> vector<16x32xf32>
    %c0_4 = arith.constant 0 : index
    %c0_5 = arith.constant 0 : index
    %4 = vector.load %arg3[%c0_4, %c0_5] : memref<1x32xf32, #tpu.memory_space<vmem>>, vector<1x32xf32>
    %5 = vector.broadcast %4 : vector<1x32xf32> to vector<16x32xf32>
    %6 = arith.addf %3, %5 : vector<16x32xf32>
    %cst_6 = arith.constant dense<0.000000e+00> : vector<32xf32>
    %7 = vector.multi_reduction <add>, %6, %cst_6 [0] : vector<16x32xf32> to vector<32xf32>
    %8 = vector.shape_cast %7 : vector<32xf32> to vector<1x32xf32>
    %cst_7 = arith.constant 1.600000e+01 : f32
    %9 = vector.broadcast %cst_7 : f32 to vector<1x32xf32>
    %10 = arith.divf %8, %9 : vector<1x32xf32>
    %11 = arith.mulf %6, %6 : vector<16x32xf32>
    %cst_8 = arith.constant dense<0.000000e+00> : vector<32xf32>
    %12 = vector.multi_reduction <add>, %11, %cst_8 [0] : vector<16x32xf32> to vector<32xf32>
    %13 = vector.shape_cast %12 : vector<32xf32> to vector<1x32xf32>
    %cst_9 = arith.constant 1.600000e+01 : f32
    %14 = vector.broadcast %cst_9 : f32 to vector<1x32xf32>
    %15 = arith.divf %13, %14 : vector<1x32xf32>
    %16 = arith.mulf %10, %10 : vector<1x32xf32>
    %17 = arith.subf %15, %16 : vector<1x32xf32>
    %cst_10 = arith.constant 0.000000e+00 : f32
    %18 = vector.broadcast %cst_10 : f32 to vector<1x32xf32>
    %19 = arith.maximumf %17, %18 : vector<1x32xf32>
    %20 = vector.broadcast %10 : vector<1x32xf32> to vector<16x32xf32>
    %21 = arith.subf %6, %20 : vector<16x32xf32>
    %cst_11 = arith.constant 9.99999974E-6 : f32
    %22 = vector.broadcast %cst_11 : f32 to vector<1x32xf32>
    %23 = arith.addf %19, %22 : vector<1x32xf32>
    %24 = math.rsqrt %23 : vector<1x32xf32>
    %25 = vector.broadcast %24 : vector<1x32xf32> to vector<16x32xf32>
    %26 = arith.mulf %21, %25 : vector<16x32xf32>
    %c0_12 = arith.constant 0 : index
    %c0_13 = arith.constant 0 : index
    %27 = memref.load %arg4[%c0_12, %c0_13] : memref<1x1xf32, #tpu.memory_space<smem>>
    %cst_14 = arith.constant 0.000000e+00 : f32
    %28 = vector.broadcast %cst_14 : f32 to vector<16x32xf32>
    %29 = arith.cmpf ogt, %26, %28 : vector<16x32xf32>
    %30 = vector.broadcast %27 : f32 to vector<16x32xf32>
    %31 = arith.mulf %30, %26 : vector<16x32xf32>
    %32 = arith.select %29, %26, %31 : vector<16x32xi1>, vector<16x32xf32>
    %33 = arith.truncf %32 : vector<16x32xf32> to vector<16x32xbf16>
    %c0_15 = arith.constant 0 : index
    %c0_16 = arith.constant 0 : index
    %c0_17 = arith.constant 0 : index
    %34 = vector.load %arg5[%c0_15, %c0_16, %c0_17] : memref<1x16x32xbf16, #tpu.memory_space<vmem>>, vector<1x16x32xbf16>
    %35 = vector.shape_cast %34 : vector<1x16x32xbf16> to vector<16x32xbf16>
    %36 = vector.shape_cast %33 : vector<16x32xbf16> to vector<1x16x32xbf16>
    tpu.vector_store %arg5[%c0_15, %c0_16, %c0_17], %36 {strides = array<i32>} : memref<1x16x32xbf16, #tpu.memory_space<vmem>>, vector<1x16x32xbf16>,
    return
  }
  func.func @transform_0(%arg0: i32) -> (i32, i32, i32) {
    %c0_i32 = arith.constant 0 : i32
    %c0_i32_0 = arith.constant 0 : i32
    %c0_i32_1 = arith.constant 0 : i32
    return %arg0, %c0_i32, %c0_i32_0 : i32, i32, i32
  }
  func.func @transform_1(%arg0: i32) -> (i32, i32) {
    %c0_i32 = arith.constant 0 : i32
    %c0_i32_0 = arith.constant 0 : i32
    %c0_i32_1 = arith.constant 0 : i32
    return %c0_i32, %c0_i32_0 : i32, i32
  }
  func.func @transform_2(%arg0: i32) -> (i32, i32) {
    %c0_i32 = arith.constant 0 : i32
    %c0_i32_0 = arith.constant 0 : i32
    %c0_i32_1 = arith.constant 0 : i32
    return %c0_i32, %c0_i32_0 : i32, i32
  }
  func.func @transform_3(%arg0: i32) -> (i32, i32) {
    %c0_i32 = arith.constant 0 : i32
    %c0_i32_0 = arith.constant 0 : i32
    %c0_i32_1 = arith.constant 0 : i32
    return %c0_i32, %c0_i32_0 : i32, i32
  }
  func.func @transform_4(%arg0: i32) -> (i32, i32, i32) {
    %c0_i32 = arith.constant 0 : i32
    %c0_i32_0 = arith.constant 0 : i32
    %c0_i32_1 = arith.constant 0 : i32
    return %arg0, %c0_i32, %c0_i32_0 : i32, i32, i32
  }
}

module attributes {stable_mosaic.version = 11 : i64} {
  func.func @_enc_conv_classifier_kernel(%arg0: i32, %arg1: memref<1x4x288xbf16, #tpu.memory_space<vmem>>, %arg2: memref<288x64xbf16, #tpu.memory_space<vmem>>, %arg3: memref<1x64xf32, #tpu.memory_space<vmem>>, %arg4: memref<1x1xf32, #tpu.memory_space<smem>>, %arg5: memref<4x64x128xbf16, #tpu.memory_space<vmem>>, %arg6: memref<1x128xf32, #tpu.memory_space<vmem>>, %arg7: memref<128x2xbf16, #tpu.memory_space<vmem>>, %arg8: memref<1x2xf32, #tpu.memory_space<vmem>>, %arg9: memref<1x4x64xbf16, #tpu.memory_space<vmem>>, %arg10: memref<1x1x2xf32, #tpu.memory_space<vmem>>) attributes {dimension_semantics = [#tpu.dimension_semantics<parallel>], iteration_bounds = array<i64: 2>, scalar_prefetch = 0 : i64, scratch_operands = 0 : i64, tpu.core_type = #tpu.core_type<tc>, window_params = [{transform_indices = @transform_0, window_bounds = array<i64: 1, 4, 288>}, {pipeline_mode = #tpu.pipeline_mode<synchronous>, transform_indices = @transform_1, window_bounds = array<i64: 288, 64>}, {pipeline_mode = #tpu.pipeline_mode<synchronous>, transform_indices = @transform_2, window_bounds = array<i64: 1, 64>}, {transform_indices = @transform_3, window_bounds = array<i64: 1, 1>}, {pipeline_mode = #tpu.pipeline_mode<synchronous>, transform_indices = @transform_4, window_bounds = array<i64: 4, 64, 128>}, {pipeline_mode = #tpu.pipeline_mode<synchronous>, transform_indices = @transform_5, window_bounds = array<i64: 1, 128>}, {pipeline_mode = #tpu.pipeline_mode<synchronous>, transform_indices = @transform_6, window_bounds = array<i64: 128, 2>}, {pipeline_mode = #tpu.pipeline_mode<synchronous>, transform_indices = @transform_7, window_bounds = array<i64: 1, 2>}, {transform_indices = @transform_8, window_bounds = array<i64: 1, 4, 64>}, {transform_indices = @transform_9, window_bounds = array<i64: 1, 1, 2>}]} {
    %c0 = arith.constant 0 : index
    %c0_0 = arith.constant 0 : index
    %c0_1 = arith.constant 0 : index
    %0 = vector.load %arg1[%c0, %c0_0, %c0_1] : memref<1x4x288xbf16, #tpu.memory_space<vmem>>, vector<1x4x288xbf16>
    %1 = vector.shape_cast %0 : vector<1x4x288xbf16> to vector<4x288xbf16>
    %c0_2 = arith.constant 0 : index
    %c0_3 = arith.constant 0 : index
    %2 = vector.load %arg2[%c0_2, %c0_3] : memref<288x64xbf16, #tpu.memory_space<vmem>>, vector<288x64xbf16>
    %cst = arith.constant dense<0.000000e+00> : vector<4x64xf32>
    %3 = tpu.matmul %1, %2, %cst {dimension_numbers = #tpu.dot_dimension_numbers<[1], [0], [0], [1], [0, 0, 1, 1], [], []>} : vector<4x288xbf16>, vector<288x64xbf16>, vector<4x64xf32> -> vector<4x64xf32>
    %c0_4 = arith.constant 0 : index
    %c0_5 = arith.constant 0 : index
    %4 = vector.load %arg3[%c0_4, %c0_5] : memref<1x64xf32, #tpu.memory_space<vmem>>, vector<1x64xf32>
    %5 = vector.broadcast %4 : vector<1x64xf32> to vector<4x64xf32>
    %6 = arith.addf %3, %5 : vector<4x64xf32>
    %cst_6 = arith.constant dense<0.000000e+00> : vector<64xf32>
    %7 = vector.multi_reduction <add>, %6, %cst_6 [0] : vector<4x64xf32> to vector<64xf32>
    %8 = vector.shape_cast %7 : vector<64xf32> to vector<1x64xf32>
    %cst_7 = arith.constant 4.000000e+00 : f32
    %9 = vector.broadcast %cst_7 : f32 to vector<1x64xf32>
    %10 = arith.divf %8, %9 : vector<1x64xf32>
    %11 = arith.mulf %6, %6 : vector<4x64xf32>
    %cst_8 = arith.constant dense<0.000000e+00> : vector<64xf32>
    %12 = vector.multi_reduction <add>, %11, %cst_8 [0] : vector<4x64xf32> to vector<64xf32>
    %13 = vector.shape_cast %12 : vector<64xf32> to vector<1x64xf32>
    %cst_9 = arith.constant 4.000000e+00 : f32
    %14 = vector.broadcast %cst_9 : f32 to vector<1x64xf32>
    %15 = arith.divf %13, %14 : vector<1x64xf32>
    %16 = arith.mulf %10, %10 : vector<1x64xf32>
    %17 = arith.subf %15, %16 : vector<1x64xf32>
    %cst_10 = arith.constant 0.000000e+00 : f32
    %18 = vector.broadcast %cst_10 : f32 to vector<1x64xf32>
    %19 = arith.maximumf %17, %18 : vector<1x64xf32>
    %20 = vector.broadcast %10 : vector<1x64xf32> to vector<4x64xf32>
    %21 = arith.subf %6, %20 : vector<4x64xf32>
    %cst_11 = arith.constant 9.99999974E-6 : f32
    %22 = vector.broadcast %cst_11 : f32 to vector<1x64xf32>
    %23 = arith.addf %19, %22 : vector<1x64xf32>
    %24 = math.rsqrt %23 : vector<1x64xf32>
    %25 = vector.broadcast %24 : vector<1x64xf32> to vector<4x64xf32>
    %26 = arith.mulf %21, %25 : vector<4x64xf32>
    %c0_12 = arith.constant 0 : index
    %c0_13 = arith.constant 0 : index
    %27 = memref.load %arg4[%c0_12, %c0_13] : memref<1x1xf32, #tpu.memory_space<smem>>
    %cst_14 = arith.constant 0.000000e+00 : f32
    %28 = vector.broadcast %cst_14 : f32 to vector<4x64xf32>
    %29 = arith.cmpf ogt, %26, %28 : vector<4x64xf32>
    %30 = vector.broadcast %27 : f32 to vector<4x64xf32>
    %31 = arith.mulf %30, %26 : vector<4x64xf32>
    %32 = arith.select %29, %26, %31 : vector<4x64xi1>, vector<4x64xf32>
    %33 = arith.truncf %32 : vector<4x64xf32> to vector<4x64xbf16>
    %c0_15 = arith.constant 0 : index
    %c0_16 = arith.constant 0 : index
    %c0_17 = arith.constant 0 : index
    %34 = vector.load %arg9[%c0_15, %c0_16, %c0_17] : memref<1x4x64xbf16, #tpu.memory_space<vmem>>, vector<1x4x64xbf16>
    %35 = vector.shape_cast %34 : vector<1x4x64xbf16> to vector<4x64xbf16>
    %36 = vector.shape_cast %33 : vector<4x64xbf16> to vector<1x4x64xbf16>
    tpu.vector_store %arg9[%c0_15, %c0_16, %c0_17], %36 {strides = array<i32>} : memref<1x4x64xbf16, #tpu.memory_space<vmem>>, vector<1x4x64xbf16>,
    %37 = arith.truncf %32 : vector<4x64xf32> to vector<4x64xbf16>
    %c0_18 = arith.constant 0 : index
    %c0_19 = arith.constant 0 : index
    %38 = vector.load %arg6[%c0_18, %c0_19] : memref<1x128xf32, #tpu.memory_space<vmem>>, vector<1x128xf32>
    %39 = vector.extract_strided_slice %37 {offsets = [0, 0], sizes = [1, 64], strides = [1, 1]} : vector<4x64xbf16> to vector<1x64xbf16>
    %c0_20 = arith.constant 0 : index
    %c0_21 = arith.constant 0 : index
    %c0_22 = arith.constant 0 : index
    %40 = vector.load %arg5[%c0_20, %c0_21, %c0_22] : memref<4x64x128xbf16, #tpu.memory_space<vmem>>, vector<1x64x128xbf16>
    %41 = vector.shape_cast %40 : vector<1x64x128xbf16> to vector<64x128xbf16>
    %cst_23 = arith.constant dense<0.000000e+00> : vector<1x128xf32>
    %42 = tpu.matmul %39, %41, %cst_23 {dimension_numbers = #tpu.dot_dimension_numbers<[1], [0], [0], [1], [0, 0, 1, 1], [], []>} : vector<1x64xbf16>, vector<64x128xbf16>, vector<1x128xf32> -> vector<1x128xf32>
    %43 = arith.addf %38, %42 : vector<1x128xf32>
    %44 = vector.extract_strided_slice %37 {offsets = [1, 0], sizes = [1, 64], strides = [1, 1]} : vector<4x64xbf16> to vector<1x64xbf16>
    %c1 = arith.constant 1 : index
    %c0_24 = arith.constant 0 : index
    %c0_25 = arith.constant 0 : index
    %45 = vector.load %arg5[%c1, %c0_24, %c0_25] : memref<4x64x128xbf16, #tpu.memory_space<vmem>>, vector<1x64x128xbf16>
    %46 = vector.shape_cast %45 : vector<1x64x128xbf16> to vector<64x128xbf16>
    %cst_26 = arith.constant dense<0.000000e+00> : vector<1x128xf32>
    %47 = tpu.matmul %44, %46, %cst_26 {dimension_numbers = #tpu.dot_dimension_numbers<[1], [0], [0], [1], [0, 0, 1, 1], [], []>} : vector<1x64xbf16>, vector<64x128xbf16>, vector<1x128xf32> -> vector<1x128xf32>
    %48 = arith.addf %43, %47 : vector<1x128xf32>
    %49 = vector.extract_strided_slice %37 {offsets = [2, 0], sizes = [1, 64], strides = [1, 1]} : vector<4x64xbf16> to vector<1x64xbf16>
    %c2 = arith.constant 2 : index
    %c0_27 = arith.constant 0 : index
    %c0_28 = arith.constant 0 : index
    %50 = vector.load %arg5[%c2, %c0_27, %c0_28] : memref<4x64x128xbf16, #tpu.memory_space<vmem>>, vector<1x64x128xbf16>
    %51 = vector.shape_cast %50 : vector<1x64x128xbf16> to vector<64x128xbf16>
    %cst_29 = arith.constant dense<0.000000e+00> : vector<1x128xf32>
    %52 = tpu.matmul %49, %51, %cst_29 {dimension_numbers = #tpu.dot_dimension_numbers<[1], [0], [0], [1], [0, 0, 1, 1], [], []>} : vector<1x64xbf16>, vector<64x128xbf16>, vector<1x128xf32> -> vector<1x128xf32>
    %53 = arith.addf %48, %52 : vector<1x128xf32>
    %54 = vector.extract_strided_slice %37 {offsets = [3, 0], sizes = [1, 64], strides = [1, 1]} : vector<4x64xbf16> to vector<1x64xbf16>
    %c3 = arith.constant 3 : index
    %c0_30 = arith.constant 0 : index
    %c0_31 = arith.constant 0 : index
    %55 = vector.load %arg5[%c3, %c0_30, %c0_31] : memref<4x64x128xbf16, #tpu.memory_space<vmem>>, vector<1x64x128xbf16>
    %56 = vector.shape_cast %55 : vector<1x64x128xbf16> to vector<64x128xbf16>
    %cst_32 = arith.constant dense<0.000000e+00> : vector<1x128xf32>
    %57 = tpu.matmul %54, %56, %cst_32 {dimension_numbers = #tpu.dot_dimension_numbers<[1], [0], [0], [1], [0, 0, 1, 1], [], []>} : vector<1x64xbf16>, vector<64x128xbf16>, vector<1x128xf32> -> vector<1x128xf32>
    %58 = arith.addf %53, %57 : vector<1x128xf32>
    %cst_33 = arith.constant 0.000000e+00 : f32
    %59 = vector.broadcast %cst_33 : f32 to vector<1x128xf32>
    %60 = arith.maximumf %58, %59 : vector<1x128xf32>
    %61 = arith.truncf %60 : vector<1x128xf32> to vector<1x128xbf16>
    %c0_34 = arith.constant 0 : index
    %c0_35 = arith.constant 0 : index
    %62 = vector.load %arg7[%c0_34, %c0_35] : memref<128x2xbf16, #tpu.memory_space<vmem>>, vector<128x2xbf16>
    %cst_36 = arith.constant dense<0.000000e+00> : vector<1x2xf32>
    %63 = tpu.matmul %61, %62, %cst_36 {dimension_numbers = #tpu.dot_dimension_numbers<[1], [0], [0], [1], [0, 0, 1, 1], [], []>} : vector<1x128xbf16>, vector<128x2xbf16>, vector<1x2xf32> -> vector<1x2xf32>
    %c0_37 = arith.constant 0 : index
    %c0_38 = arith.constant 0 : index
    %64 = vector.load %arg8[%c0_37, %c0_38] : memref<1x2xf32, #tpu.memory_space<vmem>>, vector<1x2xf32>
    %65 = arith.addf %63, %64 : vector<1x2xf32>
    %c0_39 = arith.constant 0 : index
    %c0_40 = arith.constant 0 : index
    %c0_41 = arith.constant 0 : index
    %66 = vector.load %arg10[%c0_39, %c0_40, %c0_41] : memref<1x1x2xf32, #tpu.memory_space<vmem>>, vector<1x1x2xf32>
    %67 = vector.shape_cast %66 : vector<1x1x2xf32> to vector<1x2xf32>
    %68 = vector.shape_cast %65 : vector<1x2xf32> to vector<1x1x2xf32>
    tpu.vector_store %arg10[%c0_39, %c0_40, %c0_41], %68 {strides = array<i32>} : memref<1x1x2xf32, #tpu.memory_space<vmem>>, vector<1x1x2xf32>,
    return
  }
  func.func @transform_0(%arg0: i32) -> (i32, i32, i32) {
    %c0_i32 = arith.constant 0 : i32
    %c0_i32_0 = arith.constant 0 : i32
    %c0_i32_1 = arith.constant 0 : i32
    return %arg0, %c0_i32, %c0_i32_0 : i32, i32, i32
  }
  func.func @transform_1(%arg0: i32) -> (i32, i32) {
    %c0_i32 = arith.constant 0 : i32
    %c0_i32_0 = arith.constant 0 : i32
    %c0_i32_1 = arith.constant 0 : i32
    return %c0_i32, %c0_i32_0 : i32, i32
  }
  func.func @transform_2(%arg0: i32) -> (i32, i32) {
    %c0_i32 = arith.constant 0 : i32
    %c0_i32_0 = arith.constant 0 : i32
    %c0_i32_1 = arith.constant 0 : i32
    return %c0_i32, %c0_i32_0 : i32, i32
  }
  func.func @transform_3(%arg0: i32) -> (i32, i32) {
    %c0_i32 = arith.constant 0 : i32
    %c0_i32_0 = arith.constant 0 : i32
    %c0_i32_1 = arith.constant 0 : i32
    return %c0_i32, %c0_i32_0 : i32, i32
  }
  func.func @transform_4(%arg0: i32) -> (i32, i32, i32) {
    %c0_i32 = arith.constant 0 : i32
    %c0_i32_0 = arith.constant 0 : i32
    %c0_i32_1 = arith.constant 0 : i32
    %c0_i32_2 = arith.constant 0 : i32
    return %c0_i32, %c0_i32_0, %c0_i32_1 : i32, i32, i32
  }
  func.func @transform_5(%arg0: i32) -> (i32, i32) {
    %c0_i32 = arith.constant 0 : i32
    %c0_i32_0 = arith.constant 0 : i32
    %c0_i32_1 = arith.constant 0 : i32
    return %c0_i32, %c0_i32_0 : i32, i32
  }
  func.func @transform_6(%arg0: i32) -> (i32, i32) {
    %c0_i32 = arith.constant 0 : i32
    %c0_i32_0 = arith.constant 0 : i32
    %c0_i32_1 = arith.constant 0 : i32
    return %c0_i32, %c0_i32_0 : i32, i32
  }
  func.func @transform_7(%arg0: i32) -> (i32, i32) {
    %c0_i32 = arith.constant 0 : i32
    %c0_i32_0 = arith.constant 0 : i32
    %c0_i32_1 = arith.constant 0 : i32
    return %c0_i32, %c0_i32_0 : i32, i32
  }
  func.func @transform_8(%arg0: i32) -> (i32, i32, i32) {
    %c0_i32 = arith.constant 0 : i32
    %c0_i32_0 = arith.constant 0 : i32
    %c0_i32_1 = arith.constant 0 : i32
    return %arg0, %c0_i32, %c0_i32_0 : i32, i32, i32
  }
  func.func @transform_9(%arg0: i32) -> (i32, i32, i32) {
    %c0_i32 = arith.constant 0 : i32
    %c0_i32_0 = arith.constant 0 : i32
    %c0_i32_1 = arith.constant 0 : i32
    return %arg0, %c0_i32, %c0_i32_0 : i32, i32, i32
  }
}

module attributes {stable_mosaic.version = 11 : i64} {
  func.func @_deconv_kernel(%arg0: i32, %arg1: memref<1x4x64xbf16, #tpu.memory_space<vmem>>, %arg2: memref<1x4x64xbf16, #tpu.memory_space<vmem>>, %arg3: memref<1x4x64xbf16, #tpu.memory_space<vmem>>, %arg4: memref<1x4x64xbf16, #tpu.memory_space<vmem>>, %arg5: memref<64x128xbf16, #tpu.memory_space<vmem>>, %arg6: memref<64x128xbf16, #tpu.memory_space<vmem>>, %arg7: memref<64x128xbf16, #tpu.memory_space<vmem>>, %arg8: memref<64x128xbf16, #tpu.memory_space<vmem>>, %arg9: memref<1x128xf32, #tpu.memory_space<vmem>>, %arg10: memref<1x1xf32, #tpu.memory_space<smem>>, %arg11: memref<1x4x128xbf16, #tpu.memory_space<vmem>>) attributes {dimension_semantics = [#tpu.dimension_semantics<parallel>], iteration_bounds = array<i64: 2>, scalar_prefetch = 0 : i64, scratch_operands = 0 : i64, tpu.core_type = #tpu.core_type<tc>, window_params = [{transform_indices = @transform_0, window_bounds = array<i64: 1, 4, 64>}, {transform_indices = @transform_1, window_bounds = array<i64: 1, 4, 64>}, {transform_indices = @transform_2, window_bounds = array<i64: 1, 4, 64>}, {transform_indices = @transform_3, window_bounds = array<i64: 1, 4, 64>}, {pipeline_mode = #tpu.pipeline_mode<synchronous>, transform_indices = @transform_4, window_bounds = array<i64: 64, 128>}, {pipeline_mode = #tpu.pipeline_mode<synchronous>, transform_indices = @transform_5, window_bounds = array<i64: 64, 128>}, {pipeline_mode = #tpu.pipeline_mode<synchronous>, transform_indices = @transform_6, window_bounds = array<i64: 64, 128>}, {pipeline_mode = #tpu.pipeline_mode<synchronous>, transform_indices = @transform_7, window_bounds = array<i64: 64, 128>}, {pipeline_mode = #tpu.pipeline_mode<synchronous>, transform_indices = @transform_8, window_bounds = array<i64: 1, 128>}, {transform_indices = @transform_9, window_bounds = array<i64: 1, 1>}, {transform_indices = @transform_10, window_bounds = array<i64: 1, 4, 128>}]} {
    %c0 = arith.constant 0 : index
    %c0_0 = arith.constant 0 : index
    %c0_1 = arith.constant 0 : index
    %0 = vector.load %arg1[%c0, %c0_0, %c0_1] : memref<1x4x64xbf16, #tpu.memory_space<vmem>>, vector<1x4x64xbf16>
    %1 = vector.shape_cast %0 : vector<1x4x64xbf16> to vector<4x64xbf16>
    %c0_2 = arith.constant 0 : index
    %c0_3 = arith.constant 0 : index
    %2 = vector.load %arg5[%c0_2, %c0_3] : memref<64x128xbf16, #tpu.memory_space<vmem>>, vector<64x128xbf16>
    %cst = arith.constant dense<0.000000e+00> : vector<4x128xf32>
    %3 = tpu.matmul %1, %2, %cst {dimension_numbers = #tpu.dot_dimension_numbers<[1], [0], [0], [1], [0, 0, 1, 1], [], []>} : vector<4x64xbf16>, vector<64x128xbf16>, vector<4x128xf32> -> vector<4x128xf32>
    %c0_4 = arith.constant 0 : index
    %c0_5 = arith.constant 0 : index
    %c0_6 = arith.constant 0 : index
    %4 = vector.load %arg2[%c0_4, %c0_5, %c0_6] : memref<1x4x64xbf16, #tpu.memory_space<vmem>>, vector<1x4x64xbf16>
    %5 = vector.shape_cast %4 : vector<1x4x64xbf16> to vector<4x64xbf16>
    %c0_7 = arith.constant 0 : index
    %c0_8 = arith.constant 0 : index
    %6 = vector.load %arg6[%c0_7, %c0_8] : memref<64x128xbf16, #tpu.memory_space<vmem>>, vector<64x128xbf16>
    %cst_9 = arith.constant dense<0.000000e+00> : vector<4x128xf32>
    %7 = tpu.matmul %5, %6, %cst_9 {dimension_numbers = #tpu.dot_dimension_numbers<[1], [0], [0], [1], [0, 0, 1, 1], [], []>} : vector<4x64xbf16>, vector<64x128xbf16>, vector<4x128xf32> -> vector<4x128xf32>
    %8 = arith.addf %3, %7 : vector<4x128xf32>
    %c0_10 = arith.constant 0 : index
    %c0_11 = arith.constant 0 : index
    %c0_12 = arith.constant 0 : index
    %9 = vector.load %arg3[%c0_10, %c0_11, %c0_12] : memref<1x4x64xbf16, #tpu.memory_space<vmem>>, vector<1x4x64xbf16>
    %10 = vector.shape_cast %9 : vector<1x4x64xbf16> to vector<4x64xbf16>
    %c0_13 = arith.constant 0 : index
    %c0_14 = arith.constant 0 : index
    %11 = vector.load %arg7[%c0_13, %c0_14] : memref<64x128xbf16, #tpu.memory_space<vmem>>, vector<64x128xbf16>
    %cst_15 = arith.constant dense<0.000000e+00> : vector<4x128xf32>
    %12 = tpu.matmul %10, %11, %cst_15 {dimension_numbers = #tpu.dot_dimension_numbers<[1], [0], [0], [1], [0, 0, 1, 1], [], []>} : vector<4x64xbf16>, vector<64x128xbf16>, vector<4x128xf32> -> vector<4x128xf32>
    %13 = arith.addf %8, %12 : vector<4x128xf32>
    %c0_16 = arith.constant 0 : index
    %c0_17 = arith.constant 0 : index
    %c0_18 = arith.constant 0 : index
    %14 = vector.load %arg4[%c0_16, %c0_17, %c0_18] : memref<1x4x64xbf16, #tpu.memory_space<vmem>>, vector<1x4x64xbf16>
    %15 = vector.shape_cast %14 : vector<1x4x64xbf16> to vector<4x64xbf16>
    %c0_19 = arith.constant 0 : index
    %c0_20 = arith.constant 0 : index
    %16 = vector.load %arg8[%c0_19, %c0_20] : memref<64x128xbf16, #tpu.memory_space<vmem>>, vector<64x128xbf16>
    %cst_21 = arith.constant dense<0.000000e+00> : vector<4x128xf32>
    %17 = tpu.matmul %15, %16, %cst_21 {dimension_numbers = #tpu.dot_dimension_numbers<[1], [0], [0], [1], [0, 0, 1, 1], [], []>} : vector<4x64xbf16>, vector<64x128xbf16>, vector<4x128xf32> -> vector<4x128xf32>
    %18 = arith.addf %13, %17 : vector<4x128xf32>
    %c0_22 = arith.constant 0 : index
    %c0_23 = arith.constant 0 : index
    %19 = vector.load %arg9[%c0_22, %c0_23] : memref<1x128xf32, #tpu.memory_space<vmem>>, vector<1x128xf32>
    %20 = vector.broadcast %19 : vector<1x128xf32> to vector<4x128xf32>
    %21 = arith.addf %18, %20 : vector<4x128xf32>
    %cst_24 = arith.constant dense<0.000000e+00> : vector<128xf32>
    %22 = vector.multi_reduction <add>, %21, %cst_24 [0] : vector<4x128xf32> to vector<128xf32>
    %23 = vector.shape_cast %22 : vector<128xf32> to vector<1x128xf32>
    %24 = arith.mulf %21, %21 : vector<4x128xf32>
    %cst_25 = arith.constant dense<0.000000e+00> : vector<128xf32>
    %25 = vector.multi_reduction <add>, %24, %cst_25 [0] : vector<4x128xf32> to vector<128xf32>
    %26 = vector.shape_cast %25 : vector<128xf32> to vector<1x128xf32>
    %27 = vector.extract_strided_slice %23 {offsets = [0, 0], sizes = [1, 32], strides = [1, 1]} : vector<1x128xf32> to vector<1x32xf32>
    %28 = vector.extract_strided_slice %23 {offsets = [0, 32], sizes = [1, 32], strides = [1, 1]} : vector<1x128xf32> to vector<1x32xf32>
    %29 = arith.addf %27, %28 : vector<1x32xf32>
    %30 = vector.extract_strided_slice %23 {offsets = [0, 64], sizes = [1, 32], strides = [1, 1]} : vector<1x128xf32> to vector<1x32xf32>
    %31 = arith.addf %29, %30 : vector<1x32xf32>
    %32 = vector.extract_strided_slice %23 {offsets = [0, 96], sizes = [1, 32], strides = [1, 1]} : vector<1x128xf32> to vector<1x32xf32>
    %33 = arith.addf %31, %32 : vector<1x32xf32>
    %cst_26 = arith.constant 1.600000e+01 : f32
    %34 = vector.broadcast %cst_26 : f32 to vector<1x32xf32>
    %35 = arith.divf %33, %34 : vector<1x32xf32>
    %36 = vector.extract_strided_slice %26 {offsets = [0, 0], sizes = [1, 32], strides = [1, 1]} : vector<1x128xf32> to vector<1x32xf32>
    %37 = vector.extract_strided_slice %26 {offsets = [0, 32], sizes = [1, 32], strides = [1, 1]} : vector<1x128xf32> to vector<1x32xf32>
    %38 = arith.addf %36, %37 : vector<1x32xf32>
    %39 = vector.extract_strided_slice %26 {offsets = [0, 64], sizes = [1, 32], strides = [1, 1]} : vector<1x128xf32> to vector<1x32xf32>
    %40 = arith.addf %38, %39 : vector<1x32xf32>
    %41 = vector.extract_strided_slice %26 {offsets = [0, 96], sizes = [1, 32], strides = [1, 1]} : vector<1x128xf32> to vector<1x32xf32>
    %42 = arith.addf %40, %41 : vector<1x32xf32>
    %cst_27 = arith.constant 1.600000e+01 : f32
    %43 = vector.broadcast %cst_27 : f32 to vector<1x32xf32>
    %44 = arith.divf %42, %43 : vector<1x32xf32>
    %45 = arith.mulf %35, %35 : vector<1x32xf32>
    %46 = arith.subf %44, %45 : vector<1x32xf32>
    %cst_28 = arith.constant 0.000000e+00 : f32
    %47 = vector.broadcast %cst_28 : f32 to vector<1x32xf32>
    %48 = arith.maximumf %46, %47 : vector<1x32xf32>
    %cst_29 = arith.constant 9.99999974E-6 : f32
    %49 = vector.broadcast %cst_29 : f32 to vector<1x32xf32>
    %50 = arith.addf %48, %49 : vector<1x32xf32>
    %51 = math.rsqrt %50 : vector<1x32xf32>
    %52 = tpu.concatenate %35, %35, %35, %35 in 1 : vector<1x32xf32>, vector<1x32xf32>, vector<1x32xf32>, vector<1x32xf32> -> vector<1x128xf32>
    %53 = vector.broadcast %52 : vector<1x128xf32> to vector<4x128xf32>
    %54 = arith.subf %21, %53 : vector<4x128xf32>
    %55 = tpu.concatenate %51, %51, %51, %51 in 1 : vector<1x32xf32>, vector<1x32xf32>, vector<1x32xf32>, vector<1x32xf32> -> vector<1x128xf32>
    %56 = vector.broadcast %55 : vector<1x128xf32> to vector<4x128xf32>
    %57 = arith.mulf %54, %56 : vector<4x128xf32>
    %c0_30 = arith.constant 0 : index
    %c0_31 = arith.constant 0 : index
    %58 = memref.load %arg10[%c0_30, %c0_31] : memref<1x1xf32, #tpu.memory_space<smem>>
    %cst_32 = arith.constant 0.000000e+00 : f32
    %59 = vector.broadcast %cst_32 : f32 to vector<4x128xf32>
    %60 = arith.cmpf ogt, %57, %59 : vector<4x128xf32>
    %61 = vector.broadcast %58 : f32 to vector<4x128xf32>
    %62 = arith.mulf %61, %57 : vector<4x128xf32>
    %63 = arith.select %60, %57, %62 : vector<4x128xi1>, vector<4x128xf32>
    %64 = arith.truncf %63 : vector<4x128xf32> to vector<4x128xbf16>
    %c0_33 = arith.constant 0 : index
    %c0_34 = arith.constant 0 : index
    %c0_35 = arith.constant 0 : index
    %65 = vector.load %arg11[%c0_33, %c0_34, %c0_35] : memref<1x4x128xbf16, #tpu.memory_space<vmem>>, vector<1x4x128xbf16>
    %66 = vector.shape_cast %65 : vector<1x4x128xbf16> to vector<4x128xbf16>
    %67 = vector.shape_cast %64 : vector<4x128xbf16> to vector<1x4x128xbf16>
    tpu.vector_store %arg11[%c0_33, %c0_34, %c0_35], %67 {strides = array<i32>} : memref<1x4x128xbf16, #tpu.memory_space<vmem>>, vector<1x4x128xbf16>,
    return
  }
  func.func @transform_0(%arg0: i32) -> (i32, i32, i32) {
    %c0_i32 = arith.constant 0 : i32
    %c0_i32_0 = arith.constant 0 : i32
    %c0_i32_1 = arith.constant 0 : i32
    return %arg0, %c0_i32, %c0_i32_0 : i32, i32, i32
  }
  func.func @transform_1(%arg0: i32) -> (i32, i32, i32) {
    %c0_i32 = arith.constant 0 : i32
    %c0_i32_0 = arith.constant 0 : i32
    %c0_i32_1 = arith.constant 0 : i32
    return %arg0, %c0_i32, %c0_i32_0 : i32, i32, i32
  }
  func.func @transform_2(%arg0: i32) -> (i32, i32, i32) {
    %c0_i32 = arith.constant 0 : i32
    %c0_i32_0 = arith.constant 0 : i32
    %c0_i32_1 = arith.constant 0 : i32
    return %arg0, %c0_i32, %c0_i32_0 : i32, i32, i32
  }
  func.func @transform_3(%arg0: i32) -> (i32, i32, i32) {
    %c0_i32 = arith.constant 0 : i32
    %c0_i32_0 = arith.constant 0 : i32
    %c0_i32_1 = arith.constant 0 : i32
    return %arg0, %c0_i32, %c0_i32_0 : i32, i32, i32
  }
  func.func @transform_4(%arg0: i32) -> (i32, i32) {
    %c0_i32 = arith.constant 0 : i32
    %c0_i32_0 = arith.constant 0 : i32
    %c0_i32_1 = arith.constant 0 : i32
    return %c0_i32, %c0_i32_0 : i32, i32
  }
  func.func @transform_5(%arg0: i32) -> (i32, i32) {
    %c0_i32 = arith.constant 0 : i32
    %c0_i32_0 = arith.constant 0 : i32
    %c0_i32_1 = arith.constant 0 : i32
    return %c0_i32, %c0_i32_0 : i32, i32
  }
  func.func @transform_6(%arg0: i32) -> (i32, i32) {
    %c0_i32 = arith.constant 0 : i32
    %c0_i32_0 = arith.constant 0 : i32
    %c0_i32_1 = arith.constant 0 : i32
    return %c0_i32, %c0_i32_0 : i32, i32
  }
  func.func @transform_7(%arg0: i32) -> (i32, i32) {
    %c0_i32 = arith.constant 0 : i32
    %c0_i32_0 = arith.constant 0 : i32
    %c0_i32_1 = arith.constant 0 : i32
    return %c0_i32, %c0_i32_0 : i32, i32
  }
  func.func @transform_8(%arg0: i32) -> (i32, i32) {
    %c0_i32 = arith.constant 0 : i32
    %c0_i32_0 = arith.constant 0 : i32
    %c0_i32_1 = arith.constant 0 : i32
    return %c0_i32, %c0_i32_0 : i32, i32
  }
  func.func @transform_9(%arg0: i32) -> (i32, i32) {
    %c0_i32 = arith.constant 0 : i32
    %c0_i32_0 = arith.constant 0 : i32
    %c0_i32_1 = arith.constant 0 : i32
    return %c0_i32, %c0_i32_0 : i32, i32
  }
  func.func @transform_10(%arg0: i32) -> (i32, i32, i32) {
    %c0_i32 = arith.constant 0 : i32
    %c0_i32_0 = arith.constant 0 : i32
    %c0_i32_1 = arith.constant 0 : i32
    return %arg0, %c0_i32, %c0_i32_0 : i32, i32, i32
  }
}

module attributes {stable_mosaic.version = 11 : i64} {
  func.func @_deconv_kernel(%arg0: i32, %arg1: memref<1x16x32xbf16, #tpu.memory_space<vmem>>, %arg2: memref<1x16x32xbf16, #tpu.memory_space<vmem>>, %arg3: memref<1x16x32xbf16, #tpu.memory_space<vmem>>, %arg4: memref<1x16x32xbf16, #tpu.memory_space<vmem>>, %arg5: memref<32x64xbf16, #tpu.memory_space<vmem>>, %arg6: memref<32x64xbf16, #tpu.memory_space<vmem>>, %arg7: memref<32x64xbf16, #tpu.memory_space<vmem>>, %arg8: memref<32x64xbf16, #tpu.memory_space<vmem>>, %arg9: memref<1x64xf32, #tpu.memory_space<vmem>>, %arg10: memref<1x1xf32, #tpu.memory_space<smem>>, %arg11: memref<1x16x64xbf16, #tpu.memory_space<vmem>>) attributes {dimension_semantics = [#tpu.dimension_semantics<parallel>], iteration_bounds = array<i64: 2>, scalar_prefetch = 0 : i64, scratch_operands = 0 : i64, tpu.core_type = #tpu.core_type<tc>, window_params = [{transform_indices = @transform_0, window_bounds = array<i64: 1, 16, 32>}, {transform_indices = @transform_1, window_bounds = array<i64: 1, 16, 32>}, {transform_indices = @transform_2, window_bounds = array<i64: 1, 16, 32>}, {transform_indices = @transform_3, window_bounds = array<i64: 1, 16, 32>}, {pipeline_mode = #tpu.pipeline_mode<synchronous>, transform_indices = @transform_4, window_bounds = array<i64: 32, 64>}, {pipeline_mode = #tpu.pipeline_mode<synchronous>, transform_indices = @transform_5, window_bounds = array<i64: 32, 64>}, {pipeline_mode = #tpu.pipeline_mode<synchronous>, transform_indices = @transform_6, window_bounds = array<i64: 32, 64>}, {pipeline_mode = #tpu.pipeline_mode<synchronous>, transform_indices = @transform_7, window_bounds = array<i64: 32, 64>}, {pipeline_mode = #tpu.pipeline_mode<synchronous>, transform_indices = @transform_8, window_bounds = array<i64: 1, 64>}, {transform_indices = @transform_9, window_bounds = array<i64: 1, 1>}, {transform_indices = @transform_10, window_bounds = array<i64: 1, 16, 64>}]} {
    %c0 = arith.constant 0 : index
    %c0_0 = arith.constant 0 : index
    %c0_1 = arith.constant 0 : index
    %0 = vector.load %arg1[%c0, %c0_0, %c0_1] : memref<1x16x32xbf16, #tpu.memory_space<vmem>>, vector<1x16x32xbf16>
    %1 = vector.shape_cast %0 : vector<1x16x32xbf16> to vector<16x32xbf16>
    %c0_2 = arith.constant 0 : index
    %c0_3 = arith.constant 0 : index
    %2 = vector.load %arg5[%c0_2, %c0_3] : memref<32x64xbf16, #tpu.memory_space<vmem>>, vector<32x64xbf16>
    %cst = arith.constant dense<0.000000e+00> : vector<16x64xf32>
    %3 = tpu.matmul %1, %2, %cst {dimension_numbers = #tpu.dot_dimension_numbers<[1], [0], [0], [1], [0, 0, 1, 1], [], []>} : vector<16x32xbf16>, vector<32x64xbf16>, vector<16x64xf32> -> vector<16x64xf32>
    %c0_4 = arith.constant 0 : index
    %c0_5 = arith.constant 0 : index
    %c0_6 = arith.constant 0 : index
    %4 = vector.load %arg2[%c0_4, %c0_5, %c0_6] : memref<1x16x32xbf16, #tpu.memory_space<vmem>>, vector<1x16x32xbf16>
    %5 = vector.shape_cast %4 : vector<1x16x32xbf16> to vector<16x32xbf16>
    %c0_7 = arith.constant 0 : index
    %c0_8 = arith.constant 0 : index
    %6 = vector.load %arg6[%c0_7, %c0_8] : memref<32x64xbf16, #tpu.memory_space<vmem>>, vector<32x64xbf16>
    %cst_9 = arith.constant dense<0.000000e+00> : vector<16x64xf32>
    %7 = tpu.matmul %5, %6, %cst_9 {dimension_numbers = #tpu.dot_dimension_numbers<[1], [0], [0], [1], [0, 0, 1, 1], [], []>} : vector<16x32xbf16>, vector<32x64xbf16>, vector<16x64xf32> -> vector<16x64xf32>
    %8 = arith.addf %3, %7 : vector<16x64xf32>
    %c0_10 = arith.constant 0 : index
    %c0_11 = arith.constant 0 : index
    %c0_12 = arith.constant 0 : index
    %9 = vector.load %arg3[%c0_10, %c0_11, %c0_12] : memref<1x16x32xbf16, #tpu.memory_space<vmem>>, vector<1x16x32xbf16>
    %10 = vector.shape_cast %9 : vector<1x16x32xbf16> to vector<16x32xbf16>
    %c0_13 = arith.constant 0 : index
    %c0_14 = arith.constant 0 : index
    %11 = vector.load %arg7[%c0_13, %c0_14] : memref<32x64xbf16, #tpu.memory_space<vmem>>, vector<32x64xbf16>
    %cst_15 = arith.constant dense<0.000000e+00> : vector<16x64xf32>
    %12 = tpu.matmul %10, %11, %cst_15 {dimension_numbers = #tpu.dot_dimension_numbers<[1], [0], [0], [1], [0, 0, 1, 1], [], []>} : vector<16x32xbf16>, vector<32x64xbf16>, vector<16x64xf32> -> vector<16x64xf32>
    %13 = arith.addf %8, %12 : vector<16x64xf32>
    %c0_16 = arith.constant 0 : index
    %c0_17 = arith.constant 0 : index
    %c0_18 = arith.constant 0 : index
    %14 = vector.load %arg4[%c0_16, %c0_17, %c0_18] : memref<1x16x32xbf16, #tpu.memory_space<vmem>>, vector<1x16x32xbf16>
    %15 = vector.shape_cast %14 : vector<1x16x32xbf16> to vector<16x32xbf16>
    %c0_19 = arith.constant 0 : index
    %c0_20 = arith.constant 0 : index
    %16 = vector.load %arg8[%c0_19, %c0_20] : memref<32x64xbf16, #tpu.memory_space<vmem>>, vector<32x64xbf16>
    %cst_21 = arith.constant dense<0.000000e+00> : vector<16x64xf32>
    %17 = tpu.matmul %15, %16, %cst_21 {dimension_numbers = #tpu.dot_dimension_numbers<[1], [0], [0], [1], [0, 0, 1, 1], [], []>} : vector<16x32xbf16>, vector<32x64xbf16>, vector<16x64xf32> -> vector<16x64xf32>
    %18 = arith.addf %13, %17 : vector<16x64xf32>
    %c0_22 = arith.constant 0 : index
    %c0_23 = arith.constant 0 : index
    %19 = vector.load %arg9[%c0_22, %c0_23] : memref<1x64xf32, #tpu.memory_space<vmem>>, vector<1x64xf32>
    %20 = vector.broadcast %19 : vector<1x64xf32> to vector<16x64xf32>
    %21 = arith.addf %18, %20 : vector<16x64xf32>
    %cst_24 = arith.constant dense<0.000000e+00> : vector<64xf32>
    %22 = vector.multi_reduction <add>, %21, %cst_24 [0] : vector<16x64xf32> to vector<64xf32>
    %23 = vector.shape_cast %22 : vector<64xf32> to vector<1x64xf32>
    %24 = arith.mulf %21, %21 : vector<16x64xf32>
    %cst_25 = arith.constant dense<0.000000e+00> : vector<64xf32>
    %25 = vector.multi_reduction <add>, %24, %cst_25 [0] : vector<16x64xf32> to vector<64xf32>
    %26 = vector.shape_cast %25 : vector<64xf32> to vector<1x64xf32>
    %27 = vector.extract_strided_slice %23 {offsets = [0, 0], sizes = [1, 16], strides = [1, 1]} : vector<1x64xf32> to vector<1x16xf32>
    %28 = vector.extract_strided_slice %23 {offsets = [0, 16], sizes = [1, 16], strides = [1, 1]} : vector<1x64xf32> to vector<1x16xf32>
    %29 = arith.addf %27, %28 : vector<1x16xf32>
    %30 = vector.extract_strided_slice %23 {offsets = [0, 32], sizes = [1, 16], strides = [1, 1]} : vector<1x64xf32> to vector<1x16xf32>
    %31 = arith.addf %29, %30 : vector<1x16xf32>
    %32 = vector.extract_strided_slice %23 {offsets = [0, 48], sizes = [1, 16], strides = [1, 1]} : vector<1x64xf32> to vector<1x16xf32>
    %33 = arith.addf %31, %32 : vector<1x16xf32>
    %cst_26 = arith.constant 6.400000e+01 : f32
    %34 = vector.broadcast %cst_26 : f32 to vector<1x16xf32>
    %35 = arith.divf %33, %34 : vector<1x16xf32>
    %36 = vector.extract_strided_slice %26 {offsets = [0, 0], sizes = [1, 16], strides = [1, 1]} : vector<1x64xf32> to vector<1x16xf32>
    %37 = vector.extract_strided_slice %26 {offsets = [0, 16], sizes = [1, 16], strides = [1, 1]} : vector<1x64xf32> to vector<1x16xf32>
    %38 = arith.addf %36, %37 : vector<1x16xf32>
    %39 = vector.extract_strided_slice %26 {offsets = [0, 32], sizes = [1, 16], strides = [1, 1]} : vector<1x64xf32> to vector<1x16xf32>
    %40 = arith.addf %38, %39 : vector<1x16xf32>
    %41 = vector.extract_strided_slice %26 {offsets = [0, 48], sizes = [1, 16], strides = [1, 1]} : vector<1x64xf32> to vector<1x16xf32>
    %42 = arith.addf %40, %41 : vector<1x16xf32>
    %cst_27 = arith.constant 6.400000e+01 : f32
    %43 = vector.broadcast %cst_27 : f32 to vector<1x16xf32>
    %44 = arith.divf %42, %43 : vector<1x16xf32>
    %45 = arith.mulf %35, %35 : vector<1x16xf32>
    %46 = arith.subf %44, %45 : vector<1x16xf32>
    %cst_28 = arith.constant 0.000000e+00 : f32
    %47 = vector.broadcast %cst_28 : f32 to vector<1x16xf32>
    %48 = arith.maximumf %46, %47 : vector<1x16xf32>
    %cst_29 = arith.constant 9.99999974E-6 : f32
    %49 = vector.broadcast %cst_29 : f32 to vector<1x16xf32>
    %50 = arith.addf %48, %49 : vector<1x16xf32>
    %51 = math.rsqrt %50 : vector<1x16xf32>
    %52 = tpu.concatenate %35, %35, %35, %35 in 1 : vector<1x16xf32>, vector<1x16xf32>, vector<1x16xf32>, vector<1x16xf32> -> vector<1x64xf32>
    %53 = vector.broadcast %52 : vector<1x64xf32> to vector<16x64xf32>
    %54 = arith.subf %21, %53 : vector<16x64xf32>
    %55 = tpu.concatenate %51, %51, %51, %51 in 1 : vector<1x16xf32>, vector<1x16xf32>, vector<1x16xf32>, vector<1x16xf32> -> vector<1x64xf32>
    %56 = vector.broadcast %55 : vector<1x64xf32> to vector<16x64xf32>
    %57 = arith.mulf %54, %56 : vector<16x64xf32>
    %c0_30 = arith.constant 0 : index
    %c0_31 = arith.constant 0 : index
    %58 = memref.load %arg10[%c0_30, %c0_31] : memref<1x1xf32, #tpu.memory_space<smem>>
    %cst_32 = arith.constant 0.000000e+00 : f32
    %59 = vector.broadcast %cst_32 : f32 to vector<16x64xf32>
    %60 = arith.cmpf ogt, %57, %59 : vector<16x64xf32>
    %61 = vector.broadcast %58 : f32 to vector<16x64xf32>
    %62 = arith.mulf %61, %57 : vector<16x64xf32>
    %63 = arith.select %60, %57, %62 : vector<16x64xi1>, vector<16x64xf32>
    %64 = arith.truncf %63 : vector<16x64xf32> to vector<16x64xbf16>
    %c0_33 = arith.constant 0 : index
    %c0_34 = arith.constant 0 : index
    %c0_35 = arith.constant 0 : index
    %65 = vector.load %arg11[%c0_33, %c0_34, %c0_35] : memref<1x16x64xbf16, #tpu.memory_space<vmem>>, vector<1x16x64xbf16>
    %66 = vector.shape_cast %65 : vector<1x16x64xbf16> to vector<16x64xbf16>
    %67 = vector.shape_cast %64 : vector<16x64xbf16> to vector<1x16x64xbf16>
    tpu.vector_store %arg11[%c0_33, %c0_34, %c0_35], %67 {strides = array<i32>} : memref<1x16x64xbf16, #tpu.memory_space<vmem>>, vector<1x16x64xbf16>,
    return
  }
  func.func @transform_0(%arg0: i32) -> (i32, i32, i32) {
    %c0_i32 = arith.constant 0 : i32
    %c0_i32_0 = arith.constant 0 : i32
    %c0_i32_1 = arith.constant 0 : i32
    return %arg0, %c0_i32, %c0_i32_0 : i32, i32, i32
  }
  func.func @transform_1(%arg0: i32) -> (i32, i32, i32) {
    %c0_i32 = arith.constant 0 : i32
    %c0_i32_0 = arith.constant 0 : i32
    %c0_i32_1 = arith.constant 0 : i32
    return %arg0, %c0_i32, %c0_i32_0 : i32, i32, i32
  }
  func.func @transform_2(%arg0: i32) -> (i32, i32, i32) {
    %c0_i32 = arith.constant 0 : i32
    %c0_i32_0 = arith.constant 0 : i32
    %c0_i32_1 = arith.constant 0 : i32
    return %arg0, %c0_i32, %c0_i32_0 : i32, i32, i32
  }
  func.func @transform_3(%arg0: i32) -> (i32, i32, i32) {
    %c0_i32 = arith.constant 0 : i32
    %c0_i32_0 = arith.constant 0 : i32
    %c0_i32_1 = arith.constant 0 : i32
    return %arg0, %c0_i32, %c0_i32_0 : i32, i32, i32
  }
  func.func @transform_4(%arg0: i32) -> (i32, i32) {
    %c0_i32 = arith.constant 0 : i32
    %c0_i32_0 = arith.constant 0 : i32
    %c0_i32_1 = arith.constant 0 : i32
    return %c0_i32, %c0_i32_0 : i32, i32
  }
  func.func @transform_5(%arg0: i32) -> (i32, i32) {
    %c0_i32 = arith.constant 0 : i32
    %c0_i32_0 = arith.constant 0 : i32
    %c0_i32_1 = arith.constant 0 : i32
    return %c0_i32, %c0_i32_0 : i32, i32
  }
  func.func @transform_6(%arg0: i32) -> (i32, i32) {
    %c0_i32 = arith.constant 0 : i32
    %c0_i32_0 = arith.constant 0 : i32
    %c0_i32_1 = arith.constant 0 : i32
    return %c0_i32, %c0_i32_0 : i32, i32
  }
  func.func @transform_7(%arg0: i32) -> (i32, i32) {
    %c0_i32 = arith.constant 0 : i32
    %c0_i32_0 = arith.constant 0 : i32
    %c0_i32_1 = arith.constant 0 : i32
    return %c0_i32, %c0_i32_0 : i32, i32
  }
  func.func @transform_8(%arg0: i32) -> (i32, i32) {
    %c0_i32 = arith.constant 0 : i32
    %c0_i32_0 = arith.constant 0 : i32
    %c0_i32_1 = arith.constant 0 : i32
    return %c0_i32, %c0_i32_0 : i32, i32
  }
  func.func @transform_9(%arg0: i32) -> (i32, i32) {
    %c0_i32 = arith.constant 0 : i32
    %c0_i32_0 = arith.constant 0 : i32
    %c0_i32_1 = arith.constant 0 : i32
    return %c0_i32, %c0_i32_0 : i32, i32
  }
  func.func @transform_10(%arg0: i32) -> (i32, i32, i32) {
    %c0_i32 = arith.constant 0 : i32
    %c0_i32_0 = arith.constant 0 : i32
    %c0_i32_1 = arith.constant 0 : i32
    return %arg0, %c0_i32, %c0_i32_0 : i32, i32, i32
  }
}

module attributes {stable_mosaic.version = 11 : i64} {
  func.func @_deconv_kernel(%arg0: i32, %arg1: memref<1x64x16xbf16, #tpu.memory_space<vmem>>, %arg2: memref<1x64x16xbf16, #tpu.memory_space<vmem>>, %arg3: memref<1x64x16xbf16, #tpu.memory_space<vmem>>, %arg4: memref<1x64x16xbf16, #tpu.memory_space<vmem>>, %arg5: memref<16x4xbf16, #tpu.memory_space<vmem>>, %arg6: memref<16x4xbf16, #tpu.memory_space<vmem>>, %arg7: memref<16x4xbf16, #tpu.memory_space<vmem>>, %arg8: memref<16x4xbf16, #tpu.memory_space<vmem>>, %arg9: memref<1x4xf32, #tpu.memory_space<vmem>>, %arg10: memref<1x1xf32, #tpu.memory_space<smem>>, %arg11: memref<1x64x4xf32, #tpu.memory_space<vmem>>) attributes {dimension_semantics = [#tpu.dimension_semantics<parallel>], iteration_bounds = array<i64: 2>, scalar_prefetch = 0 : i64, scratch_operands = 0 : i64, tpu.core_type = #tpu.core_type<tc>, window_params = [{transform_indices = @transform_0, window_bounds = array<i64: 1, 64, 16>}, {transform_indices = @transform_1, window_bounds = array<i64: 1, 64, 16>}, {transform_indices = @transform_2, window_bounds = array<i64: 1, 64, 16>}, {transform_indices = @transform_3, window_bounds = array<i64: 1, 64, 16>}, {pipeline_mode = #tpu.pipeline_mode<synchronous>, transform_indices = @transform_4, window_bounds = array<i64: 16, 4>}, {pipeline_mode = #tpu.pipeline_mode<synchronous>, transform_indices = @transform_5, window_bounds = array<i64: 16, 4>}, {pipeline_mode = #tpu.pipeline_mode<synchronous>, transform_indices = @transform_6, window_bounds = array<i64: 16, 4>}, {pipeline_mode = #tpu.pipeline_mode<synchronous>, transform_indices = @transform_7, window_bounds = array<i64: 16, 4>}, {pipeline_mode = #tpu.pipeline_mode<synchronous>, transform_indices = @transform_8, window_bounds = array<i64: 1, 4>}, {transform_indices = @transform_9, window_bounds = array<i64: 1, 1>}, {transform_indices = @transform_10, window_bounds = array<i64: 1, 64, 4>}]} {
    %c0 = arith.constant 0 : index
    %c0_0 = arith.constant 0 : index
    %c0_1 = arith.constant 0 : index
    %0 = vector.load %arg1[%c0, %c0_0, %c0_1] : memref<1x64x16xbf16, #tpu.memory_space<vmem>>, vector<1x64x16xbf16>
    %1 = vector.shape_cast %0 : vector<1x64x16xbf16> to vector<64x16xbf16>
    %c0_2 = arith.constant 0 : index
    %c0_3 = arith.constant 0 : index
    %2 = vector.load %arg5[%c0_2, %c0_3] : memref<16x4xbf16, #tpu.memory_space<vmem>>, vector<16x4xbf16>
    %cst = arith.constant dense<0.000000e+00> : vector<64x4xf32>
    %3 = tpu.matmul %1, %2, %cst {dimension_numbers = #tpu.dot_dimension_numbers<[1], [0], [0], [1], [0, 0, 1, 1], [], []>} : vector<64x16xbf16>, vector<16x4xbf16>, vector<64x4xf32> -> vector<64x4xf32>
    %c0_4 = arith.constant 0 : index
    %c0_5 = arith.constant 0 : index
    %c0_6 = arith.constant 0 : index
    %4 = vector.load %arg2[%c0_4, %c0_5, %c0_6] : memref<1x64x16xbf16, #tpu.memory_space<vmem>>, vector<1x64x16xbf16>
    %5 = vector.shape_cast %4 : vector<1x64x16xbf16> to vector<64x16xbf16>
    %c0_7 = arith.constant 0 : index
    %c0_8 = arith.constant 0 : index
    %6 = vector.load %arg6[%c0_7, %c0_8] : memref<16x4xbf16, #tpu.memory_space<vmem>>, vector<16x4xbf16>
    %cst_9 = arith.constant dense<0.000000e+00> : vector<64x4xf32>
    %7 = tpu.matmul %5, %6, %cst_9 {dimension_numbers = #tpu.dot_dimension_numbers<[1], [0], [0], [1], [0, 0, 1, 1], [], []>} : vector<64x16xbf16>, vector<16x4xbf16>, vector<64x4xf32> -> vector<64x4xf32>
    %8 = arith.addf %3, %7 : vector<64x4xf32>
    %c0_10 = arith.constant 0 : index
    %c0_11 = arith.constant 0 : index
    %c0_12 = arith.constant 0 : index
    %9 = vector.load %arg3[%c0_10, %c0_11, %c0_12] : memref<1x64x16xbf16, #tpu.memory_space<vmem>>, vector<1x64x16xbf16>
    %10 = vector.shape_cast %9 : vector<1x64x16xbf16> to vector<64x16xbf16>
    %c0_13 = arith.constant 0 : index
    %c0_14 = arith.constant 0 : index
    %11 = vector.load %arg7[%c0_13, %c0_14] : memref<16x4xbf16, #tpu.memory_space<vmem>>, vector<16x4xbf16>
    %cst_15 = arith.constant dense<0.000000e+00> : vector<64x4xf32>
    %12 = tpu.matmul %10, %11, %cst_15 {dimension_numbers = #tpu.dot_dimension_numbers<[1], [0], [0], [1], [0, 0, 1, 1], [], []>} : vector<64x16xbf16>, vector<16x4xbf16>, vector<64x4xf32> -> vector<64x4xf32>
    %13 = arith.addf %8, %12 : vector<64x4xf32>
    %c0_16 = arith.constant 0 : index
    %c0_17 = arith.constant 0 : index
    %c0_18 = arith.constant 0 : index
    %14 = vector.load %arg4[%c0_16, %c0_17, %c0_18] : memref<1x64x16xbf16, #tpu.memory_space<vmem>>, vector<1x64x16xbf16>
    %15 = vector.shape_cast %14 : vector<1x64x16xbf16> to vector<64x16xbf16>
    %c0_19 = arith.constant 0 : index
    %c0_20 = arith.constant 0 : index
    %16 = vector.load %arg8[%c0_19, %c0_20] : memref<16x4xbf16, #tpu.memory_space<vmem>>, vector<16x4xbf16>
    %cst_21 = arith.constant dense<0.000000e+00> : vector<64x4xf32>
    %17 = tpu.matmul %15, %16, %cst_21 {dimension_numbers = #tpu.dot_dimension_numbers<[1], [0], [0], [1], [0, 0, 1, 1], [], []>} : vector<64x16xbf16>, vector<16x4xbf16>, vector<64x4xf32> -> vector<64x4xf32>
    %18 = arith.addf %13, %17 : vector<64x4xf32>
    %c0_22 = arith.constant 0 : index
    %c0_23 = arith.constant 0 : index
    %19 = vector.load %arg9[%c0_22, %c0_23] : memref<1x4xf32, #tpu.memory_space<vmem>>, vector<1x4xf32>
    %20 = vector.broadcast %19 : vector<1x4xf32> to vector<64x4xf32>
    %21 = arith.addf %18, %20 : vector<64x4xf32>
    %c0_24 = arith.constant 0 : index
    %c0_25 = arith.constant 0 : index
    %c0_26 = arith.constant 0 : index
    %22 = vector.load %arg11[%c0_24, %c0_25, %c0_26] : memref<1x64x4xf32, #tpu.memory_space<vmem>>, vector<1x64x4xf32>
    %23 = vector.shape_cast %22 : vector<1x64x4xf32> to vector<64x4xf32>
    %24 = vector.shape_cast %21 : vector<64x4xf32> to vector<1x64x4xf32>
    tpu.vector_store %arg11[%c0_24, %c0_25, %c0_26], %24 {strides = array<i32>} : memref<1x64x4xf32, #tpu.memory_space<vmem>>, vector<1x64x4xf32>,
    return
  }
  func.func @transform_0(%arg0: i32) -> (i32, i32, i32) {
    %c0_i32 = arith.constant 0 : i32
    %c0_i32_0 = arith.constant 0 : i32
    %c0_i32_1 = arith.constant 0 : i32
    return %arg0, %c0_i32, %c0_i32_0 : i32, i32, i32
  }
  func.func @transform_1(%arg0: i32) -> (i32, i32, i32) {
    %c0_i32 = arith.constant 0 : i32
    %c0_i32_0 = arith.constant 0 : i32
    %c0_i32_1 = arith.constant 0 : i32
    return %arg0, %c0_i32, %c0_i32_0 : i32, i32, i32
  }
  func.func @transform_2(%arg0: i32) -> (i32, i32, i32) {
    %c0_i32 = arith.constant 0 : i32
    %c0_i32_0 = arith.constant 0 : i32
    %c0_i32_1 = arith.constant 0 : i32
    return %arg0, %c0_i32, %c0_i32_0 : i32, i32, i32
  }
  func.func @transform_3(%arg0: i32) -> (i32, i32, i32) {
    %c0_i32 = arith.constant 0 : i32
    %c0_i32_0 = arith.constant 0 : i32
    %c0_i32_1 = arith.constant 0 : i32
    return %arg0, %c0_i32, %c0_i32_0 : i32, i32, i32
  }
  func.func @transform_4(%arg0: i32) -> (i32, i32) {
    %c0_i32 = arith.constant 0 : i32
    %c0_i32_0 = arith.constant 0 : i32
    %c0_i32_1 = arith.constant 0 : i32
    return %c0_i32, %c0_i32_0 : i32, i32
  }
  func.func @transform_5(%arg0: i32) -> (i32, i32) {
    %c0_i32 = arith.constant 0 : i32
    %c0_i32_0 = arith.constant 0 : i32
    %c0_i32_1 = arith.constant 0 : i32
    return %c0_i32, %c0_i32_0 : i32, i32
  }
  func.func @transform_6(%arg0: i32) -> (i32, i32) {
    %c0_i32 = arith.constant 0 : i32
    %c0_i32_0 = arith.constant 0 : i32
    %c0_i32_1 = arith.constant 0 : i32
    return %c0_i32, %c0_i32_0 : i32, i32
  }
  func.func @transform_7(%arg0: i32) -> (i32, i32) {
    %c0_i32 = arith.constant 0 : i32
    %c0_i32_0 = arith.constant 0 : i32
    %c0_i32_1 = arith.constant 0 : i32
    return %c0_i32, %c0_i32_0 : i32, i32
  }
  func.func @transform_8(%arg0: i32) -> (i32, i32) {
    %c0_i32 = arith.constant 0 : i32
    %c0_i32_0 = arith.constant 0 : i32
    %c0_i32_1 = arith.constant 0 : i32
    return %c0_i32, %c0_i32_0 : i32, i32
  }
  func.func @transform_9(%arg0: i32) -> (i32, i32) {
    %c0_i32 = arith.constant 0 : i32
    %c0_i32_0 = arith.constant 0 : i32
    %c0_i32_1 = arith.constant 0 : i32
    return %c0_i32, %c0_i32_0 : i32, i32
  }
  func.func @transform_10(%arg0: i32) -> (i32, i32, i32) {
    %c0_i32 = arith.constant 0 : i32
    %c0_i32_0 = arith.constant 0 : i32
    %c0_i32_1 = arith.constant 0 : i32
    return %arg0, %c0_i32, %c0_i32_0 : i32, i32, i32
  }
}

</mosaic_0001>

<llo_original>
// kernel: supervised_autoencoder_forward.6
$region0: #{supervised_autoencoder_forward.6}
  #allocation0 [shape = 'u32[]', space=smem, size = 0x4, offset = 0x4, fixed_abs, tag = 'smem constant byte address 0x4 - core index']
  #allocation1 [shape = 'u32[72,128]{1,0:T(1,128)}', space=vmem, size = 0x9000, scoped, tag = 'internal scratch']
  #allocation2 [shape = 'f32[1,1]{1,0:T(1,128)S(6)}', space=smem, size = 0x200, scoped, tag = 'scoped memory for supervised_autoencoder_forward.6']
  %s0 = inlined_call_operand.vmem [shape: bf16[2,64,9], index: 0, kind: input, shape index: {}]
  %s1 = inlined_call_operand.vmem [shape: bf16[9,16], index: 1, kind: input, shape index: {}]
  %s2 = inlined_call_operand.vmem [shape: f32[1,16], index: 2, kind: input, shape index: {}]
  %s3 = inlined_call_operand.<no memory space> [shape: f32[1,1], index: 3, kind: input, shape index: {}]
  %s4 = inlined_call_operand.vmem [shape: bf16[2,64,16], index: 4, kind: output, shape index: {}]
  %s5 = sld [smem:[#allocation0]]
  $region49: #{supervised_autoencoder_forward.6} parent=0
    _
  %s7 = ssub.s32 1, %s5
  %s8 = scalar_select 0, %s7, %s5
  %9 = sst [smem:[#allocation2]] %s3
  loop: start=0, step=1, limit=4
  $region2: #{supervised_autoencoder_forward.6} parent=0 // loop_pre_header
    _
  $region3: #{supervised_autoencoder_forward.6} parent=0 // loop_header
    %s11 = sphi 0, %s15
    %p12 = scmp.ge.s32.totalorder %s11, 4
    %s21 = sphi 0, %s23
    %s24 = sphi 0, %s21
    %s25 = sphi 0, %s24
    %s41 = sphi 0, %s25
    %s45 = sphi 0, %s45
    %s47 = sphi 0, %s45
    %s48 = sphi 0, %s47
    %s62 = sphi 0, %s48
    %s66 = sphi 0, %s66
    %s68 = sphi 0, %s66
    %s69 = sphi 0, %s68
    %s83 = sphi 0, %s69
    %s87 = sphi 0, %s87
    %s89 = sphi 0, %s87
    %s90 = sphi 0, %s89
    %s104 = sphi 0, %s90
    %s110 = sphi 0, %s112
    %s113 = sphi 0, %s110
    %s114 = sphi 0, %s113
    %s130 = sphi 0, %s114
  $region4: #{supervised_autoencoder_forward.6} parent=0 // loop_header_branch
    %14 = sbr.rel (%p12) target = $region8
  $region5: #{supervised_autoencoder_forward.6} parent=0 // loop_body
    %s16 = ssub.s32 %s11, 1
    %s17 = ssub.s32 %s11, 2
    %s18 = sadd.s32 %s11, 1
    %s19 = ssub.s32 %s11, %s18
    %p20 = scmp.eq.s32.totalorder %s19, 0
    %s22 = sadd.s32 %s21, 1
    %s23 = scalar_select %p20, %s21, %s22
    %p26 = pneg %p20
    %p27 = scmp.eq.s32.totalorder %s11, 1
    %p28 = por %p26, %p27
    %p29 = scmp.ne.s32.totalorder %s21, %s24
    %p30 = scmp.eq.s32.totalorder %s11, 0
    %p31 = por %p29, %p30
    %p32 = scmp.ne.s32.totalorder %s21, %s24
    %p33 = scmp.eq.s32.totalorder %s16, 1
    %p34 = por %p32, %p33
    %p35 = scmp.ne.s32.totalorder %s24, %s25
    %p36 = scmp.eq.s32.totalorder %s16, 0
    %p37 = por %p35, %p36
    %p38 = scmp.ne.s32.totalorder %s24, %s25
    %p39 = scmp.eq.s32.totalorder %s17, 1
    %p40 = por %p38, %p39
    %p42 = scmp.ne.s32.totalorder %s25, %s41
    %p43 = scmp.eq.s32.totalorder %s17, 0
    %p44 = por %p42, %p43
    %s46 = sadd.s32 %s45, 1
    %p49 = scmp.eq.s32.totalorder %s11, 1
    %p50 = scmp.ne.s32.totalorder %s45, %s47
    %p51 = scmp.eq.s32.totalorder %s11, 0
    %p52 = por %p50, %p51
    %p53 = scmp.ne.s32.totalorder %s45, %s47
    %p54 = scmp.eq.s32.totalorder %s16, 1
    %p55 = por %p53, %p54
    %p56 = scmp.ne.s32.totalorder %s47, %s48
    %p57 = scmp.eq.s32.totalorder %s16, 0
    %p58 = por %p56, %p57
    %p59 = scmp.ne.s32.totalorder %s47, %s48
    %p60 = scmp.eq.s32.totalorder %s17, 1
    %p61 = por %p59, %p60
    %p63 = scmp.ne.s32.totalorder %s48, %s62
    %p64 = scmp.eq.s32.totalorder %s17, 0
    %p65 = por %p63, %p64
    %s67 = sadd.s32 %s66, 1
    %p70 = scmp.eq.s32.totalorder %s11, 1
    %p71 = scmp.ne.s32.totalorder %s66, %s68
    %p72 = scmp.eq.s32.totalorder %s11, 0
    %p73 = por %p71, %p72
    %p74 = scmp.ne.s32.totalorder %s66, %s68
    %p75 = scmp.eq.s32.totalorder %s16, 1
    %p76 = por %p74, %p75
    %p77 = scmp.ne.s32.totalorder %s68, %s69
    %p78 = scmp.eq.s32.totalorder %s16, 0
    %p79 = por %p77, %p78
    %p80 = scmp.ne.s32.totalorder %s68, %s69
    %p81 = scmp.eq.s32.totalorder %s17, 1
    %p82 = por %p80, %p81
    %p84 = scmp.ne.s32.totalorder %s69, %s83
    %p85 = scmp.eq.s32.totalorder %s17, 0
    %p86 = por %p84, %p85
    %s88 = sadd.s32 %s87, 1
    %p91 = scmp.eq.s32.totalorder %s11, 1
    %p92 = scmp.ne.s32.totalorder %s87, %s89
    %p93 = scmp.eq.s32.totalorder %s11, 0
    %p94 = por %p92, %p93
    %p95 = scmp.ne.s32.totalorder %s87, %s89
    %p96 = scmp.eq.s32.totalorder %s16, 1
    %p97 = por %p95, %p96
    %p98 = scmp.ne.s32.totalorder %s89, %s90
    %p99 = scmp.eq.s32.totalorder %s16, 0
    %p100 = por %p98, %p99
    %p101 = scmp.ne.s32.totalorder %s89, %s90
    %p102 = scmp.eq.s32.totalorder %s17, 1
    %p103 = por %p101, %p102
    %p105 = scmp.ne.s32.totalorder %s90, %s104
    %p106 = scmp.eq.s32.totalorder %s17, 0
    %p107 = por %p105, %p106
    %s108 = ssub.s32 %s11, %s18
    %p109 = scmp.eq.s32.totalorder %s108, 0
    %s111 = sadd.s32 %s110, 1
    %s112 = scalar_select %p109, %s110, %s111
    %p115 = pneg %p109
    %p116 = scmp.eq.s32.totalorder %s11, 1
    %p117 = por %p115, %p116
    %p118 = scmp.ne.s32.totalorder %s110, %s113
    %p119 = scmp.eq.s32.totalorder %s11, 0
    %p120 = por %p118, %p119
    %p121 = scmp.ne.s32.totalorder %s110, %s113
    %p122 = scmp.eq.s32.totalorder %s16, 1
    %p123 = por %p121, %p122
    %p124 = scmp.ne.s32.totalorder %s113, %s114
    %p125 = scmp.eq.s32.totalorder %s16, 0
    %p126 = por %p124, %p125
    %p127 = scmp.ne.s32.totalorder %s113, %s114
    %p128 = scmp.eq.s32.totalorder %s17, 1
    %p129 = por %p127, %p128
    %p131 = scmp.ne.s32.totalorder %s114, %s130
    %p132 = scmp.eq.s32.totalorder %s17, 0
    %p133 = por %p131, %p132
    %p134 = scmp.le.s32.totalorder 1, %s11
    %p135 = scmp.lt.s32.totalorder %s11, 3
    %p136 = pnand %p134, %p135
    %p137 = pneg %p136
    // Predicated region
    $region9: #{supervised_autoencoder_forward.6} parent=5 // pred_check
      _
    $region10: #{supervised_autoencoder_forward.6} parent=5 // pred_check_branch
      %139 = sbr.rel (%p136) target = $region12
    $region11: #{supervised_autoencoder_forward.6} parent=5 // pred_region
      %s140 = ssub.s32 %s11, 1
      // Predicated region
      $region13: #{supervised_autoencoder_forward.6} parent=11 // pred_check
        %p141 = pneg %p58
      $region14: #{supervised_autoencoder_forward.6} parent=11 // pred_check_branch
        %143 = sbr.rel (%p141) target = $region16
      $region15: #{supervised_autoencoder_forward.6} parent=11 // pred_region
        _
      $region16: #{supervised_autoencoder_forward.6} parent=11 // pred_fallthru
        _
      // Predicated region
      $region17: #{supervised_autoencoder_forward.6} parent=11 // pred_check
        %p144 = pneg %p79
      $region18: #{supervised_autoencoder_forward.6} parent=11 // pred_check_branch
        %146 = sbr.rel (%p144) target = $region20
      $region19: #{supervised_autoencoder_forward.6} parent=11 // pred_region
        _
      $region20: #{supervised_autoencoder_forward.6} parent=11 // pred_fallthru
        _
      // Predicated region
      $region21: #{supervised_autoencoder_forward.6} parent=11 // pred_check
        %p147 = pneg %p100
      $region22: #{supervised_autoencoder_forward.6} parent=11 // pred_check_branch
        %149 = sbr.rel (%p147) target = $region24
      $region23: #{supervised_autoencoder_forward.6} parent=11 // pred_region
        _
      $region24: #{supervised_autoencoder_forward.6} parent=11 // pred_fallthru
        _
    $region12: #{supervised_autoencoder_forward.6} parent=5 // pred_fallthru
      _
    %p150 = scmp.lt.s32.totalorder %s11, 2
    // Predicated region
    $region25: #{supervised_autoencoder_forward.6} parent=5 // pred_check
      %p151 = pneg %p150
    $region26: #{supervised_autoencoder_forward.6} parent=5 // pred_check_branch
      %153 = sbr.rel (%p151) target = $region28
    $region27: #{supervised_autoencoder_forward.6} parent=5 // pred_region
      // Predicated region
      $region29: #{supervised_autoencoder_forward.6} parent=27 // pred_check
        %p154 = pneg %p31
      $region30: #{supervised_autoencoder_forward.6} parent=27 // pred_check_branch
        %156 = sbr.rel (%p154) target = $region32
      $region31: #{supervised_autoencoder_forward.6} parent=27 // pred_region
        %p157 = scmp.lt.s32.totalorder %s11, 1
        %s158 = scalar_select %p157, %s11, 1
        %s159 = smul.addr %s158, 8
        %s160 = smul.addr %s159, 4
        %s161 = scalar_lea.vmem %s0, %s160
      $region32: #{supervised_autoencoder_forward.6} parent=27 // pred_fallthru
        _
    $region28: #{supervised_autoencoder_forward.6} parent=5 // pred_fallthru
      _
    %p162 = scmp.le.s32.totalorder 1, %s11
    %p163 = scmp.lt.s32.totalorder %s11, 3
    %p164 = pnand %p162, %p163
    %p165 = pneg %p164
    // Predicated region
    $region33: #{supervised_autoencoder_forward.6} parent=5 // pred_check
      _
    $region34: #{supervised_autoencoder_forward.6} parent=5 // pred_check_branch
      %167 = sbr.rel (%p164) target = $region36
    $region35: #{supervised_autoencoder_forward.6} parent=5 // pred_region
      %s168 = ssub.s32 %s11, 1
      %p169 = scmp.lt.s32.totalorder %s16, 1
      %s170 = scalar_select %p169, %s16, 1
      %s171 = smul.addr %s170, 8
      %s172 = smul.addr %s171, 4
      %s173 = scalar_lea.vmem %s0, %s172
      %p174 = pneg %p37
      %p175 = pneg %p34
      %p176 = pneg %p58
      %p177 = pneg %p55
      %p178 = pneg %p79
      %p179 = pneg %p76
      %p180 = pneg %p100
      %p181 = pneg %p97
      %p182 = pneg %p126
      %p183 = pneg %p123
      %p184 = scmp.lt.s32.totalorder %s16, 1
      %s185 = scalar_select %p184, %s16, 1
      %s186 = smul.addr %s185, 8
      %s187 = smul.addr %s186, 4
      %s188 = scalar_lea.vmem %s4, %s187
      %p189 = scmp.lt.s32.totalorder %s16, 1
      %s190 = scalar_select %p189, %s16, 1
      %s191 = smul.addr %s190, 8
      %s192 = smul.addr %s191, 4
      %s193 = scalar_lea.vmem %s0, %s192
      %p194 = scmp.lt.s32.totalorder %s16, 1
      %s195 = scalar_select %p194, %s16, 1
      %s196 = smul.addr %s195, 8
      %s197 = smul.addr %s196, 4
      %s198 = scalar_lea.vmem %s4, %s197
      %v200 = vld [vmem:[%s193] sm:$0xf]
      %v201 = vld [vmem:[%s193 + $0x4] sm:$0xf]
      %v202 = vld [vmem:[%s193 + $0x8] sm:$0xf]
      %v203 = vld [vmem:[%s193 + $0xc] sm:$0xf]
      %v204 = vld [vmem:[%s193 + $0x10] sm:$0xf]
      %v205 = vld [vmem:[%s193 + $0x14] sm:$0xf]
      %v206 = vld [vmem:[%s193 + $0x18] sm:$0xf]
      %v207 = vld [vmem:[%s193 + $0x1c] sm:$0xf]
      %v208 = vld [vmem:[%s1] sm:$0xf]
      %v209 = vld [vmem:[%s1 + $0x4] sm:$0x1]
      %v210 = vld [vmem:[%s2] sm:$0x1]
      %v212 = vperm.slane %v210, 0
      %v222 = vunpack.c.l.b16 %v200
      %v223 = vunpack.c.l.b16 %v201
      %v224 = vunpack.c.l.b16 %v202
      %v225 = vunpack.c.l.b16 %v203
      %v226 = vunpack.c.l.b16 %v204
      %v227 = vunpack.c.l.b16 %v205
      %v228 = vunpack.c.l.b16 %v206
      %v229 = vunpack.c.l.b16 %v207
      %v230 = vpack.c.b16 %v223, %v222
      %v231 = vpack.c.b16 %v225, %v224
      %v232 = vpack.c.b16 %v227, %v226
      %v233 = vpack.c.b16 %v229, %v228
      %v236 = vunpack.c.l.b16 %v208
      %v237 = vunpack.c.l.b16 %v209
      %v238 = vpack.c.b16 %v237, %v236
      %vm239 = vcmask 72704
      %v241 = vsel %vm239, %v230, 0
      %v244 = vsel %vm239, %v231, 0
      %v247 = vsel %vm239, %v232, 0
      %v250 = vsel %vm239, %v233, 0
      %vm252 = vcmask 1043456
      %vm253 = vcmask 1044480
      %v254 = vsel %vm252, 4294967295, 65535
      %v255 = vsel %vm253, %v254, 0
      %v257 = vand.u32 %v238, %v255
      %259 = vmatpush.bf16.msra.mxu0 0
      %260 = vmatpush.bf16.msra.mxu0 0
      %261 = vmatpush.bf16.msra.mxu0 0
      %262 = vmatpush.bf16.msra.mxu0 0
      %263 = vmatpush.bf16.msra.mxu0 0
      %264 = vmatpush.bf16.msra.mxu0 0
      %265 = vmatpush.bf16.msra.mxu0 0
      %266 = vmatpush.bf16.msra.mxu0 %v257
      %267 = vmatmul.bf16.gmra.mxu0 %v241
      %v268 = vpop.f32.mrf.mxu0
      %v269 = vadd.f32 %v212, %v268
      %v270 = vpop.f32.mrf.mxu0
      %v271 = vadd.f32 %v212, %v270
      %272 = vmatmul.bf16.gmra.mxu0 %v244
      %v273 = vpop.f32.mrf.mxu0
      %v274 = vadd.f32 %v212, %v273
      %v275 = vpop.f32.mrf.mxu0
      %v276 = vadd.f32 %v212, %v275
      %277 = vmatmul.bf16.gmra.mxu0 %v247
      %v278 = vpop.f32.mrf.mxu0
      %v279 = vadd.f32 %v212, %v278
      %v280 = vpop.f32.mrf.mxu0
      %v281 = vadd.f32 %v212, %v280
      %282 = vmatmul.bf16.gmra.mxu0 %v250
      %v283 = vpop.f32.mrf.mxu0
      %v284 = vadd.f32 %v212, %v283
      %v285 = vpop.f32.mrf.mxu0
      %v286 = vadd.f32 %v212, %v285
      %287 = vdwg.mxu0
      %vm288 = vcmask 130048
      %v289 = vsel %vm288, %v269, 0.0
      %v290 = vsel %vm288, %v271, 0.0
      %v291 = vadd.f32 %v289, %v290
      %v292 = vsel %vm288, %v274, 0.0
      %v293 = vadd.f32 %v291, %v292
      %v294 = vsel %vm288, %v276, 0.0
      %v295 = vadd.f32 %v293, %v294
      %v296 = vsel %vm288, %v279, 0.0
      %v297 = vadd.f32 %v295, %v296
      %v298 = vsel %vm288, %v281, 0.0
      %v299 = vadd.f32 %v297, %v298
      %v300 = vsel %vm288, %v284, 0.0
      %v301 = vadd.f32 %v299, %v300
      %v302 = vsel %vm288, %v286, 0.0
      %v303 = vadd.f32 %v301, %v302
      %v304 = vrot.slane %v303, 4
      %v305 = vadd.f32 %v303, %v304
      %v306 = vrot.slane %v305, 2
      %v307 = vadd.f32 %v305, %v306
      %v308 = vrot.slane %v307, 1
      %v309 = vadd.f32 %v307, %v308
      %v310 = vrcp.pop 64.0
      %v311 = vmul.f32 64.0, %v310
      %v312 = vsub.f32 1.0, %v311
      %v313 = vmul.f32 %v310, %v312
      %v314 = vadd.f32 %v310, %v313
      %vm315 = vweird.f32 %v310
      %v316 = vsel %vm315, %v310, %v314
      %v317 = vmul.f32 %v309, %v316
      %v318 = vmul.f32 %v269, %v269
      %v319 = vmul.f32 %v271, %v271
      %v320 = vmul.f32 %v274, %v274
      %v321 = vmul.f32 %v276, %v276
      %v322 = vmul.f32 %v279, %v279
      %v323 = vmul.f32 %v281, %v281
      %v324 = vmul.f32 %v284, %v284
      %v325 = vmul.f32 %v286, %v286
      %v326 = vsel %vm288, %v318, 0.0
      %v327 = vsel %vm288, %v319, 0.0
      %v328 = vadd.f32 %v326, %v327
      %v329 = vsel %vm288, %v320, 0.0
      %v330 = vadd.f32 %v328, %v329
      %v331 = vsel %vm288, %v321, 0.0
      %v332 = vadd.f32 %v330, %v331
      %v333 = vsel %vm288, %v322, 0.0
      %v334 = vadd.f32 %v332, %v333
      %v335 = vsel %vm288, %v323, 0.0
      %v336 = vadd.f32 %v334, %v335
      %v337 = vsel %vm288, %v324, 0.0
      %v338 = vadd.f32 %v336, %v337
      %v339 = vsel %vm288, %v325, 0.0
      %v340 = vadd.f32 %v338, %v339
      %v341 = vrot.slane %v340, 4
      %v342 = vadd.f32 %v340, %v341
      %v343 = vrot.slane %v342, 2
      %v344 = vadd.f32 %v342, %v343
      %v345 = vrot.slane %v344, 1
      %v346 = vadd.f32 %v344, %v345
      %v347 = vmul.f32 %v346, %v316
      %v348 = vmul.f32 %v317, %v317
      %v349 = vsub.f32 %v347, %v348
      %v350 = vmax.f32 %v349, 0.0
      %v351 = vsub.f32 %v269, %v317
      %v352 = vsub.f32 %v271, %v317
      %v353 = vsub.f32 %v274, %v317
      %v354 = vsub.f32 %v276, %v317
      %v355 = vsub.f32 %v279, %v317
      %v356 = vsub.f32 %v281, %v317
      %v357 = vsub.f32 %v284, %v317
      %v358 = vsub.f32 %v286, %v317
      %v359 = vadd.f32 %v350, 1e-05
      %v360 = vrsqrt.pop %v359
      %v361 = vmul.f32 %v360, %v359
      %v362 = vmul.f32 %v361, %v360
      %v363 = vmul.f32 0.5, %v362
      %v364 = vsub.f32 1.5, %v363
      %v365 = vmul.f32 %v360, %v364
      %vm366 = vweird.f32 %v359
      %vm367 = vweird.f32 %v360
      %vm368 = vmor %vm366, %vm367
      %v369 = vsel %vm368, %v360, %v365
      %v370 = vmul.f32 %v351, %v369
      %v371 = vmul.f32 %v352, %v369
      %v372 = vmul.f32 %v353, %v369
      %v373 = vmul.f32 %v354, %v369
      %v374 = vmul.f32 %v355, %v369
      %v375 = vmul.f32 %v356, %v369
      %v376 = vmul.f32 %v357, %v369
      %v377 = vmul.f32 %v358, %v369
      %s378 = sld [smem:[#allocation2]]
      %vm379 = vcmp.gt.f32.partialorder %v370, 0.0
      %vm380 = vcmp.gt.f32.partialorder %v371, 0.0
      %vm381 = vcmp.gt.f32.partialorder %v372, 0.0
      %vm382 = vcmp.gt.f32.partialorder %v373, 0.0
      %vm383 = vcmp.gt.f32.partialorder %v374, 0.0
      %vm384 = vcmp.gt.f32.partialorder %v375, 0.0
      %vm385 = vcmp.gt.f32.partialorder %v376, 0.0
      %vm386 = vcmp.gt.f32.partialorder %v377, 0.0
      %v387 = vstv %s378
      %v388 = vmul.f32 %v387, %v370
      %v389 = vmul.f32 %v387, %v371
      %v390 = vmul.f32 %v387, %v372
      %v391 = vmul.f32 %v387, %v373
      %v392 = vmul.f32 %v387, %v374
      %v393 = vmul.f32 %v387, %v375
      %v394 = vmul.f32 %v387, %v376
      %v395 = vmul.f32 %v387, %v377
      %v396 = vsel %vm379, %v370, %v388
      %v397 = vsel %vm380, %v371, %v389
      %v398 = vsel %vm381, %v372, %v390
      %v399 = vsel %vm382, %v373, %v391
      %v400 = vsel %vm383, %v374, %v392
      %v401 = vsel %vm384, %v375, %v393
      %v402 = vsel %vm385, %v376, %v394
      %v403 = vsel %vm386, %v377, %v395
      %v404 = vpack.c.bf16 %v396, %v396
      %v405 = vpack.c.bf16 %v397, %v397
      %v406 = vpack.c.bf16 %v398, %v398
      %v407 = vpack.c.bf16 %v399, %v399
      %v408 = vpack.c.bf16 %v400, %v400
      %v409 = vpack.c.bf16 %v401, %v401
      %v410 = vpack.c.bf16 %v402, %v402
      %v411 = vpack.c.bf16 %v403, %v403
      %vm412 = vcmask 125952
      %413 = vst.msk [vmem:[%s198] sm:$0xf] %vm412, %v404
      %414 = vst.msk [vmem:[%s198 + $0x4] sm:$0xf] %vm412, %v405
      %415 = vst.msk [vmem:[%s198 + $0x8] sm:$0xf] %vm412, %v406
      %416 = vst.msk [vmem:[%s198 + $0xc] sm:$0xf] %vm412, %v407
      %417 = vst.msk [vmem:[%s198 + $0x10] sm:$0xf] %vm412, %v408
      %418 = vst.msk [vmem:[%s198 + $0x14] sm:$0xf] %vm412, %v409
      %419 = vst.msk [vmem:[%s198 + $0x18] sm:$0xf] %vm412, %v410
      %420 = vst.msk [vmem:[%s198 + $0x1c] sm:$0xf] %vm412, %v411
      %p421 = scmp.lt.s32.totalorder %s16, 1
      %s422 = scalar_select %p421, %s16, 1
      %s423 = smul.addr %s422, 8
      %s424 = smul.addr %s423, 4
      %s425 = scalar_lea.vmem %s4, %s424
      // Predicated region
      $region37: #{supervised_autoencoder_forward.6} parent=35 // pred_check
        %p426 = pneg %p123
      $region38: #{supervised_autoencoder_forward.6} parent=35 // pred_check_branch
        %428 = sbr.rel (%p426) target = $region40
      $region39: #{supervised_autoencoder_forward.6} parent=35 // pred_region
        _
      $region40: #{supervised_autoencoder_forward.6} parent=35 // pred_fallthru
        _
    $region36: #{supervised_autoencoder_forward.6} parent=5 // pred_fallthru
      _
    %p429 = scmp.le.s32.totalorder 2, %s11
    // Predicated region
    $region41: #{supervised_autoencoder_forward.6} parent=5 // pred_check
      %p430 = pneg %p429
    $region42: #{supervised_autoencoder_forward.6} parent=5 // pred_check_branch
      %432 = sbr.rel (%p430) target = $region44
    $region43: #{supervised_autoencoder_forward.6} parent=5 // pred_region
      %s433 = ssub.s32 %s11, 2
      // Predicated region
      $region45: #{supervised_autoencoder_forward.6} parent=43 // pred_check
        %p434 = pneg %p129
      $region46: #{supervised_autoencoder_forward.6} parent=43 // pred_check_branch
        %436 = sbr.rel (%p434) target = $region48
      $region47: #{supervised_autoencoder_forward.6} parent=43 // pred_region
        %p437 = scmp.lt.s32.totalorder %s17, 1
        %s438 = scalar_select %p437, %s17, 1
        %s439 = smul.addr %s438, 8
        %s440 = smul.addr %s439, 4
        %s441 = scalar_lea.vmem %s4, %s440
      $region48: #{supervised_autoencoder_forward.6} parent=43 // pred_fallthru
        _
    $region44: #{supervised_autoencoder_forward.6} parent=5 // pred_fallthru
      _
  $region6: #{supervised_autoencoder_forward.6} parent=0 // loop_footer
    %s15 = sadd.s32 1, %s11
  $region7: #{supervised_autoencoder_forward.6} parent=0 // loop_footer_branch
    %10 = sbr.rel target = $region3
  $region8: #{supervised_autoencoder_forward.6} parent=0 // loop_exit
    _

// kernel: supervised_autoencoder_forward.7
$region0: #{supervised_autoencoder_forward.7}
  #allocation0 [shape = 'u32[]', space=smem, size = 0x4, offset = 0x4, fixed_abs, tag = 'smem constant byte address 0x4 - core index']
  #allocation1 [shape = 'u32[72,128]{1,0:T(1,128)}', space=vmem, size = 0x9000, scoped, tag = 'internal scratch']
  #allocation2 [shape = 'f32[1,1]{1,0:T(1,128)S(6)}', space=smem, size = 0x200, scoped, tag = 'scoped memory for supervised_autoencoder_forward.7']
  %s0 = inlined_call_operand.vmem [shape: bf16[2,16,144], index: 0, kind: input, shape index: {}]
  %s1 = inlined_call_operand.vmem [shape: bf16[144,32], index: 1, kind: input, shape index: {}]
  %s2 = inlined_call_operand.vmem [shape: f32[1,32], index: 2, kind: input, shape index: {}]
  %s3 = inlined_call_operand.<no memory space> [shape: f32[1,1], index: 3, kind: input, shape index: {}]
  %s4 = inlined_call_operand.vmem [shape: bf16[2,16,32], index: 4, kind: output, shape index: {}]
  %s5 = sld [smem:[#allocation0]]
  $region49: #{supervised_autoencoder_forward.7} parent=0
    _
  %s7 = ssub.s32 1, %s5
  %s8 = scalar_select 0, %s7, %s5
  %9 = sst [smem:[#allocation2]] %s3
  loop: start=0, step=1, limit=4
  $region2: #{supervised_autoencoder_forward.7} parent=0 // loop_pre_header
    _
  $region3: #{supervised_autoencoder_forward.7} parent=0 // loop_header
    %s11 = sphi 0, %s15
    %p12 = scmp.ge.s32.totalorder %s11, 4
    %s21 = sphi 0, %s23
    %s24 = sphi 0, %s21
    %s25 = sphi 0, %s24
    %s41 = sphi 0, %s25
    %s45 = sphi 0, %s45
    %s47 = sphi 0, %s45
    %s48 = sphi 0, %s47
    %s62 = sphi 0, %s48
    %s66 = sphi 0, %s66
    %s68 = sphi 0, %s66
    %s69 = sphi 0, %s68
    %s83 = sphi 0, %s69
    %s87 = sphi 0, %s87
    %s89 = sphi 0, %s87
    %s90 = sphi 0, %s89
    %s104 = sphi 0, %s90
    %s110 = sphi 0, %s112
    %s113 = sphi 0, %s110
    %s114 = sphi 0, %s113
    %s130 = sphi 0, %s114
  $region4: #{supervised_autoencoder_forward.7} parent=0 // loop_header_branch
    %14 = sbr.rel (%p12) target = $region8
  $region5: #{supervised_autoencoder_forward.7} parent=0 // loop_body
    %s16 = ssub.s32 %s11, 1
    %s17 = ssub.s32 %s11, 2
    %s18 = sadd.s32 %s11, 1
    %s19 = ssub.s32 %s11, %s18
    %p20 = scmp.eq.s32.totalorder %s19, 0
    %s22 = sadd.s32 %s21, 1
    %s23 = scalar_select %p20, %s21, %s22
    %p26 = pneg %p20
    %p27 = scmp.eq.s32.totalorder %s11, 1
    %p28 = por %p26, %p27
    %p29 = scmp.ne.s32.totalorder %s21, %s24
    %p30 = scmp.eq.s32.totalorder %s11, 0
    %p31 = por %p29, %p30
    %p32 = scmp.ne.s32.totalorder %s21, %s24
    %p33 = scmp.eq.s32.totalorder %s16, 1
    %p34 = por %p32, %p33
    %p35 = scmp.ne.s32.totalorder %s24, %s25
    %p36 = scmp.eq.s32.totalorder %s16, 0
    %p37 = por %p35, %p36
    %p38 = scmp.ne.s32.totalorder %s24, %s25
    %p39 = scmp.eq.s32.totalorder %s17, 1
    %p40 = por %p38, %p39
    %p42 = scmp.ne.s32.totalorder %s25, %s41
    %p43 = scmp.eq.s32.totalorder %s17, 0
    %p44 = por %p42, %p43
    %s46 = sadd.s32 %s45, 1
    %p49 = scmp.eq.s32.totalorder %s11, 1
    %p50 = scmp.ne.s32.totalorder %s45, %s47
    %p51 = scmp.eq.s32.totalorder %s11, 0
    %p52 = por %p50, %p51
    %p53 = scmp.ne.s32.totalorder %s45, %s47
    %p54 = scmp.eq.s32.totalorder %s16, 1
    %p55 = por %p53, %p54
    %p56 = scmp.ne.s32.totalorder %s47, %s48
    %p57 = scmp.eq.s32.totalorder %s16, 0
    %p58 = por %p56, %p57
    %p59 = scmp.ne.s32.totalorder %s47, %s48
    %p60 = scmp.eq.s32.totalorder %s17, 1
    %p61 = por %p59, %p60
    %p63 = scmp.ne.s32.totalorder %s48, %s62
    %p64 = scmp.eq.s32.totalorder %s17, 0
    %p65 = por %p63, %p64
    %s67 = sadd.s32 %s66, 1
    %p70 = scmp.eq.s32.totalorder %s11, 1
    %p71 = scmp.ne.s32.totalorder %s66, %s68
    %p72 = scmp.eq.s32.totalorder %s11, 0
    %p73 = por %p71, %p72
    %p74 = scmp.ne.s32.totalorder %s66, %s68
    %p75 = scmp.eq.s32.totalorder %s16, 1
    %p76 = por %p74, %p75
    %p77 = scmp.ne.s32.totalorder %s68, %s69
    %p78 = scmp.eq.s32.totalorder %s16, 0
    %p79 = por %p77, %p78
    %p80 = scmp.ne.s32.totalorder %s68, %s69
    %p81 = scmp.eq.s32.totalorder %s17, 1
    %p82 = por %p80, %p81
    %p84 = scmp.ne.s32.totalorder %s69, %s83
    %p85 = scmp.eq.s32.totalorder %s17, 0
    %p86 = por %p84, %p85
    %s88 = sadd.s32 %s87, 1
    %p91 = scmp.eq.s32.totalorder %s11, 1
    %p92 = scmp.ne.s32.totalorder %s87, %s89
    %p93 = scmp.eq.s32.totalorder %s11, 0
    %p94 = por %p92, %p93
    %p95 = scmp.ne.s32.totalorder %s87, %s89
    %p96 = scmp.eq.s32.totalorder %s16, 1
    %p97 = por %p95, %p96
    %p98 = scmp.ne.s32.totalorder %s89, %s90
    %p99 = scmp.eq.s32.totalorder %s16, 0
    %p100 = por %p98, %p99
    %p101 = scmp.ne.s32.totalorder %s89, %s90
    %p102 = scmp.eq.s32.totalorder %s17, 1
    %p103 = por %p101, %p102
    %p105 = scmp.ne.s32.totalorder %s90, %s104
    %p106 = scmp.eq.s32.totalorder %s17, 0
    %p107 = por %p105, %p106
    %s108 = ssub.s32 %s11, %s18
    %p109 = scmp.eq.s32.totalorder %s108, 0
    %s111 = sadd.s32 %s110, 1
    %s112 = scalar_select %p109, %s110, %s111
    %p115 = pneg %p109
    %p116 = scmp.eq.s32.totalorder %s11, 1
    %p117 = por %p115, %p116
    %p118 = scmp.ne.s32.totalorder %s110, %s113
    %p119 = scmp.eq.s32.totalorder %s11, 0
    %p120 = por %p118, %p119
    %p121 = scmp.ne.s32.totalorder %s110, %s113
    %p122 = scmp.eq.s32.totalorder %s16, 1
    %p123 = por %p121, %p122
    %p124 = scmp.ne.s32.totalorder %s113, %s114
    %p125 = scmp.eq.s32.totalorder %s16, 0
    %p126 = por %p124, %p125
    %p127 = scmp.ne.s32.totalorder %s113, %s114
    %p128 = scmp.eq.s32.totalorder %s17, 1
    %p129 = por %p127, %p128
    %p131 = scmp.ne.s32.totalorder %s114, %s130
    %p132 = scmp.eq.s32.totalorder %s17, 0
    %p133 = por %p131, %p132
    %p134 = scmp.le.s32.totalorder 1, %s11
    %p135 = scmp.lt.s32.totalorder %s11, 3
    %p136 = pnand %p134, %p135
    %p137 = pneg %p136
    // Predicated region
    $region9: #{supervised_autoencoder_forward.7} parent=5 // pred_check
      _
    $region10: #{supervised_autoencoder_forward.7} parent=5 // pred_check_branch
      %139 = sbr.rel (%p136) target = $region12
    $region11: #{supervised_autoencoder_forward.7} parent=5 // pred_region
      %s140 = ssub.s32 %s11, 1
      // Predicated region
      $region13: #{supervised_autoencoder_forward.7} parent=11 // pred_check
        %p141 = pneg %p58
      $region14: #{supervised_autoencoder_forward.7} parent=11 // pred_check_branch
        %143 = sbr.rel (%p141) target = $region16
      $region15: #{supervised_autoencoder_forward.7} parent=11 // pred_region
        _
      $region16: #{supervised_autoencoder_forward.7} parent=11 // pred_fallthru
        _
      // Predicated region
      $region17: #{supervised_autoencoder_forward.7} parent=11 // pred_check
        %p144 = pneg %p79
      $region18: #{supervised_autoencoder_forward.7} parent=11 // pred_check_branch
        %146 = sbr.rel (%p144) target = $region20
      $region19: #{supervised_autoencoder_forward.7} parent=11 // pred_region
        _
      $region20: #{supervised_autoencoder_forward.7} parent=11 // pred_fallthru
        _
      // Predicated region
      $region21: #{supervised_autoencoder_forward.7} parent=11 // pred_check
        %p147 = pneg %p100
      $region22: #{supervised_autoencoder_forward.7} parent=11 // pred_check_branch
        %149 = sbr.rel (%p147) target = $region24
      $region23: #{supervised_autoencoder_forward.7} parent=11 // pred_region
        _
      $region24: #{supervised_autoencoder_forward.7} parent=11 // pred_fallthru
        _
    $region12: #{supervised_autoencoder_forward.7} parent=5 // pred_fallthru
      _
    %p150 = scmp.lt.s32.totalorder %s11, 2
    // Predicated region
    $region25: #{supervised_autoencoder_forward.7} parent=5 // pred_check
      %p151 = pneg %p150
    $region26: #{supervised_autoencoder_forward.7} parent=5 // pred_check_branch
      %153 = sbr.rel (%p151) target = $region28
    $region27: #{supervised_autoencoder_forward.7} parent=5 // pred_region
      // Predicated region
      $region29: #{supervised_autoencoder_forward.7} parent=27 // pred_check
        %p154 = pneg %p31
      $region30: #{supervised_autoencoder_forward.7} parent=27 // pred_check_branch
        %156 = sbr.rel (%p154) target = $region32
      $region31: #{supervised_autoencoder_forward.7} parent=27 // pred_region
        %p157 = scmp.lt.s32.totalorder %s11, 1
        %s158 = scalar_select %p157, %s11, 1
        %s159 = smul.addr %s158, 4
        %s160 = smul.addr %s159, 4
        %s161 = scalar_lea.vmem %s0, %s160
      $region32: #{supervised_autoencoder_forward.7} parent=27 // pred_fallthru
        _
    $region28: #{supervised_autoencoder_forward.7} parent=5 // pred_fallthru
      _
    %p162 = scmp.le.s32.totalorder 1, %s11
    %p163 = scmp.lt.s32.totalorder %s11, 3
    %p164 = pnand %p162, %p163
    %p165 = pneg %p164
    // Predicated region
    $region33: #{supervised_autoencoder_forward.7} parent=5 // pred_check
      _
    $region34: #{supervised_autoencoder_forward.7} parent=5 // pred_check_branch
      %167 = sbr.rel (%p164) target = $region36
    $region35: #{supervised_autoencoder_forward.7} parent=5 // pred_region
      %s168 = ssub.s32 %s11, 1
      %p169 = scmp.lt.s32.totalorder %s16, 1
      %s170 = scalar_select %p169, %s16, 1
      %s171 = smul.addr %s170, 4
      %s172 = smul.addr %s171, 4
      %s173 = scalar_lea.vmem %s0, %s172
      %p174 = pneg %p37
      %p175 = pneg %p34
      %p176 = pneg %p58
      %p177 = pneg %p55
      %p178 = pneg %p79
      %p179 = pneg %p76
      %p180 = pneg %p100
      %p181 = pneg %p97
      %p182 = pneg %p126
      %p183 = pneg %p123
      %p184 = scmp.lt.s32.totalorder %s16, 1
      %s185 = scalar_select %p184, %s16, 1
      %s186 = smul.addr %s185, 2
      %s187 = smul.addr %s186, 4
      %s188 = scalar_lea.vmem %s4, %s187
      %p189 = scmp.lt.s32.totalorder %s16, 1
      %s190 = scalar_select %p189, %s16, 1
      %s191 = smul.addr %s190, 4
      %s192 = smul.addr %s191, 4
      %s193 = scalar_lea.vmem %s0, %s192
      %p194 = scmp.lt.s32.totalorder %s16, 1
      %s195 = scalar_select %p194, %s16, 1
      %s196 = smul.addr %s195, 2
      %s197 = smul.addr %s196, 4
      %s198 = scalar_lea.vmem %s4, %s197
      %v200 = vld [vmem:[%s193] sm:$0xff]
      %v201 = vld [vmem:[%s193 + $0x8] sm:$0xff]
      %v202 = vld [vmem:[%s1] sm:$0xf]
      %v203 = vld [vmem:[%s1 + $0x4] sm:$0xf]
      %v204 = vld [vmem:[%s1 + $0x8] sm:$0xf]
      %v205 = vld [vmem:[%s1 + $0xc] sm:$0xf]
      %v206 = vld [vmem:[%s1 + $0x10] sm:$0xf]
      %v207 = vld [vmem:[%s1 + $0x14] sm:$0xf]
      %v208 = vld [vmem:[%s1 + $0x18] sm:$0xf]
      %v209 = vld [vmem:[%s1 + $0x1c] sm:$0xf]
      %v210 = vld [vmem:[%s1 + $0x20] sm:$0xf]
      %v211 = vld [vmem:[%s1 + $0x24] sm:$0xf]
      %v212 = vld [vmem:[%s1 + $0x28] sm:$0xf]
      %v213 = vld [vmem:[%s1 + $0x2c] sm:$0xf]
      %v214 = vld [vmem:[%s1 + $0x30] sm:$0xf]
      %v215 = vld [vmem:[%s1 + $0x34] sm:$0xf]
      %v216 = vld [vmem:[%s1 + $0x38] sm:$0xf]
      %v217 = vld [vmem:[%s1 + $0x3c] sm:$0xf]
      %v218 = vld [vmem:[%s1 + $0x40] sm:$0xf]
      %v219 = vld [vmem:[%s1 + $0x44] sm:$0xf]
      %v220 = vld [vmem:[%s2] sm:$0x1]
      %v222 = vperm.slane %v220, 0
      %v226 = vunpack.c.l.b16 %v200
      %v227 = vunpack.c.h.b16 %v200
      %v228 = vunpack.c.l.b16 %v201
      %v229 = vunpack.c.h.b16 %v201
      %v230 = vpack.c.b16 %v228, %v226
      %v231 = vpack.c.b16 %v229, %v227
      %v251 = vunpack.c.l.b16 %v202
      %v252 = vunpack.c.l.b16 %v203
      %v253 = vunpack.c.l.b16 %v204
      %v254 = vunpack.c.l.b16 %v205
      %v255 = vunpack.c.l.b16 %v206
      %v256 = vunpack.c.l.b16 %v207
      %v257 = vunpack.c.l.b16 %v208
      %v258 = vunpack.c.l.b16 %v209
      %v259 = vunpack.c.l.b16 %v210
      %v260 = vunpack.c.l.b16 %v211
      %v261 = vunpack.c.l.b16 %v212
      %v262 = vunpack.c.l.b16 %v213
      %v263 = vunpack.c.l.b16 %v214
      %v264 = vunpack.c.l.b16 %v215
      %v265 = vunpack.c.l.b16 %v216
      %v266 = vunpack.c.l.b16 %v217
      %v267 = vunpack.c.l.b16 %v218
      %v268 = vunpack.c.l.b16 %v219
      %v269 = vpack.c.b16 %v252, %v251
      %v270 = vpack.c.b16 %v254, %v253
      %v271 = vpack.c.b16 %v256, %v255
      %v272 = vpack.c.b16 %v258, %v257
      %v273 = vpack.c.b16 %v260, %v259
      %v274 = vpack.c.b16 %v262, %v261
      %v275 = vpack.c.b16 %v264, %v263
      %v276 = vpack.c.b16 %v266, %v265
      %v277 = vpack.c.b16 %v268, %v267
      %vm287 = vcmask 130048
      %v289 = vsel %vm287, %v231, 0
      %291 = vmatpush.bf16.msra.mxu0 %v276
      %292 = vmatpush.bf16.msra.mxu0 %v275
      %293 = vmatpush.bf16.msra.mxu0 %v274
      %294 = vmatpush.bf16.msra.mxu0 %v273
      %295 = vmatpush.bf16.msra.mxu0 %v272
      %296 = vmatpush.bf16.msra.mxu0 %v271
      %297 = vmatpush.bf16.msra.mxu0 %v270
      %298 = vmatpush.bf16.msra.mxu0 %v269
      %299 = vmatmul.bf16.gmra.mxu0 %v230
      %v300 = vpop.f32.mrf.mxu0
      %v301 = vadd.f32 %v222, %v300
      %v302 = vpop.f32.mrf.mxu0
      %v303 = vadd.f32 %v222, %v302
      %304 = vdwg.mxu0
      %305 = vmatpush.bf16.msra.mxu0 0
      %306 = vmatpush.bf16.msra.mxu0 0
      %307 = vmatpush.bf16.msra.mxu0 0
      %308 = vmatpush.bf16.msra.mxu0 0
      %309 = vmatpush.bf16.msra.mxu0 0
      %310 = vmatpush.bf16.msra.mxu0 0
      %311 = vmatpush.bf16.msra.mxu0 0
      %312 = vmatpush.bf16.msra.mxu0 %v277
      %313 = vmatmul.bf16.gmra.mxu0 %v289
      %v314 = vpop.f32.mrf.mxu0
      %v315 = vadd.f32 %v301, %v314
      %v316 = vpop.f32.mrf.mxu0
      %v317 = vadd.f32 %v303, %v316
      %318 = vdwg.mxu0
      %vm319 = vcmask 261120
      %v320 = vsel %vm319, %v315, 0.0
      %v321 = vsel %vm319, %v317, 0.0
      %v322 = vadd.f32 %v320, %v321
      %v323 = vrot.slane %v322, 4
      %v324 = vadd.f32 %v322, %v323
      %v325 = vrot.slane %v324, 2
      %v326 = vadd.f32 %v324, %v325
      %v327 = vrot.slane %v326, 1
      %v328 = vadd.f32 %v326, %v327
      %v329 = vrcp.pop 16.0
      %v330 = vmul.f32 16.0, %v329
      %v331 = vsub.f32 1.0, %v330
      %v332 = vmul.f32 %v329, %v331
      %v333 = vadd.f32 %v329, %v332
      %vm334 = vweird.f32 %v329
      %v335 = vsel %vm334, %v329, %v333
      %v336 = vmul.f32 %v328, %v335
      %v337 = vmul.f32 %v315, %v315
      %v338 = vmul.f32 %v317, %v317
      %v339 = vsel %vm319, %v337, 0.0
      %v340 = vsel %vm319, %v338, 0.0
      %v341 = vadd.f32 %v339, %v340
      %v342 = vrot.slane %v341, 4
      %v343 = vadd.f32 %v341, %v342
      %v344 = vrot.slane %v343, 2
      %v345 = vadd.f32 %v343, %v344
      %v346 = vrot.slane %v345, 1
      %v347 = vadd.f32 %v345, %v346
      %v348 = vmul.f32 %v347, %v335
      %v349 = vmul.f32 %v336, %v336
      %v350 = vsub.f32 %v348, %v349
      %v351 = vmax.f32 %v350, 0.0
      %v352 = vsub.f32 %v315, %v336
      %v353 = vsub.f32 %v317, %v336
      %v354 = vadd.f32 %v351, 1e-05
      %v355 = vrsqrt.pop %v354
      %v356 = vmul.f32 %v355, %v354
      %v357 = vmul.f32 %v356, %v355
      %v358 = vmul.f32 0.5, %v357
      %v359 = vsub.f32 1.5, %v358
      %v360 = vmul.f32 %v355, %v359
      %vm361 = vweird.f32 %v354
      %vm362 = vweird.f32 %v355
      %vm363 = vmor %vm361, %vm362
      %v364 = vsel %vm363, %v355, %v360
      %v365 = vmul.f32 %v352, %v364
      %v366 = vmul.f32 %v353, %v364
      %s367 = sld [smem:[#allocation2]]
      %vm368 = vcmp.gt.f32.partialorder %v365, 0.0
      %vm369 = vcmp.gt.f32.partialorder %v366, 0.0
      %v370 = vstv %s367
      %v371 = vmul.f32 %v370, %v365
      %v372 = vmul.f32 %v370, %v366
      %v373 = vsel %vm368, %v365, %v371
      %v374 = vsel %vm369, %v366, %v372
      %v375 = vpack.c.bf16 %v373, %v373
      %v376 = vpack.c.bf16 %v374, %v374
      %vm377 = vcmask 257024
      %378 = vst.msk [vmem:[%s198] sm:$0xf] %vm377, %v375
      %379 = vst.msk [vmem:[%s198 + $0x4] sm:$0xf] %vm377, %v376
      %p380 = scmp.lt.s32.totalorder %s16, 1
      %s381 = scalar_select %p380, %s16, 1
      %s382 = smul.addr %s381, 2
      %s383 = smul.addr %s382, 4
      %s384 = scalar_lea.vmem %s4, %s383
      // Predicated region
      $region37: #{supervised_autoencoder_forward.7} parent=35 // pred_check
        %p385 = pneg %p123
      $region38: #{supervised_autoencoder_forward.7} parent=35 // pred_check_branch
        %387 = sbr.rel (%p385) target = $region40
      $region39: #{supervised_autoencoder_forward.7} parent=35 // pred_region
        _
      $region40: #{supervised_autoencoder_forward.7} parent=35 // pred_fallthru
        _
    $region36: #{supervised_autoencoder_forward.7} parent=5 // pred_fallthru
      _
    %p388 = scmp.le.s32.totalorder 2, %s11
    // Predicated region
    $region41: #{supervised_autoencoder_forward.7} parent=5 // pred_check
      %p389 = pneg %p388
    $region42: #{supervised_autoencoder_forward.7} parent=5 // pred_check_branch
      %391 = sbr.rel (%p389) target = $region44
    $region43: #{supervised_autoencoder_forward.7} parent=5 // pred_region
      %s392 = ssub.s32 %s11, 2
      // Predicated region
      $region45: #{supervised_autoencoder_forward.7} parent=43 // pred_check
        %p393 = pneg %p129
      $region46: #{supervised_autoencoder_forward.7} parent=43 // pred_check_branch
        %395 = sbr.rel (%p393) target = $region48
      $region47: #{supervised_autoencoder_forward.7} parent=43 // pred_region
        %p396 = scmp.lt.s32.totalorder %s17, 1
        %s397 = scalar_select %p396, %s17, 1
        %s398 = smul.addr %s397, 2
        %s399 = smul.addr %s398, 4
        %s400 = scalar_lea.vmem %s4, %s399
      $region48: #{supervised_autoencoder_forward.7} parent=43 // pred_fallthru
        _
    $region44: #{supervised_autoencoder_forward.7} parent=5 // pred_fallthru
      _
  $region6: #{supervised_autoencoder_forward.7} parent=0 // loop_footer
    %s15 = sadd.s32 1, %s11
  $region7: #{supervised_autoencoder_forward.7} parent=0 // loop_footer_branch
    %10 = sbr.rel target = $region3
  $region8: #{supervised_autoencoder_forward.7} parent=0 // loop_exit
    _

// kernel: supervised_autoencoder_forward.8
$region0: #{supervised_autoencoder_forward.8}
  #allocation0 [shape = 'u32[]', space=smem, size = 0x4, offset = 0x4, fixed_abs, tag = 'smem constant byte address 0x4 - core index']
  #allocation1 [shape = 'u32[72,128]{1,0:T(1,128)}', space=vmem, size = 0x9000, scoped, tag = 'internal scratch']
  #allocation2 [shape = 'f32[1,1]{1,0:T(1,128)S(6)}', space=smem, size = 0x200, scoped, tag = 'scoped memory for supervised_autoencoder_forward.8']
  %s0 = inlined_call_operand.vmem [shape: bf16[2,4,288], index: 0, kind: input, shape index: {}]
  %s1 = inlined_call_operand.vmem [shape: bf16[288,64], index: 1, kind: input, shape index: {}]
  %s2 = inlined_call_operand.vmem [shape: f32[1,64], index: 2, kind: input, shape index: {}]
  %s3 = inlined_call_operand.<no memory space> [shape: f32[1,1], index: 3, kind: input, shape index: {}]
  %s4 = inlined_call_operand.vmem [shape: bf16[4,64,128], index: 4, kind: input, shape index: {}]
  %s5 = inlined_call_operand.vmem [shape: f32[1,128], index: 5, kind: input, shape index: {}]
  %s6 = inlined_call_operand.vmem [shape: bf16[128,2], index: 6, kind: input, shape index: {}]
  %s7 = inlined_call_operand.vmem [shape: f32[1,2], index: 7, kind: input, shape index: {}]
  %s8 = inlined_call_operand.vmem [shape: bf16[2,4,64], index: 8, kind: output, shape index: {0}]
  %s9 = inlined_call_operand.hbm [shape: f32[2,1,2], index: 9, kind: output, shape index: {1}]
  %10 = xla_tuple %s8, %s9
  %s11 = sld [smem:[#allocation0]]
  $region73: #{supervised_autoencoder_forward.8} parent=0
    _
  %s13 = ssub.s32 1, %s11
  %s14 = scalar_select 0, %s13, %s11
  %15 = sst [smem:[#allocation2]] %s3
  $region1: #{supervised_autoencoder_forward.8} parent=0
    #allocation3 [shape = 'u8[1024]{0}', space=vmem, size = 0x400, scoped, tag = 'output window, operand 1']
    #allocation4 [shape = 's32[2]{0}', space=sflag, size = 0x8, scoped, tag = 'scoped memory for supervised_autoencoder_forward.8']
    %16 = vsyncpa [#allocation4], 0
    %s17 = scalar_lea.sflag [#allocation4], 1
    %18 = vsyncpa %s17, 0
    loop: start=0, step=1, limit=4
    $region2: #{supervised_autoencoder_forward.8} parent=1 // loop_pre_header
      _
    $region3: #{supervised_autoencoder_forward.8} parent=1 // loop_header
      %s20 = sphi 0, %s24
      %p21 = scmp.ge.s32.totalorder %s20, 4
      %s30 = sphi 0, %s32
      %s33 = sphi 0, %s30
      %s34 = sphi 0, %s33
      %s50 = sphi 0, %s34
      %s54 = sphi 0, %s54
      %s56 = sphi 0, %s54
      %s57 = sphi 0, %s56
      %s71 = sphi 0, %s57
      %s75 = sphi 0, %s75
      %s77 = sphi 0, %s75
      %s78 = sphi 0, %s77
      %s92 = sphi 0, %s78
      %s96 = sphi 0, %s96
      %s98 = sphi 0, %s96
      %s99 = sphi 0, %s98
      %s113 = sphi 0, %s99
      %s117 = sphi 0, %s117
      %s119 = sphi 0, %s117
      %s120 = sphi 0, %s119
      %s134 = sphi 0, %s120
      %s138 = sphi 0, %s138
      %s140 = sphi 0, %s138
      %s141 = sphi 0, %s140
      %s155 = sphi 0, %s141
      %s159 = sphi 0, %s159
      %s161 = sphi 0, %s159
      %s162 = sphi 0, %s161
      %s176 = sphi 0, %s162
      %s180 = sphi 0, %s180
      %s182 = sphi 0, %s180
      %s183 = sphi 0, %s182
      %s197 = sphi 0, %s183
      %s203 = sphi 0, %s205
      %s206 = sphi 0, %s203
      %s207 = sphi 0, %s206
      %s223 = sphi 0, %s207
      %s229 = sphi 0, %s231
      %s232 = sphi 0, %s229
      %s233 = sphi 0, %s232
      %s249 = sphi 0, %s233
    $region4: #{supervised_autoencoder_forward.8} parent=1 // loop_header_branch
      %23 = sbr.rel (%p21) target = $region8
    $region5: #{supervised_autoencoder_forward.8} parent=1 // loop_body
      %s25 = ssub.s32 %s20, 1
      %s26 = ssub.s32 %s20, 2
      %s27 = sadd.s32 %s20, 1
      %s28 = ssub.s32 %s20, %s27
      %p29 = scmp.eq.s32.totalorder %s28, 0
      %s31 = sadd.s32 %s30, 1
      %s32 = scalar_select %p29, %s30, %s31
      %p35 = pneg %p29
      %p36 = scmp.eq.s32.totalorder %s20, 1
      %p37 = por %p35, %p36
      %p38 = scmp.ne.s32.totalorder %s30, %s33
      %p39 = scmp.eq.s32.totalorder %s20, 0
      %p40 = por %p38, %p39
      %p41 = scmp.ne.s32.totalorder %s30, %s33
      %p42 = scmp.eq.s32.totalorder %s25, 1
      %p43 = por %p41, %p42
      %p44 = scmp.ne.s32.totalorder %s33, %s34
      %p45 = scmp.eq.s32.totalorder %s25, 0
      %p46 = por %p44, %p45
      %p47 = scmp.ne.s32.totalorder %s33, %s34
      %p48 = scmp.eq.s32.totalorder %s26, 1
      %p49 = por %p47, %p48
      %p51 = scmp.ne.s32.totalorder %s34, %s50
      %p52 = scmp.eq.s32.totalorder %s26, 0
      %p53 = por %p51, %p52
      %s55 = sadd.s32 %s54, 1
      %p58 = scmp.eq.s32.totalorder %s20, 1
      %p59 = scmp.ne.s32.totalorder %s54, %s56
      %p60 = scmp.eq.s32.totalorder %s20, 0
      %p61 = por %p59, %p60
      %p62 = scmp.ne.s32.totalorder %s54, %s56
      %p63 = scmp.eq.s32.totalorder %s25, 1
      %p64 = por %p62, %p63
      %p65 = scmp.ne.s32.totalorder %s56, %s57
      %p66 = scmp.eq.s32.totalorder %s25, 0
      %p67 = por %p65, %p66
      %p68 = scmp.ne.s32.totalorder %s56, %s57
      %p69 = scmp.eq.s32.totalorder %s26, 1
      %p70 = por %p68, %p69
      %p72 = scmp.ne.s32.totalorder %s57, %s71
      %p73 = scmp.eq.s32.totalorder %s26, 0
      %p74 = por %p72, %p73
      %s76 = sadd.s32 %s75, 1
      %p79 = scmp.eq.s32.totalorder %s20, 1
      %p80 = scmp.ne.s32.totalorder %s75, %s77
      %p81 = scmp.eq.s32.totalorder %s20, 0
      %p82 = por %p80, %p81
      %p83 = scmp.ne.s32.totalorder %s75, %s77
      %p84 = scmp.eq.s32.totalorder %s25, 1
      %p85 = por %p83, %p84
      %p86 = scmp.ne.s32.totalorder %s77, %s78
      %p87 = scmp.eq.s32.totalorder %s25, 0
      %p88 = por %p86, %p87
      %p89 = scmp.ne.s32.totalorder %s77, %s78
      %p90 = scmp.eq.s32.totalorder %s26, 1
      %p91 = por %p89, %p90
      %p93 = scmp.ne.s32.totalorder %s78, %s92
      %p94 = scmp.eq.s32.totalorder %s26, 0
      %p95 = por %p93, %p94
      %s97 = sadd.s32 %s96, 1
      %p100 = scmp.eq.s32.totalorder %s20, 1
      %p101 = scmp.ne.s32.totalorder %s96, %s98
      %p102 = scmp.eq.s32.totalorder %s20, 0
      %p103 = por %p101, %p102
      %p104 = scmp.ne.s32.totalorder %s96, %s98
      %p105 = scmp.eq.s32.totalorder %s25, 1
      %p106 = por %p104, %p105
      %p107 = scmp.ne.s32.totalorder %s98, %s99
      %p108 = scmp.eq.s32.totalorder %s25, 0
      %p109 = por %p107, %p108
      %p110 = scmp.ne.s32.totalorder %s98, %s99
      %p111 = scmp.eq.s32.totalorder %s26, 1
      %p112 = por %p110, %p111
      %p114 = scmp.ne.s32.totalorder %s99, %s113
      %p115 = scmp.eq.s32.totalorder %s26, 0
      %p116 = por %p114, %p115
      %s118 = sadd.s32 %s117, 1
      %p121 = scmp.eq.s32.totalorder %s20, 1
      %p122 = scmp.ne.s32.totalorder %s117, %s119
      %p123 = scmp.eq.s32.totalorder %s20, 0
      %p124 = por %p122, %p123
      %p125 = scmp.ne.s32.totalorder %s117, %s119
      %p126 = scmp.eq.s32.totalorder %s25, 1
      %p127 = por %p125, %p126
      %p128 = scmp.ne.s32.totalorder %s119, %s120
      %p129 = scmp.eq.s32.totalorder %s25, 0
      %p130 = por %p128, %p129
      %p131 = scmp.ne.s32.totalorder %s119, %s120
      %p132 = scmp.eq.s32.totalorder %s26, 1
      %p133 = por %p131, %p132
      %p135 = scmp.ne.s32.totalorder %s120, %s134
      %p136 = scmp.eq.s32.totalorder %s26, 0
      %p137 = por %p135, %p136
      %s139 = sadd.s32 %s138, 1
      %p142 = scmp.eq.s32.totalorder %s20, 1
      %p143 = scmp.ne.s32.totalorder %s138, %s140
      %p144 = scmp.eq.s32.totalorder %s20, 0
      %p145 = por %p143, %p144
      %p146 = scmp.ne.s32.totalorder %s138, %s140
      %p147 = scmp.eq.s32.totalorder %s25, 1
      %p148 = por %p146, %p147
      %p149 = scmp.ne.s32.totalorder %s140, %s141
      %p150 = scmp.eq.s32.totalorder %s25, 0
      %p151 = por %p149, %p150
      %p152 = scmp.ne.s32.totalorder %s140, %s141
      %p153 = scmp.eq.s32.totalorder %s26, 1
      %p154 = por %p152, %p153
      %p156 = scmp.ne.s32.totalorder %s141, %s155
      %p157 = scmp.eq.s32.totalorder %s26, 0
      %p158 = por %p156, %p157
      %s160 = sadd.s32 %s159, 1
      %p163 = scmp.eq.s32.totalorder %s20, 1
      %p164 = scmp.ne.s32.totalorder %s159, %s161
      %p165 = scmp.eq.s32.totalorder %s20, 0
      %p166 = por %p164, %p165
      %p167 = scmp.ne.s32.totalorder %s159, %s161
      %p168 = scmp.eq.s32.totalorder %s25, 1
      %p169 = por %p167, %p168
      %p170 = scmp.ne.s32.totalorder %s161, %s162
      %p171 = scmp.eq.s32.totalorder %s25, 0
      %p172 = por %p170, %p171
      %p173 = scmp.ne.s32.totalorder %s161, %s162
      %p174 = scmp.eq.s32.totalorder %s26, 1
      %p175 = por %p173, %p174
      %p177 = scmp.ne.s32.totalorder %s162, %s176
      %p178 = scmp.eq.s32.totalorder %s26, 0
      %p179 = por %p177, %p178
      %s181 = sadd.s32 %s180, 1
      %p184 = scmp.eq.s32.totalorder %s20, 1
      %p185 = scmp.ne.s32.totalorder %s180, %s182
      %p186 = scmp.eq.s32.totalorder %s20, 0
      %p187 = por %p185, %p186
      %p188 = scmp.ne.s32.totalorder %s180, %s182
      %p189 = scmp.eq.s32.totalorder %s25, 1
      %p190 = por %p188, %p189
      %p191 = scmp.ne.s32.totalorder %s182, %s183
      %p192 = scmp.eq.s32.totalorder %s25, 0
      %p193 = por %p191, %p192
      %p194 = scmp.ne.s32.totalorder %s182, %s183
      %p195 = scmp.eq.s32.totalorder %s26, 1
      %p196 = por %p194, %p195
      %p198 = scmp.ne.s32.totalorder %s183, %s197
      %p199 = scmp.eq.s32.totalorder %s26, 0
      %p200 = por %p198, %p199
      %s201 = ssub.s32 %s20, %s27
      %p202 = scmp.eq.s32.totalorder %s201, 0
      %s204 = sadd.s32 %s203, 1
      %s205 = scalar_select %p202, %s203, %s204
      %p208 = pneg %p202
      %p209 = scmp.eq.s32.totalorder %s20, 1
      %p210 = por %p208, %p209
      %p211 = scmp.ne.s32.totalorder %s203, %s206
      %p212 = scmp.eq.s32.totalorder %s20, 0
      %p213 = por %p211, %p212
      %p214 = scmp.ne.s32.totalorder %s203, %s206
      %p215 = scmp.eq.s32.totalorder %s25, 1
      %p216 = por %p214, %p215
      %p217 = scmp.ne.s32.totalorder %s206, %s207
      %p218 = scmp.eq.s32.totalorder %s25, 0
      %p219 = por %p217, %p218
      %p220 = scmp.ne.s32.totalorder %s206, %s207
      %p221 = scmp.eq.s32.totalorder %s26, 1
      %p222 = por %p220, %p221
      %p224 = scmp.ne.s32.totalorder %s207, %s223
      %p225 = scmp.eq.s32.totalorder %s26, 0
      %p226 = por %p224, %p225
      %s227 = ssub.s32 %s20, %s27
      %p228 = scmp.eq.s32.totalorder %s227, 0
      %s230 = sadd.s32 %s229, 1
      %s231 = scalar_select %p228, %s229, %s230
      %p234 = pneg %p228
      %p235 = scmp.eq.s32.totalorder %s20, 1
      %p236 = por %p234, %p235
      %p237 = scmp.ne.s32.totalorder %s229, %s232
      %p238 = scmp.eq.s32.totalorder %s20, 0
      %p239 = por %p237, %p238
      %p240 = scmp.ne.s32.totalorder %s229, %s232
      %p241 = scmp.eq.s32.totalorder %s25, 1
      %p242 = por %p240, %p241
      %p243 = scmp.ne.s32.totalorder %s232, %s233
      %p244 = scmp.eq.s32.totalorder %s25, 0
      %p245 = por %p243, %p244
      %p246 = scmp.ne.s32.totalorder %s232, %s233
      %p247 = scmp.eq.s32.totalorder %s26, 1
      %p248 = por %p246, %p247
      %p250 = scmp.ne.s32.totalorder %s233, %s249
      %p251 = scmp.eq.s32.totalorder %s26, 0
      %p252 = por %p250, %p251
      %p253 = scmp.le.s32.totalorder 1, %s20
      %p254 = scmp.lt.s32.totalorder %s20, 3
      %p255 = pnand %p253, %p254
      %p256 = pneg %p255
      // Predicated region
      $region9: #{supervised_autoencoder_forward.8} parent=5 // pred_check
        _
      $region10: #{supervised_autoencoder_forward.8} parent=5 // pred_check_branch
        %258 = sbr.rel (%p255) target = $region12
      $region11: #{supervised_autoencoder_forward.8} parent=5 // pred_region
        %s259 = ssub.s32 %s20, 1
        // Predicated region
        $region13: #{supervised_autoencoder_forward.8} parent=11 // pred_check
          %p260 = pneg %p67
        $region14: #{supervised_autoencoder_forward.8} parent=11 // pred_check_branch
          %262 = sbr.rel (%p260) target = $region16
        $region15: #{supervised_autoencoder_forward.8} parent=11 // pred_region
          _
        $region16: #{supervised_autoencoder_forward.8} parent=11 // pred_fallthru
          _
        // Predicated region
        $region17: #{supervised_autoencoder_forward.8} parent=11 // pred_check
          %p263 = pneg %p88
        $region18: #{supervised_autoencoder_forward.8} parent=11 // pred_check_branch
          %265 = sbr.rel (%p263) target = $region20
        $region19: #{supervised_autoencoder_forward.8} parent=11 // pred_region
          _
        $region20: #{supervised_autoencoder_forward.8} parent=11 // pred_fallthru
          _
        // Predicated region
        $region21: #{supervised_autoencoder_forward.8} parent=11 // pred_check
          %p266 = pneg %p109
        $region22: #{supervised_autoencoder_forward.8} parent=11 // pred_check_branch
          %268 = sbr.rel (%p266) target = $region24
        $region23: #{supervised_autoencoder_forward.8} parent=11 // pred_region
          _
        $region24: #{supervised_autoencoder_forward.8} parent=11 // pred_fallthru
          _
        // Predicated region
        $region25: #{supervised_autoencoder_forward.8} parent=11 // pred_check
          %p269 = pneg %p130
        $region26: #{supervised_autoencoder_forward.8} parent=11 // pred_check_branch
          %271 = sbr.rel (%p269) target = $region28
        $region27: #{supervised_autoencoder_forward.8} parent=11 // pred_region
          _
        $region28: #{supervised_autoencoder_forward.8} parent=11 // pred_fallthru
          _
        // Predicated region
        $region29: #{supervised_autoencoder_forward.8} parent=11 // pred_check
          %p272 = pneg %p151
        $region30: #{supervised_autoencoder_forward.8} parent=11 // pred_check_branch
          %274 = sbr.rel (%p272) target = $region32
        $region31: #{supervised_autoencoder_forward.8} parent=11 // pred_region
          _
        $region32: #{supervised_autoencoder_forward.8} parent=11 // pred_fallthru
          _
        // Predicated region
        $region33: #{supervised_autoencoder_forward.8} parent=11 // pred_check
          %p275 = pneg %p172
        $region34: #{supervised_autoencoder_forward.8} parent=11 // pred_check_branch
          %277 = sbr.rel (%p275) target = $region36
        $region35: #{supervised_autoencoder_forward.8} parent=11 // pred_region
          _
        $region36: #{supervised_autoencoder_forward.8} parent=11 // pred_fallthru
          _
        // Predicated region
        $region37: #{supervised_autoencoder_forward.8} parent=11 // pred_check
          %p278 = pneg %p193
        $region38: #{supervised_autoencoder_forward.8} parent=11 // pred_check_branch
          %280 = sbr.rel (%p278) target = $region40
        $region39: #{supervised_autoencoder_forward.8} parent=11 // pred_region
          _
        $region40: #{supervised_autoencoder_forward.8} parent=11 // pred_fallthru
          _
      $region12: #{supervised_autoencoder_forward.8} parent=5 // pred_fallthru
        _
      %p281 = scmp.lt.s32.totalorder %s20, 2
      // Predicated region
      $region41: #{supervised_autoencoder_forward.8} parent=5 // pred_check
        %p282 = pneg %p281
      $region42: #{supervised_autoencoder_forward.8} parent=5 // pred_check_branch
        %284 = sbr.rel (%p282) target = $region44
      $region43: #{supervised_autoencoder_forward.8} parent=5 // pred_region
        // Predicated region
        $region45: #{supervised_autoencoder_forward.8} parent=43 // pred_check
          %p285 = pneg %p40
        $region46: #{supervised_autoencoder_forward.8} parent=43 // pred_check_branch
          %287 = sbr.rel (%p285) target = $region48
        $region47: #{supervised_autoencoder_forward.8} parent=43 // pred_region
          %p288 = scmp.lt.s32.totalorder %s20, 1
          %s289 = scalar_select %p288, %s20, 1
          %s290 = smul.addr %s289, 3
          %s291 = smul.addr %s290, 2
          %s292 = scalar_lea.vmem %s0, %s291
        $region48: #{supervised_autoencoder_forward.8} parent=43 // pred_fallthru
          _
      $region44: #{supervised_autoencoder_forward.8} parent=5 // pred_fallthru
        _
      %p293 = scmp.le.s32.totalorder 1, %s20
      %p294 = scmp.lt.s32.totalorder %s20, 3
      %p295 = pnand %p293, %p294
      %p296 = pneg %p295
      // Predicated region
      $region49: #{supervised_autoencoder_forward.8} parent=5 // pred_check
        _
      $region50: #{supervised_autoencoder_forward.8} parent=5 // pred_check_branch
        %298 = sbr.rel (%p295) target = $region52
      $region51: #{supervised_autoencoder_forward.8} parent=5 // pred_region
        %s299 = ssub.s32 %s20, 1
        %p300 = scmp.lt.s32.totalorder %s25, 1
        %s301 = scalar_select %p300, %s25, 1
        %s302 = smul.addr %s301, 3
        %s303 = smul.addr %s302, 2
        %s304 = scalar_lea.vmem %s0, %s303
        %p305 = pneg %p46
        %p306 = pneg %p43
        %p307 = pneg %p67
        %p308 = pneg %p64
        %p309 = pneg %p88
        %p310 = pneg %p85
        %p311 = pneg %p109
        %p312 = pneg %p106
        %p313 = pneg %p130
        %p314 = pneg %p127
        %p315 = pneg %p151
        %p316 = pneg %p148
        %p317 = pneg %p172
        %p318 = pneg %p169
        %p319 = pneg %p193
        %p320 = pneg %p190
        %p321 = pneg %p219
        %p322 = pneg %p216
        %p323 = scmp.lt.s32.totalorder %s25, 1
        %s324 = scalar_select %p323, %s25, 1
        %s325 = smul.addr %s324, 2
        %s326 = scalar_lea.vmem %s8, %s325
        %p327 = pneg %p245
        %p328 = pneg %p242
        %s329 = sand.u32 %s232, 1
        %s330 = scalar_lea.sflag [#allocation4], %s329
        %s331 = sand.u32 %s232, 1
        %s332 = scalar_lea.vmem [#allocation3], %s331
        %p333 = scmp.lt.s32.totalorder %s25, 1
        %s334 = scalar_select %p333, %s25, 1
        %s335 = smul.addr %s334, 3
        %s336 = smul.addr %s335, 2
        %s337 = scalar_lea.vmem %s0, %s336
        %p338 = scmp.lt.s32.totalorder %s25, 1
        %s339 = scalar_select %p338, %s25, 1
        %s340 = smul.addr %s339, 2
        %s341 = scalar_lea.vmem %s8, %s340
        %v343 = vld [vmem:[%s337] sm:$0x3f]
        %v344 = vld [vmem:[%s1] sm:$0xf]
        %v345 = vld [vmem:[%s1 + $0x4] sm:$0xf]
        %v346 = vld [vmem:[%s1 + $0x8] sm:$0xf]
        %v347 = vld [vmem:[%s1 + $0xc] sm:$0xf]
        %v348 = vld [vmem:[%s1 + $0x10] sm:$0xf]
        %v349 = vld [vmem:[%s1 + $0x14] sm:$0xf]
        %v350 = vld [vmem:[%s1 + $0x18] sm:$0xf]
        %v351 = vld [vmem:[%s1 + $0x1c] sm:$0xf]
        %v352 = vld [vmem:[%s1 + $0x20] sm:$0xf]
        %v353 = vld [vmem:[%s1 + $0x24] sm:$0xf]
        %v354 = vld [vmem:[%s1 + $0x28] sm:$0xf]
        %v355 = vld [vmem:[%s1 + $0x2c] sm:$0xf]
        %v356 = vld [vmem:[%s1 + $0x30] sm:$0xf]
        %v357 = vld [vmem:[%s1 + $0x34] sm:$0xf]
        %v358 = vld [vmem:[%s1 + $0x38] sm:$0xf]
        %v359 = vld [vmem:[%s1 + $0x3c] sm:$0xf]
        %v360 = vld [vmem:[%s1 + $0x40] sm:$0xf]
        %v361 = vld [vmem:[%s1 + $0x44] sm:$0xf]
        %v362 = vld [vmem:[%s1 + $0x48] sm:$0xf]
        %v363 = vld [vmem:[%s1 + $0x4c] sm:$0xf]
        %v364 = vld [vmem:[%s1 + $0x50] sm:$0xf]
        %v365 = vld [vmem:[%s1 + $0x54] sm:$0xf]
        %v366 = vld [vmem:[%s1 + $0x58] sm:$0xf]
        %v367 = vld [vmem:[%s1 + $0x5c] sm:$0xf]
        %v368 = vld [vmem:[%s1 + $0x60] sm:$0xf]
        %v369 = vld [vmem:[%s1 + $0x64] sm:$0xf]
        %v370 = vld [vmem:[%s1 + $0x68] sm:$0xf]
        %v371 = vld [vmem:[%s1 + $0x6c] sm:$0xf]
        %v372 = vld [vmem:[%s1 + $0x70] sm:$0xf]
        %v373 = vld [vmem:[%s1 + $0x74] sm:$0xf]
        %v374 = vld [vmem:[%s1 + $0x78] sm:$0xf]
        %v375 = vld [vmem:[%s1 + $0x7c] sm:$0xf]
        %v376 = vld [vmem:[%s1 + $0x80] sm:$0xf]
        %v377 = vld [vmem:[%s1 + $0x84] sm:$0xf]
        %v378 = vld [vmem:[%s1 + $0x88] sm:$0xf]
        %v379 = vld [vmem:[%s1 + $0x8c] sm:$0xf]
        %v380 = vld [vmem:[%s2] sm:$0x1]
        %v382 = vperm.slane %v380, 0
        %385 = vst [vmem:[#allocation1] ss:$4 sm:$0xff] %v343
        %v386 = vld.sshfl [vmem:[#allocation1] sm:$0xff pattern:$0x73625140]
        %v387 = vld.sshfl [vmem:[#allocation1 + $0x8] sm:$0xff pattern:$0x73625140]
        %v388 = vld.sshfl [vmem:[#allocation1 + $0x10] sm:$0xff pattern:$0x73625140]
        %v427 = vunpack.c.l.b16 %v344
        %v428 = vunpack.c.l.b16 %v345
        %v429 = vunpack.c.l.b16 %v346
        %v430 = vunpack.c.l.b16 %v347
        %v431 = vunpack.c.l.b16 %v348
        %v432 = vunpack.c.l.b16 %v349
        %v433 = vunpack.c.l.b16 %v350
        %v434 = vunpack.c.l.b16 %v351
        %v435 = vunpack.c.l.b16 %v352
        %v436 = vunpack.c.l.b16 %v353
        %v437 = vunpack.c.l.b16 %v354
        %v438 = vunpack.c.l.b16 %v355
        %v439 = vunpack.c.l.b16 %v356
        %v440 = vunpack.c.l.b16 %v357
        %v441 = vunpack.c.l.b16 %v358
        %v442 = vunpack.c.l.b16 %v359
        %v443 = vunpack.c.l.b16 %v360
        %v444 = vunpack.c.l.b16 %v361
        %v445 = vunpack.c.l.b16 %v362
        %v446 = vunpack.c.l.b16 %v363
        %v447 = vunpack.c.l.b16 %v364
        %v448 = vunpack.c.l.b16 %v365
        %v449 = vunpack.c.l.b16 %v366
        %v450 = vunpack.c.l.b16 %v367
        %v451 = vunpack.c.l.b16 %v368
        %v452 = vunpack.c.l.b16 %v369
        %v453 = vunpack.c.l.b16 %v370
        %v454 = vunpack.c.l.b16 %v371
        %v455 = vunpack.c.l.b16 %v372
        %v456 = vunpack.c.l.b16 %v373
        %v457 = vunpack.c.l.b16 %v374
        %v458 = vunpack.c.l.b16 %v375
        %v459 = vunpack.c.l.b16 %v376
        %v460 = vunpack.c.l.b16 %v377
        %v461 = vunpack.c.l.b16 %v378
        %v462 = vunpack.c.l.b16 %v379
        %v463 = vpack.c.b16 %v428, %v427
        %v464 = vpack.c.b16 %v430, %v429
        %v465 = vpack.c.b16 %v432, %v431
        %v466 = vpack.c.b16 %v434, %v433
        %v467 = vpack.c.b16 %v436, %v435
        %v468 = vpack.c.b16 %v438, %v437
        %v469 = vpack.c.b16 %v440, %v439
        %v470 = vpack.c.b16 %v442, %v441
        %v471 = vpack.c.b16 %v444, %v443
        %v472 = vpack.c.b16 %v446, %v445
        %v473 = vpack.c.b16 %v448, %v447
        %v474 = vpack.c.b16 %v450, %v449
        %v475 = vpack.c.b16 %v452, %v451
        %v476 = vpack.c.b16 %v454, %v453
        %v477 = vpack.c.b16 %v456, %v455
        %v478 = vpack.c.b16 %v458, %v457
        %v479 = vpack.c.b16 %v460, %v459
        %v480 = vpack.c.b16 %v462, %v461
        %vm499 = vcmask 261120
        %v500 = vsel %vm499, %v388, 0
        %502 = vmatpush.bf16.msra.mxu0 %v470
        %503 = vmatpush.bf16.msra.mxu0 %v469
        %504 = vmatpush.bf16.msra.mxu0 %v468
        %505 = vmatpush.bf16.msra.mxu0 %v467
        %506 = vmatpush.bf16.msra.mxu0 %v466
        %507 = vmatpush.bf16.msra.mxu0 %v465
        %508 = vmatpush.bf16.msra.mxu0 %v464
        %509 = vmatpush.bf16.msra.mxu0 %v463
        %510 = vmatmul.bf16.gmra.mxu0 %v386
        %v511 = vpop.f32.mrf.mxu0
        %v512 = vadd.f32 %v382, %v511
        %v513 = vpop.f32.mrf.mxu0
        %514 = vdwg.mxu0
        %515 = vmatpush.bf16.msra.mxu0 %v478
        %516 = vmatpush.bf16.msra.mxu0 %v477
        %517 = vmatpush.bf16.msra.mxu0 %v476
        %518 = vmatpush.bf16.msra.mxu0 %v475
        %519 = vmatpush.bf16.msra.mxu0 %v474
        %520 = vmatpush.bf16.msra.mxu0 %v473
        %521 = vmatpush.bf16.msra.mxu0 %v472
        %522 = vmatpush.bf16.msra.mxu0 %v471
        %523 = vmatmul.bf16.gmra.mxu0 %v387
        %v524 = vpop.f32.mrf.mxu0
        %v525 = vadd.f32 %v512, %v524
        %v526 = vpop.f32.mrf.mxu0
        %527 = vdwg.mxu0
        %528 = vmatpush.bf16.msra.mxu0 0
        %529 = vmatpush.bf16.msra.mxu0 0
        %530 = vmatpush.bf16.msra.mxu0 0
        %531 = vmatpush.bf16.msra.mxu0 0
        %532 = vmatpush.bf16.msra.mxu0 0
        %533 = vmatpush.bf16.msra.mxu0 0
        %534 = vmatpush.bf16.msra.mxu0 %v480
        %535 = vmatpush.bf16.msra.mxu0 %v479
        %536 = vmatmul.bf16.gmra.mxu0 %v500
        %v537 = vpop.f32.mrf.mxu0
        %v538 = vadd.f32 %v525, %v537
        %v539 = vpop.f32.mrf.mxu0
        %540 = vdwg.mxu0
        %vm541 = vcmask 519168
        %v542 = vsel %vm541, %v538, 0.0
        %v543 = vrot.slane %v542, 4
        %v544 = vadd.f32 %v542, %v543
        %v545 = vrot.slane %v544, 2
        %v546 = vadd.f32 %v544, %v545
        %v547 = vrot.slane %v546, 1
        %v548 = vadd.f32 %v546, %v547
        %v549 = vrcp.pop 4.0
        %v550 = vmul.f32 4.0, %v549
        %v551 = vsub.f32 1.0, %v550
        %v552 = vmul.f32 %v549, %v551
        %v553 = vadd.f32 %v549, %v552
        %vm554 = vweird.f32 %v549
        %v555 = vsel %vm554, %v549, %v553
        %v556 = vmul.f32 %v548, %v555
        %v557 = vmul.f32 %v538, %v538
        %v558 = vsel %vm541, %v557, 0.0
        %v559 = vrot.slane %v558, 4
        %v560 = vadd.f32 %v558, %v559
        %v561 = vrot.slane %v560, 2
        %v562 = vadd.f32 %v560, %v561
        %v563 = vrot.slane %v562, 1
        %v564 = vadd.f32 %v562, %v563
        %v565 = vmul.f32 %v564, %v555
        %v566 = vmul.f32 %v556, %v556
        %v567 = vsub.f32 %v565, %v566
        %v568 = vmax.f32 %v567, 0.0
        %v569 = vsub.f32 %v538, %v556
        %v570 = vadd.f32 %v568, 1e-05
        %v571 = vrsqrt.pop %v570
        %v572 = vmul.f32 %v571, %v570
        %v573 = vmul.f32 %v572, %v571
        %v574 = vmul.f32 0.5, %v573
        %v575 = vsub.f32 1.5, %v574
        %v576 = vmul.f32 %v571, %v575
        %vm577 = vweird.f32 %v570
        %vm578 = vweird.f32 %v571
        %vm579 = vmor %vm577, %vm578
        %v580 = vsel %vm579, %v571, %v576
        %v581 = vmul.f32 %v569, %v580
        %s582 = sld [smem:[#allocation2]]
        %vm583 = vcmp.gt.f32.partialorder %v581, 0.0
        %v584 = vstv %s582
        %v585 = vmul.f32 %v584, %v581
        %v586 = vsel %vm583, %v581, %v585
        %v587 = vpack.c.bf16 %v586, %v586
        %vm588 = vcmask 517120
        %589 = vst.msk [vmem:[%s341] sm:$0x3] %vm588, %v587
        %v590 = vld [vmem:[%s5] sm:$0x1]
        %v591 = vld [vmem:[%s4] sm:$0xf]
        %v592 = vld [vmem:[%s4 + $0x4] sm:$0xf]
        %v593 = vld [vmem:[%s4 + $0x8] sm:$0xf]
        %v594 = vld [vmem:[%s4 + $0xc] sm:$0xf]
        %v595 = vld [vmem:[%s4 + $0x10] sm:$0xf]
        %v596 = vld [vmem:[%s4 + $0x14] sm:$0xf]
        %v597 = vld [vmem:[%s4 + $0x18] sm:$0xf]
        %v598 = vld [vmem:[%s4 + $0x1c] sm:$0xf]
        %v607 = vunpack.c.l.b16 %v591
        %v608 = vunpack.c.l.b16 %v592
        %v609 = vunpack.c.l.b16 %v593
        %v610 = vunpack.c.l.b16 %v594
        %v611 = vunpack.c.l.b16 %v595
        %v612 = vunpack.c.l.b16 %v596
        %v613 = vunpack.c.l.b16 %v597
        %v614 = vunpack.c.l.b16 %v598
        %v615 = vpack.c.b16 %v608, %v607
        %v616 = vpack.c.b16 %v610, %v609
        %v617 = vpack.c.b16 %v612, %v611
        %v618 = vpack.c.b16 %v614, %v613
        %vm623 = vcmask 523264
        %v625 = vsel %vm623, %v587, 0
        %627 = vmatpush.bf16.msra.mxu0 0
        %628 = vmatpush.bf16.msra.mxu0 0
        %629 = vmatpush.bf16.msra.mxu0 0
        %630 = vmatpush.bf16.msra.mxu0 0
        %631 = vmatpush.bf16.msra.mxu0 %v618
        %632 = vmatpush.bf16.msra.mxu0 %v617
        %633 = vmatpush.bf16.msra.mxu0 %v616
        %634 = vmatpush.bf16.msra.mxu0 %v615
        %635 = vmatmul.bf16.gmra.mxu0 %v625
        %v636 = vpop.f32.mrf.mxu0
        %v637 = vadd.f32 0.0, %v636
        %v638 = vpop.f32.mrf.mxu0
        %639 = vdwg.mxu0
        %v640 = vadd.f32 %v590, %v637
        %s641 = scalar_lea.vmem %s4, 32
        %v642 = vld [vmem:[%s641] sm:$0xf]
        %v643 = vld [vmem:[%s641 + $0x4] sm:$0xf]
        %v644 = vld [vmem:[%s641 + $0x8] sm:$0xf]
        %v645 = vld [vmem:[%s641 + $0xc] sm:$0xf]
        %v646 = vld [vmem:[%s641 + $0x10] sm:$0xf]
        %v647 = vld [vmem:[%s641 + $0x14] sm:$0xf]
        %v648 = vld [vmem:[%s641 + $0x18] sm:$0xf]
        %v649 = vld [vmem:[%s641 + $0x1c] sm:$0xf]
        %v651 = vunpack.c.l.b16 %v587
        %v652 = vpack.c.b16 %v651, %v651
        %v654 = vshrl.u32 %v652, 16
        %v664 = vunpack.c.l.b16 %v642
        %v665 = vunpack.c.l.b16 %v643
        %v666 = vunpack.c.l.b16 %v644
        %v667 = vunpack.c.l.b16 %v645
        %v668 = vunpack.c.l.b16 %v646
        %v669 = vunpack.c.l.b16 %v647
        %v670 = vunpack.c.l.b16 %v648
        %v671 = vunpack.c.l.b16 %v649
        %v672 = vpack.c.b16 %v665, %v664
        %v673 = vpack.c.b16 %v667, %v666
        %v674 = vpack.c.b16 %v669, %v668
        %v675 = vpack.c.b16 %v671, %v670
        %v681 = vsel %vm623, %v654, 0
        %683 = vmatpush.bf16.msra.mxu0 0
        %684 = vmatpush.bf16.msra.mxu0 0
        %685 = vmatpush.bf16.msra.mxu0 0
        %686 = vmatpush.bf16.msra.mxu0 0
        %687 = vmatpush.bf16.msra.mxu0 %v675
        %688 = vmatpush.bf16.msra.mxu0 %v674
        %689 = vmatpush.bf16.msra.mxu0 %v673
        %690 = vmatpush.bf16.msra.mxu0 %v672
        %691 = vmatmul.bf16.gmra.mxu0 %v681
        %v692 = vpop.f32.mrf.mxu0
        %v693 = vadd.f32 0.0, %v692
        %v694 = vpop.f32.mrf.mxu0
        %695 = vdwg.mxu0
        %v696 = vadd.f32 %v640, %v693
        %s697 = scalar_lea.vmem %s4, 64
        %v698 = vld [vmem:[%s697] sm:$0xf]
        %v699 = vld [vmem:[%s697 + $0x4] sm:$0xf]
        %v700 = vld [vmem:[%s697 + $0x8] sm:$0xf]
        %v701 = vld [vmem:[%s697 + $0xc] sm:$0xf]
        %v702 = vld [vmem:[%s697 + $0x10] sm:$0xf]
        %v703 = vld [vmem:[%s697 + $0x14] sm:$0xf]
        %v704 = vld [vmem:[%s697 + $0x18] sm:$0xf]
        %v705 = vld [vmem:[%s697 + $0x1c] sm:$0xf]
        %v706 = vrot.slane %v652, 1
        %v715 = vunpack.c.l.b16 %v698
        %v716 = vunpack.c.l.b16 %v699
        %v717 = vunpack.c.l.b16 %v700
        %v718 = vunpack.c.l.b16 %v701
        %v719 = vunpack.c.l.b16 %v702
        %v720 = vunpack.c.l.b16 %v703
        %v721 = vunpack.c.l.b16 %v704
        %v722 = vunpack.c.l.b16 %v705
        %v723 = vpack.c.b16 %v716, %v715
        %v724 = vpack.c.b16 %v718, %v717
        %v725 = vpack.c.b16 %v720, %v719
        %v726 = vpack.c.b16 %v722, %v721
        %v732 = vsel %vm623, %v706, 0
        %734 = vmatpush.bf16.msra.mxu0 0
        %735 = vmatpush.bf16.msra.mxu0 0
        %736 = vmatpush.bf16.msra.mxu0 0
        %737 = vmatpush.bf16.msra.mxu0 0
        %738 = vmatpush.bf16.msra.mxu0 %v726
        %739 = vmatpush.bf16.msra.mxu0 %v725
        %740 = vmatpush.bf16.msra.mxu0 %v724
        %741 = vmatpush.bf16.msra.mxu0 %v723
        %742 = vmatmul.bf16.gmra.mxu0 %v732
        %v743 = vpop.f32.mrf.mxu0
        %v744 = vadd.f32 0.0, %v743
        %v745 = vpop.f32.mrf.mxu0
        %746 = vdwg.mxu0
        %v747 = vadd.f32 %v696, %v744
        %s748 = scalar_lea.vmem %s4, 96
        %v749 = vld [vmem:[%s748] sm:$0xf]
        %v750 = vld [vmem:[%s748 + $0x4] sm:$0xf]
        %v751 = vld [vmem:[%s748 + $0x8] sm:$0xf]
        %v752 = vld [vmem:[%s748 + $0xc] sm:$0xf]
        %v753 = vld [vmem:[%s748 + $0x10] sm:$0xf]
        %v754 = vld [vmem:[%s748 + $0x14] sm:$0xf]
        %v755 = vld [vmem:[%s748 + $0x18] sm:$0xf]
        %v756 = vld [vmem:[%s748 + $0x1c] sm:$0xf]
        %v757 = vrot.slane %v654, 1
        %v766 = vunpack.c.l.b16 %v749
        %v767 = vunpack.c.l.b16 %v750
        %v768 = vunpack.c.l.b16 %v751
        %v769 = vunpack.c.l.b16 %v752
        %v770 = vunpack.c.l.b16 %v753
        %v771 = vunpack.c.l.b16 %v754
        %v772 = vunpack.c.l.b16 %v755
        %v773 = vunpack.c.l.b16 %v756
        %v774 = vpack.c.b16 %v767, %v766
        %v775 = vpack.c.b16 %v769, %v768
        %v776 = vpack.c.b16 %v771, %v770
        %v777 = vpack.c.b16 %v773, %v772
        %v783 = vsel %vm623, %v757, 0
        %785 = vmatpush.bf16.msra.mxu0 0
        %786 = vmatpush.bf16.msra.mxu0 0
        %787 = vmatpush.bf16.msra.mxu0 0
        %788 = vmatpush.bf16.msra.mxu0 0
        %789 = vmatpush.bf16.msra.mxu0 %v777
        %790 = vmatpush.bf16.msra.mxu0 %v776
        %791 = vmatpush.bf16.msra.mxu0 %v775
        %792 = vmatpush.bf16.msra.mxu0 %v774
        %793 = vmatmul.bf16.gmra.mxu0 %v783
        %v794 = vpop.f32.mrf.mxu0
        %v795 = vadd.f32 0.0, %v794
        %v796 = vpop.f32.mrf.mxu0
        %797 = vdwg.mxu0
        %v798 = vadd.f32 %v747, %v795
        %v799 = vmax.f32 %v798, 0.0
        %v800 = vpack.c.bf16 %v799, %v799
        %v801 = vld [vmem:[%s6] sm:$0xf]
        %v802 = vld [vmem:[%s6 + $0x4] sm:$0xf]
        %v803 = vld [vmem:[%s6 + $0x8] sm:$0xf]
        %v804 = vld [vmem:[%s6 + $0xc] sm:$0xf]
        %v805 = vld [vmem:[%s6 + $0x10] sm:$0xf]
        %v806 = vld [vmem:[%s6 + $0x14] sm:$0xf]
        %v807 = vld [vmem:[%s6 + $0x18] sm:$0xf]
        %v808 = vld [vmem:[%s6 + $0x1c] sm:$0xf]
        %v809 = vld [vmem:[%s6 + $0x20] sm:$0xf]
        %v810 = vld [vmem:[%s6 + $0x24] sm:$0xf]
        %v811 = vld [vmem:[%s6 + $0x28] sm:$0xf]
        %v812 = vld [vmem:[%s6 + $0x2c] sm:$0xf]
        %v813 = vld [vmem:[%s6 + $0x30] sm:$0xf]
        %v814 = vld [vmem:[%s6 + $0x34] sm:$0xf]
        %v815 = vld [vmem:[%s6 + $0x38] sm:$0xf]
        %v816 = vld [vmem:[%s6 + $0x3c] sm:$0xf]
        %v817 = vld [vmem:[%s7] sm:$0x1]
        %v834 = vunpack.c.l.b16 %v801
        %v835 = vunpack.c.l.b16 %v802
        %v836 = vunpack.c.l.b16 %v803
        %v837 = vunpack.c.l.b16 %v804
        %v838 = vunpack.c.l.b16 %v805
        %v839 = vunpack.c.l.b16 %v806
        %v840 = vunpack.c.l.b16 %v807
        %v841 = vunpack.c.l.b16 %v808
        %v842 = vunpack.c.l.b16 %v809
        %v843 = vunpack.c.l.b16 %v810
        %v844 = vunpack.c.l.b16 %v811
        %v845 = vunpack.c.l.b16 %v812
        %v846 = vunpack.c.l.b16 %v813
        %v847 = vunpack.c.l.b16 %v814
        %v848 = vunpack.c.l.b16 %v815
        %v849 = vunpack.c.l.b16 %v816
        %v850 = vpack.c.b16 %v835, %v834
        %v851 = vpack.c.b16 %v837, %v836
        %v852 = vpack.c.b16 %v839, %v838
        %v853 = vpack.c.b16 %v841, %v840
        %v854 = vpack.c.b16 %v843, %v842
        %v855 = vpack.c.b16 %v845, %v844
        %v856 = vpack.c.b16 %v847, %v846
        %v857 = vpack.c.b16 %v849, %v848
        %866 = vmatpush.bf16.msra.mxu0 %v857
        %867 = vmatpush.bf16.msra.mxu0 %v856
        %868 = vmatpush.bf16.msra.mxu0 %v855
        %869 = vmatpush.bf16.msra.mxu0 %v854
        %870 = vmatpush.bf16.msra.mxu0 %v853
        %871 = vmatpush.bf16.msra.mxu0 %v852
        %872 = vmatpush.bf16.msra.mxu0 %v851
        %873 = vmatpush.bf16.msra.mxu0 %v850
        %874 = vmatmul.bf16.gmra.mxu0 %v800
        %v875 = vpop.f32.mrf.mxu0
        %v876 = vadd.f32 %v817, %v875
        %v877 = vpop.f32.mrf.mxu0
        %878 = vdwg.mxu0
        %vm879 = vcmask 8192
        %880 = vst.msk [vmem:[%s332] sm:$0x1] %vm879, %v876
        %p881 = scmp.lt.s32.totalorder %s25, 1
        %s882 = scalar_select %p881, %s25, 1
        %s883 = smul.addr %s882, 2
        %s884 = scalar_lea.vmem %s8, %s883
        %s885 = sand.u32 %s232, 1
        %s886 = scalar_lea.sflag [#allocation4], %s885
        %s887 = sand.u32 %s232, 1
        %s888 = scalar_lea.vmem [#allocation3], %s887
        // Predicated region
        $region53: #{supervised_autoencoder_forward.8} parent=51 // pred_check
          %p889 = pneg %p216
        $region54: #{supervised_autoencoder_forward.8} parent=51 // pred_check_branch
          %891 = sbr.rel (%p889) target = $region56
        $region55: #{supervised_autoencoder_forward.8} parent=51 // pred_region
          _
        $region56: #{supervised_autoencoder_forward.8} parent=51 // pred_fallthru
          _
        // Predicated region
        $region57: #{supervised_autoencoder_forward.8} parent=51 // pred_check
          %p892 = pneg %p242
        $region58: #{supervised_autoencoder_forward.8} parent=51 // pred_check_branch
          %894 = sbr.rel (%p892) target = $region60
        $region59: #{supervised_autoencoder_forward.8} parent=51 // pred_region
          %896 = vsyncadd %s886, 0
          %s897 = scalar_lea.hbm %s9, %s25
          %s899 = sshll.u32 %s888, 4
          %s900 = int_to_ptr.vmem [resolvable:$true] %s899
          %s901 = sshll.u32 %s897, 4
          %s902 = int_to_ptr.hbm [resolvable:$true] %s901
          %904 = dma.vmem_to_hbm [thread:$0]  %s900, 16, %s902, %s886
        $region60: #{supervised_autoencoder_forward.8} parent=51 // pred_fallthru
          _
      $region52: #{supervised_autoencoder_forward.8} parent=5 // pred_fallthru
        _
      %p905 = scmp.le.s32.totalorder 2, %s20
      // Predicated region
      $region61: #{supervised_autoencoder_forward.8} parent=5 // pred_check
        %p906 = pneg %p905
      $region62: #{supervised_autoencoder_forward.8} parent=5 // pred_check_branch
        %908 = sbr.rel (%p906) target = $region64
      $region63: #{supervised_autoencoder_forward.8} parent=5 // pred_region
        %s909 = ssub.s32 %s20, 2
        // Predicated region
        $region65: #{supervised_autoencoder_forward.8} parent=63 // pred_check
          %p910 = pneg %p222
        $region66: #{supervised_autoencoder_forward.8} parent=63 // pred_check_branch
          %912 = sbr.rel (%p910) target = $region68
        $region67: #{supervised_autoencoder_forward.8} parent=63 // pred_region
          %p913 = scmp.lt.s32.totalorder %s26, 1
          %s914 = scalar_select %p913, %s26, 1
          %s915 = smul.addr %s914, 2
          %s916 = scalar_lea.vmem %s8, %s915
        $region68: #{supervised_autoencoder_forward.8} parent=63 // pred_fallthru
          _
        // Predicated region
        $region69: #{supervised_autoencoder_forward.8} parent=63 // pred_check
          %p917 = pneg %p248
        $region70: #{supervised_autoencoder_forward.8} parent=63 // pred_check_branch
          %919 = sbr.rel (%p917) target = $region72
        $region71: #{supervised_autoencoder_forward.8} parent=63 // pred_region
          %s920 = sand.u32 %s233, 1
          %s921 = scalar_lea.sflag [#allocation4], %s920
          %s922 = sand.u32 %s233, 1
          %s923 = scalar_lea.vmem [#allocation3], %s922
          %925 = dma.done %s921, 16
        $region72: #{supervised_autoencoder_forward.8} parent=63 // pred_fallthru
          _
      $region64: #{supervised_autoencoder_forward.8} parent=5 // pred_fallthru
        _
    $region6: #{supervised_autoencoder_forward.8} parent=1 // loop_footer
      %s24 = sadd.s32 1, %s20
    $region7: #{supervised_autoencoder_forward.8} parent=1 // loop_footer_branch
      %19 = sbr.rel target = $region3
    $region8: #{supervised_autoencoder_forward.8} parent=1 // loop_exit
      _
    %926 = vsyncpa [#allocation4], 1
    %s927 = scalar_lea.sflag [#allocation4], 1
    %928 = vsyncpa %s927, 1

// kernel: supervised_autoencoder_forward.9
$region0: #{supervised_autoencoder_forward.9}
  #allocation0 [shape = 'u32[]', space=smem, size = 0x4, offset = 0x4, fixed_abs, tag = 'smem constant byte address 0x4 - core index']
  #allocation1 [shape = 'u32[72,128]{1,0:T(1,128)}', space=vmem, size = 0x9000, scoped, tag = 'internal scratch']
  #allocation2 [shape = 'f32[1,1]{1,0:T(1,128)S(6)}', space=smem, size = 0x200, scoped, tag = 'scoped memory for supervised_autoencoder_forward.9']
  %s0 = inlined_call_operand.vmem [shape: bf16[2,4,64], index: 0, kind: input, shape index: {}]
  %s1 = inlined_call_operand.vmem [shape: bf16[2,4,64], index: 1, kind: input, shape index: {}]
  %s2 = inlined_call_operand.vmem [shape: bf16[2,4,64], index: 2, kind: input, shape index: {}]
  %s3 = inlined_call_operand.vmem [shape: bf16[2,4,64], index: 3, kind: input, shape index: {}]
  %s4 = inlined_call_operand.vmem [shape: bf16[64,128], index: 4, kind: input, shape index: {}]
  %s5 = inlined_call_operand.vmem [shape: bf16[64,128], index: 5, kind: input, shape index: {}]
  %s6 = inlined_call_operand.vmem [shape: bf16[64,128], index: 6, kind: input, shape index: {}]
  %s7 = inlined_call_operand.vmem [shape: bf16[64,128], index: 7, kind: input, shape index: {}]
  %s8 = inlined_call_operand.vmem [shape: f32[1,128], index: 8, kind: input, shape index: {}]
  %s9 = inlined_call_operand.<no memory space> [shape: f32[1,1], index: 9, kind: input, shape index: {}]
  %s10 = inlined_call_operand.vmem [shape: bf16[2,4,128], index: 10, kind: output, shape index: {}]
  %s11 = sld [smem:[#allocation0]]
  $region73: #{supervised_autoencoder_forward.9} parent=0
    _
  %s13 = ssub.s32 1, %s11
  %s14 = scalar_select 0, %s13, %s11
  %15 = sst [smem:[#allocation2]] %s9
  loop: start=0, step=1, limit=4
  $region2: #{supervised_autoencoder_forward.9} parent=0 // loop_pre_header
    _
  $region3: #{supervised_autoencoder_forward.9} parent=0 // loop_header
    %s17 = sphi 0, %s21
    %p18 = scmp.ge.s32.totalorder %s17, 4
    %s27 = sphi 0, %s29
    %s30 = sphi 0, %s27
    %s31 = sphi 0, %s30
    %s47 = sphi 0, %s31
    %s53 = sphi 0, %s55
    %s56 = sphi 0, %s53
    %s57 = sphi 0, %s56
    %s73 = sphi 0, %s57
    %s79 = sphi 0, %s81
    %s82 = sphi 0, %s79
    %s83 = sphi 0, %s82
    %s99 = sphi 0, %s83
    %s105 = sphi 0, %s107
    %s108 = sphi 0, %s105
    %s109 = sphi 0, %s108
    %s125 = sphi 0, %s109
    %s129 = sphi 0, %s129
    %s131 = sphi 0, %s129
    %s132 = sphi 0, %s131
    %s146 = sphi 0, %s132
    %s150 = sphi 0, %s150
    %s152 = sphi 0, %s150
    %s153 = sphi 0, %s152
    %s167 = sphi 0, %s153
    %s171 = sphi 0, %s171
    %s173 = sphi 0, %s171
    %s174 = sphi 0, %s173
    %s188 = sphi 0, %s174
    %s192 = sphi 0, %s192
    %s194 = sphi 0, %s192
    %s195 = sphi 0, %s194
    %s209 = sphi 0, %s195
    %s213 = sphi 0, %s213
    %s215 = sphi 0, %s213
    %s216 = sphi 0, %s215
    %s230 = sphi 0, %s216
    %s234 = sphi 0, %s234
    %s236 = sphi 0, %s234
    %s237 = sphi 0, %s236
    %s251 = sphi 0, %s237
    %s257 = sphi 0, %s259
    %s260 = sphi 0, %s257
    %s261 = sphi 0, %s260
    %s277 = sphi 0, %s261
  $region4: #{supervised_autoencoder_forward.9} parent=0 // loop_header_branch
    %20 = sbr.rel (%p18) target = $region8
  $region5: #{supervised_autoencoder_forward.9} parent=0 // loop_body
    %s22 = ssub.s32 %s17, 1
    %s23 = ssub.s32 %s17, 2
    %s24 = sadd.s32 %s17, 1
    %s25 = ssub.s32 %s17, %s24
    %p26 = scmp.eq.s32.totalorder %s25, 0
    %s28 = sadd.s32 %s27, 1
    %s29 = scalar_select %p26, %s27, %s28
    %p32 = pneg %p26
    %p33 = scmp.eq.s32.totalorder %s17, 1
    %p34 = por %p32, %p33
    %p35 = scmp.ne.s32.totalorder %s27, %s30
    %p36 = scmp.eq.s32.totalorder %s17, 0
    %p37 = por %p35, %p36
    %p38 = scmp.ne.s32.totalorder %s27, %s30
    %p39 = scmp.eq.s32.totalorder %s22, 1
    %p40 = por %p38, %p39
    %p41 = scmp.ne.s32.totalorder %s30, %s31
    %p42 = scmp.eq.s32.totalorder %s22, 0
    %p43 = por %p41, %p42
    %p44 = scmp.ne.s32.totalorder %s30, %s31
    %p45 = scmp.eq.s32.totalorder %s23, 1
    %p46 = por %p44, %p45
    %p48 = scmp.ne.s32.totalorder %s31, %s47
    %p49 = scmp.eq.s32.totalorder %s23, 0
    %p50 = por %p48, %p49
    %s51 = ssub.s32 %s17, %s24
    %p52 = scmp.eq.s32.totalorder %s51, 0
    %s54 = sadd.s32 %s53, 1
    %s55 = scalar_select %p52, %s53, %s54
    %p58 = pneg %p52
    %p59 = scmp.eq.s32.totalorder %s17, 1
    %p60 = por %p58, %p59
    %p61 = scmp.ne.s32.totalorder %s53, %s56
    %p62 = scmp.eq.s32.totalorder %s17, 0
    %p63 = por %p61, %p62
    %p64 = scmp.ne.s32.totalorder %s53, %s56
    %p65 = scmp.eq.s32.totalorder %s22, 1
    %p66 = por %p64, %p65
    %p67 = scmp.ne.s32.totalorder %s56, %s57
    %p68 = scmp.eq.s32.totalorder %s22, 0
    %p69 = por %p67, %p68
    %p70 = scmp.ne.s32.totalorder %s56, %s57
    %p71 = scmp.eq.s32.totalorder %s23, 1
    %p72 = por %p70, %p71
    %p74 = scmp.ne.s32.totalorder %s57, %s73
    %p75 = scmp.eq.s32.totalorder %s23, 0
    %p76 = por %p74, %p75
    %s77 = ssub.s32 %s17, %s24
    %p78 = scmp.eq.s32.totalorder %s77, 0
    %s80 = sadd.s32 %s79, 1
    %s81 = scalar_select %p78, %s79, %s80
    %p84 = pneg %p78
    %p85 = scmp.eq.s32.totalorder %s17, 1
    %p86 = por %p84, %p85
    %p87 = scmp.ne.s32.totalorder %s79, %s82
    %p88 = scmp.eq.s32.totalorder %s17, 0
    %p89 = por %p87, %p88
    %p90 = scmp.ne.s32.totalorder %s79, %s82
    %p91 = scmp.eq.s32.totalorder %s22, 1
    %p92 = por %p90, %p91
    %p93 = scmp.ne.s32.totalorder %s82, %s83
    %p94 = scmp.eq.s32.totalorder %s22, 0
    %p95 = por %p93, %p94
    %p96 = scmp.ne.s32.totalorder %s82, %s83
    %p97 = scmp.eq.s32.totalorder %s23, 1
    %p98 = por %p96, %p97
    %p100 = scmp.ne.s32.totalorder %s83, %s99
    %p101 = scmp.eq.s32.totalorder %s23, 0
    %p102 = por %p100, %p101
    %s103 = ssub.s32 %s17, %s24
    %p104 = scmp.eq.s32.totalorder %s103, 0
    %s106 = sadd.s32 %s105, 1
    %s107 = scalar_select %p104, %s105, %s106
    %p110 = pneg %p104
    %p111 = scmp.eq.s32.totalorder %s17, 1
    %p112 = por %p110, %p111
    %p113 = scmp.ne.s32.totalorder %s105, %s108
    %p114 = scmp.eq.s32.totalorder %s17, 0
    %p115 = por %p113, %p114
    %p116 = scmp.ne.s32.totalorder %s105, %s108
    %p117 = scmp.eq.s32.totalorder %s22, 1
    %p118 = por %p116, %p117
    %p119 = scmp.ne.s32.totalorder %s108, %s109
    %p120 = scmp.eq.s32.totalorder %s22, 0
    %p121 = por %p119, %p120
    %p122 = scmp.ne.s32.totalorder %s108, %s109
    %p123 = scmp.eq.s32.totalorder %s23, 1
    %p124 = por %p122, %p123
    %p126 = scmp.ne.s32.totalorder %s109, %s125
    %p127 = scmp.eq.s32.totalorder %s23, 0
    %p128 = por %p126, %p127
    %s130 = sadd.s32 %s129, 1
    %p133 = scmp.eq.s32.totalorder %s17, 1
    %p134 = scmp.ne.s32.totalorder %s129, %s131
    %p135 = scmp.eq.s32.totalorder %s17, 0
    %p136 = por %p134, %p135
    %p137 = scmp.ne.s32.totalorder %s129, %s131
    %p138 = scmp.eq.s32.totalorder %s22, 1
    %p139 = por %p137, %p138
    %p140 = scmp.ne.s32.totalorder %s131, %s132
    %p141 = scmp.eq.s32.totalorder %s22, 0
    %p142 = por %p140, %p141
    %p143 = scmp.ne.s32.totalorder %s131, %s132
    %p144 = scmp.eq.s32.totalorder %s23, 1
    %p145 = por %p143, %p144
    %p147 = scmp.ne.s32.totalorder %s132, %s146
    %p148 = scmp.eq.s32.totalorder %s23, 0
    %p149 = por %p147, %p148
    %s151 = sadd.s32 %s150, 1
    %p154 = scmp.eq.s32.totalorder %s17, 1
    %p155 = scmp.ne.s32.totalorder %s150, %s152
    %p156 = scmp.eq.s32.totalorder %s17, 0
    %p157 = por %p155, %p156
    %p158 = scmp.ne.s32.totalorder %s150, %s152
    %p159 = scmp.eq.s32.totalorder %s22, 1
    %p160 = por %p158, %p159
    %p161 = scmp.ne.s32.totalorder %s152, %s153
    %p162 = scmp.eq.s32.totalorder %s22, 0
    %p163 = por %p161, %p162
    %p164 = scmp.ne.s32.totalorder %s152, %s153
    %p165 = scmp.eq.s32.totalorder %s23, 1
    %p166 = por %p164, %p165
    %p168 = scmp.ne.s32.totalorder %s153, %s167
    %p169 = scmp.eq.s32.totalorder %s23, 0
    %p170 = por %p168, %p169
    %s172 = sadd.s32 %s171, 1
    %p175 = scmp.eq.s32.totalorder %s17, 1
    %p176 = scmp.ne.s32.totalorder %s171, %s173
    %p177 = scmp.eq.s32.totalorder %s17, 0
    %p178 = por %p176, %p177
    %p179 = scmp.ne.s32.totalorder %s171, %s173
    %p180 = scmp.eq.s32.totalorder %s22, 1
    %p181 = por %p179, %p180
    %p182 = scmp.ne.s32.totalorder %s173, %s174
    %p183 = scmp.eq.s32.totalorder %s22, 0
    %p184 = por %p182, %p183
    %p185 = scmp.ne.s32.totalorder %s173, %s174
    %p186 = scmp.eq.s32.totalorder %s23, 1
    %p187 = por %p185, %p186
    %p189 = scmp.ne.s32.totalorder %s174, %s188
    %p190 = scmp.eq.s32.totalorder %s23, 0
    %p191 = por %p189, %p190
    %s193 = sadd.s32 %s192, 1
    %p196 = scmp.eq.s32.totalorder %s17, 1
    %p197 = scmp.ne.s32.totalorder %s192, %s194
    %p198 = scmp.eq.s32.totalorder %s17, 0
    %p199 = por %p197, %p198
    %p200 = scmp.ne.s32.totalorder %s192, %s194
    %p201 = scmp.eq.s32.totalorder %s22, 1
    %p202 = por %p200, %p201
    %p203 = scmp.ne.s32.totalorder %s194, %s195
    %p204 = scmp.eq.s32.totalorder %s22, 0
    %p205 = por %p203, %p204
    %p206 = scmp.ne.s32.totalorder %s194, %s195
    %p207 = scmp.eq.s32.totalorder %s23, 1
    %p208 = por %p206, %p207
    %p210 = scmp.ne.s32.totalorder %s195, %s209
    %p211 = scmp.eq.s32.totalorder %s23, 0
    %p212 = por %p210, %p211
    %s214 = sadd.s32 %s213, 1
    %p217 = scmp.eq.s32.totalorder %s17, 1
    %p218 = scmp.ne.s32.totalorder %s213, %s215
    %p219 = scmp.eq.s32.totalorder %s17, 0
    %p220 = por %p218, %p219
    %p221 = scmp.ne.s32.totalorder %s213, %s215
    %p222 = scmp.eq.s32.totalorder %s22, 1
    %p223 = por %p221, %p222
    %p224 = scmp.ne.s32.totalorder %s215, %s216
    %p225 = scmp.eq.s32.totalorder %s22, 0
    %p226 = por %p224, %p225
    %p227 = scmp.ne.s32.totalorder %s215, %s216
    %p228 = scmp.eq.s32.totalorder %s23, 1
    %p229 = por %p227, %p228
    %p231 = scmp.ne.s32.totalorder %s216, %s230
    %p232 = scmp.eq.s32.totalorder %s23, 0
    %p233 = por %p231, %p232
    %s235 = sadd.s32 %s234, 1
    %p238 = scmp.eq.s32.totalorder %s17, 1
    %p239 = scmp.ne.s32.totalorder %s234, %s236
    %p240 = scmp.eq.s32.totalorder %s17, 0
    %p241 = por %p239, %p240
    %p242 = scmp.ne.s32.totalorder %s234, %s236
    %p243 = scmp.eq.s32.totalorder %s22, 1
    %p244 = por %p242, %p243
    %p245 = scmp.ne.s32.totalorder %s236, %s237
    %p246 = scmp.eq.s32.totalorder %s22, 0
    %p247 = por %p245, %p246
    %p248 = scmp.ne.s32.totalorder %s236, %s237
    %p249 = scmp.eq.s32.totalorder %s23, 1
    %p250 = por %p248, %p249
    %p252 = scmp.ne.s32.totalorder %s237, %s251
    %p253 = scmp.eq.s32.totalorder %s23, 0
    %p254 = por %p252, %p253
    %s255 = ssub.s32 %s17, %s24
    %p256 = scmp.eq.s32.totalorder %s255, 0
    %s258 = sadd.s32 %s257, 1
    %s259 = scalar_select %p256, %s257, %s258
    %p262 = pneg %p256
    %p263 = scmp.eq.s32.totalorder %s17, 1
    %p264 = por %p262, %p263
    %p265 = scmp.ne.s32.totalorder %s257, %s260
    %p266 = scmp.eq.s32.totalorder %s17, 0
    %p267 = por %p265, %p266
    %p268 = scmp.ne.s32.totalorder %s257, %s260
    %p269 = scmp.eq.s32.totalorder %s22, 1
    %p270 = por %p268, %p269
    %p271 = scmp.ne.s32.totalorder %s260, %s261
    %p272 = scmp.eq.s32.totalorder %s22, 0
    %p273 = por %p271, %p272
    %p274 = scmp.ne.s32.totalorder %s260, %s261
    %p275 = scmp.eq.s32.totalorder %s23, 1
    %p276 = por %p274, %p275
    %p278 = scmp.ne.s32.totalorder %s261, %s277
    %p279 = scmp.eq.s32.totalorder %s23, 0
    %p280 = por %p278, %p279
    %p281 = scmp.le.s32.totalorder 1, %s17
    %p282 = scmp.lt.s32.totalorder %s17, 3
    %p283 = pnand %p281, %p282
    %p284 = pneg %p283
    // Predicated region
    $region9: #{supervised_autoencoder_forward.9} parent=5 // pred_check
      _
    $region10: #{supervised_autoencoder_forward.9} parent=5 // pred_check_branch
      %286 = sbr.rel (%p283) target = $region12
    $region11: #{supervised_autoencoder_forward.9} parent=5 // pred_region
      %s287 = ssub.s32 %s17, 1
      // Predicated region
      $region13: #{supervised_autoencoder_forward.9} parent=11 // pred_check
        %p288 = pneg %p142
      $region14: #{supervised_autoencoder_forward.9} parent=11 // pred_check_branch
        %290 = sbr.rel (%p288) target = $region16
      $region15: #{supervised_autoencoder_forward.9} parent=11 // pred_region
        _
      $region16: #{supervised_autoencoder_forward.9} parent=11 // pred_fallthru
        _
      // Predicated region
      $region17: #{supervised_autoencoder_forward.9} parent=11 // pred_check
        %p291 = pneg %p163
      $region18: #{supervised_autoencoder_forward.9} parent=11 // pred_check_branch
        %293 = sbr.rel (%p291) target = $region20
      $region19: #{supervised_autoencoder_forward.9} parent=11 // pred_region
        _
      $region20: #{supervised_autoencoder_forward.9} parent=11 // pred_fallthru
        _
      // Predicated region
      $region21: #{supervised_autoencoder_forward.9} parent=11 // pred_check
        %p294 = pneg %p184
      $region22: #{supervised_autoencoder_forward.9} parent=11 // pred_check_branch
        %296 = sbr.rel (%p294) target = $region24
      $region23: #{supervised_autoencoder_forward.9} parent=11 // pred_region
        _
      $region24: #{supervised_autoencoder_forward.9} parent=11 // pred_fallthru
        _
      // Predicated region
      $region25: #{supervised_autoencoder_forward.9} parent=11 // pred_check
        %p297 = pneg %p205
      $region26: #{supervised_autoencoder_forward.9} parent=11 // pred_check_branch
        %299 = sbr.rel (%p297) target = $region28
      $region27: #{supervised_autoencoder_forward.9} parent=11 // pred_region
        _
      $region28: #{supervised_autoencoder_forward.9} parent=11 // pred_fallthru
        _
      // Predicated region
      $region29: #{supervised_autoencoder_forward.9} parent=11 // pred_check
        %p300 = pneg %p226
      $region30: #{supervised_autoencoder_forward.9} parent=11 // pred_check_branch
        %302 = sbr.rel (%p300) target = $region32
      $region31: #{supervised_autoencoder_forward.9} parent=11 // pred_region
        _
      $region32: #{supervised_autoencoder_forward.9} parent=11 // pred_fallthru
        _
      // Predicated region
      $region33: #{supervised_autoencoder_forward.9} parent=11 // pred_check
        %p303 = pneg %p247
      $region34: #{supervised_autoencoder_forward.9} parent=11 // pred_check_branch
        %305 = sbr.rel (%p303) target = $region36
      $region35: #{supervised_autoencoder_forward.9} parent=11 // pred_region
        _
      $region36: #{supervised_autoencoder_forward.9} parent=11 // pred_fallthru
        _
    $region12: #{supervised_autoencoder_forward.9} parent=5 // pred_fallthru
      _
    %p306 = scmp.lt.s32.totalorder %s17, 2
    // Predicated region
    $region37: #{supervised_autoencoder_forward.9} parent=5 // pred_check
      %p307 = pneg %p306
    $region38: #{supervised_autoencoder_forward.9} parent=5 // pred_check_branch
      %309 = sbr.rel (%p307) target = $region40
    $region39: #{supervised_autoencoder_forward.9} parent=5 // pred_region
      // Predicated region
      $region41: #{supervised_autoencoder_forward.9} parent=39 // pred_check
        %p310 = pneg %p37
      $region42: #{supervised_autoencoder_forward.9} parent=39 // pred_check_branch
        %312 = sbr.rel (%p310) target = $region44
      $region43: #{supervised_autoencoder_forward.9} parent=39 // pred_region
        %p313 = scmp.lt.s32.totalorder %s17, 1
        %s314 = scalar_select %p313, %s17, 1
        %s315 = smul.addr %s314, 2
        %s316 = scalar_lea.vmem %s0, %s315
      $region44: #{supervised_autoencoder_forward.9} parent=39 // pred_fallthru
        _
      // Predicated region
      $region45: #{supervised_autoencoder_forward.9} parent=39 // pred_check
        %p317 = pneg %p63
      $region46: #{supervised_autoencoder_forward.9} parent=39 // pred_check_branch
        %319 = sbr.rel (%p317) target = $region48
      $region47: #{supervised_autoencoder_forward.9} parent=39 // pred_region
        %p320 = scmp.lt.s32.totalorder %s17, 1
        %s321 = scalar_select %p320, %s17, 1
        %s322 = smul.addr %s321, 2
        %s323 = scalar_lea.vmem %s1, %s322
      $region48: #{supervised_autoencoder_forward.9} parent=39 // pred_fallthru
        _
      // Predicated region
      $region49: #{supervised_autoencoder_forward.9} parent=39 // pred_check
        %p324 = pneg %p89
      $region50: #{supervised_autoencoder_forward.9} parent=39 // pred_check_branch
        %326 = sbr.rel (%p324) target = $region52
      $region51: #{supervised_autoencoder_forward.9} parent=39 // pred_region
        %p327 = scmp.lt.s32.totalorder %s17, 1
        %s328 = scalar_select %p327, %s17, 1
        %s329 = smul.addr %s328, 2
        %s330 = scalar_lea.vmem %s2, %s329
      $region52: #{supervised_autoencoder_forward.9} parent=39 // pred_fallthru
        _
      // Predicated region
      $region53: #{supervised_autoencoder_forward.9} parent=39 // pred_check
        %p331 = pneg %p115
      $region54: #{supervised_autoencoder_forward.9} parent=39 // pred_check_branch
        %333 = sbr.rel (%p331) target = $region56
      $region55: #{supervised_autoencoder_forward.9} parent=39 // pred_region
        %p334 = scmp.lt.s32.totalorder %s17, 1
        %s335 = scalar_select %p334, %s17, 1
        %s336 = smul.addr %s335, 2
        %s337 = scalar_lea.vmem %s3, %s336
      $region56: #{supervised_autoencoder_forward.9} parent=39 // pred_fallthru
        _
    $region40: #{supervised_autoencoder_forward.9} parent=5 // pred_fallthru
      _
    %p338 = scmp.le.s32.totalorder 1, %s17
    %p339 = scmp.lt.s32.totalorder %s17, 3
    %p340 = pnand %p338, %p339
    %p341 = pneg %p340
    // Predicated region
    $region57: #{supervised_autoencoder_forward.9} parent=5 // pred_check
      _
    $region58: #{supervised_autoencoder_forward.9} parent=5 // pred_check_branch
      %343 = sbr.rel (%p340) target = $region60
    $region59: #{supervised_autoencoder_forward.9} parent=5 // pred_region
      %s344 = ssub.s32 %s17, 1
      %p345 = scmp.lt.s32.totalorder %s22, 1
      %s346 = scalar_select %p345, %s22, 1
      %s347 = smul.addr %s346, 2
      %s348 = scalar_lea.vmem %s0, %s347
      %p349 = pneg %p43
      %p350 = pneg %p40
      %p351 = scmp.lt.s32.totalorder %s22, 1
      %s352 = scalar_select %p351, %s22, 1
      %s353 = smul.addr %s352, 2
      %s354 = scalar_lea.vmem %s1, %s353
      %p355 = pneg %p69
      %p356 = pneg %p66
      %p357 = scmp.lt.s32.totalorder %s22, 1
      %s358 = scalar_select %p357, %s22, 1
      %s359 = smul.addr %s358, 2
      %s360 = scalar_lea.vmem %s2, %s359
      %p361 = pneg %p95
      %p362 = pneg %p92
      %p363 = scmp.lt.s32.totalorder %s22, 1
      %s364 = scalar_select %p363, %s22, 1
      %s365 = smul.addr %s364, 2
      %s366 = scalar_lea.vmem %s3, %s365
      %p367 = pneg %p121
      %p368 = pneg %p118
      %p369 = pneg %p142
      %p370 = pneg %p139
      %p371 = pneg %p163
      %p372 = pneg %p160
      %p373 = pneg %p184
      %p374 = pneg %p181
      %p375 = pneg %p205
      %p376 = pneg %p202
      %p377 = pneg %p226
      %p378 = pneg %p223
      %p379 = pneg %p247
      %p380 = pneg %p244
      %p381 = pneg %p273
      %p382 = pneg %p270
      %p383 = scmp.lt.s32.totalorder %s22, 1
      %s384 = scalar_select %p383, %s22, 1
      %s385 = smul.addr %s384, 2
      %s386 = scalar_lea.vmem %s10, %s385
      %p387 = scmp.lt.s32.totalorder %s22, 1
      %s388 = scalar_select %p387, %s22, 1
      %s389 = smul.addr %s388, 2
      %s390 = scalar_lea.vmem %s0, %s389
      %p391 = scmp.lt.s32.totalorder %s22, 1
      %s392 = scalar_select %p391, %s22, 1
      %s393 = smul.addr %s392, 2
      %s394 = scalar_lea.vmem %s1, %s393
      %p395 = scmp.lt.s32.totalorder %s22, 1
      %s396 = scalar_select %p395, %s22, 1
      %s397 = smul.addr %s396, 2
      %s398 = scalar_lea.vmem %s2, %s397
      %p399 = scmp.lt.s32.totalorder %s22, 1
      %s400 = scalar_select %p399, %s22, 1
      %s401 = smul.addr %s400, 2
      %s402 = scalar_lea.vmem %s3, %s401
      %p403 = scmp.lt.s32.totalorder %s22, 1
      %s404 = scalar_select %p403, %s22, 1
      %s405 = smul.addr %s404, 2
      %s406 = scalar_lea.vmem %s10, %s405
      %v408 = vld [vmem:[%s390] sm:$0x3]
      %v409 = vld [vmem:[%s4] sm:$0xf]
      %v410 = vld [vmem:[%s4 + $0x4] sm:$0xf]
      %v411 = vld [vmem:[%s4 + $0x8] sm:$0xf]
      %v412 = vld [vmem:[%s4 + $0xc] sm:$0xf]
      %v413 = vld [vmem:[%s4 + $0x10] sm:$0xf]
      %v414 = vld [vmem:[%s4 + $0x14] sm:$0xf]
      %v415 = vld [vmem:[%s4 + $0x18] sm:$0xf]
      %v416 = vld [vmem:[%s4 + $0x1c] sm:$0xf]
      %v417 = vld [vmem:[%s394] sm:$0x3]
      %v418 = vld [vmem:[%s5] sm:$0xf]
      %v419 = vld [vmem:[%s5 + $0x4] sm:$0xf]
      %v420 = vld [vmem:[%s5 + $0x8] sm:$0xf]
      %v421 = vld [vmem:[%s5 + $0xc] sm:$0xf]
      %v422 = vld [vmem:[%s5 + $0x10] sm:$0xf]
      %v423 = vld [vmem:[%s5 + $0x14] sm:$0xf]
      %v424 = vld [vmem:[%s5 + $0x18] sm:$0xf]
      %v425 = vld [vmem:[%s5 + $0x1c] sm:$0xf]
      %v434 = vunpack.c.l.b16 %v418
      %v435 = vunpack.c.l.b16 %v419
      %v436 = vunpack.c.l.b16 %v420
      %v437 = vunpack.c.l.b16 %v421
      %v438 = vunpack.c.l.b16 %v422
      %v439 = vunpack.c.l.b16 %v423
      %v440 = vunpack.c.l.b16 %v424
      %v441 = vunpack.c.l.b16 %v425
      %v442 = vpack.c.b16 %v435, %v434
      %v443 = vpack.c.b16 %v437, %v436
      %v444 = vpack.c.b16 %v439, %v438
      %v445 = vpack.c.b16 %v441, %v440
      %vm450 = vcmask 523264
      %v452 = vsel %vm450, %v417, 0
      %454 = vmatpush.bf16.msra.mxu0 0
      %455 = vmatpush.bf16.msra.mxu0 0
      %456 = vmatpush.bf16.msra.mxu0 0
      %457 = vmatpush.bf16.msra.mxu0 0
      %458 = vmatpush.bf16.msra.mxu0 %v445
      %459 = vmatpush.bf16.msra.mxu0 %v444
      %460 = vmatpush.bf16.msra.mxu0 %v443
      %461 = vmatpush.bf16.msra.mxu0 %v442
      %462 = vmatmul.bf16.gmra.mxu0 %v452
      %v463 = vpop.f32.mrf.mxu0
      %v464 = vadd.f32 0.0, %v463
      %v465 = vpop.f32.mrf.mxu0
      %466 = vdwg.mxu0
      %v475 = vunpack.c.l.b16 %v409
      %v476 = vunpack.c.l.b16 %v410
      %v477 = vunpack.c.l.b16 %v411
      %v478 = vunpack.c.l.b16 %v412
      %v479 = vunpack.c.l.b16 %v413
      %v480 = vunpack.c.l.b16 %v414
      %v481 = vunpack.c.l.b16 %v415
      %v482 = vunpack.c.l.b16 %v416
      %v483 = vpack.c.b16 %v476, %v475
      %v484 = vpack.c.b16 %v478, %v477
      %v485 = vpack.c.b16 %v480, %v479
      %v486 = vpack.c.b16 %v482, %v481
      %v492 = vsel %vm450, %v408, 0
      %494 = vmatpush.bf16.msra.mxu0 0
      %495 = vmatpush.bf16.msra.mxu0 0
      %496 = vmatpush.bf16.msra.mxu0 0
      %497 = vmatpush.bf16.msra.mxu0 0
      %498 = vmatpush.bf16.msra.mxu0 %v486
      %499 = vmatpush.bf16.msra.mxu0 %v485
      %500 = vmatpush.bf16.msra.mxu0 %v484
      %501 = vmatpush.bf16.msra.mxu0 %v483
      %502 = vmatmul.bf16.gmra.mxu0 %v492
      %v503 = vpop.f32.mrf.mxu0
      %v504 = vadd.f32 %v464, %v503
      %v505 = vpop.f32.mrf.mxu0
      %506 = vdwg.mxu0
      %v507 = vld [vmem:[%s398] sm:$0x3]
      %v508 = vld [vmem:[%s6] sm:$0xf]
      %v509 = vld [vmem:[%s6 + $0x4] sm:$0xf]
      %v510 = vld [vmem:[%s6 + $0x8] sm:$0xf]
      %v511 = vld [vmem:[%s6 + $0xc] sm:$0xf]
      %v512 = vld [vmem:[%s6 + $0x10] sm:$0xf]
      %v513 = vld [vmem:[%s6 + $0x14] sm:$0xf]
      %v514 = vld [vmem:[%s6 + $0x18] sm:$0xf]
      %v515 = vld [vmem:[%s6 + $0x1c] sm:$0xf]
      %v524 = vunpack.c.l.b16 %v508
      %v525 = vunpack.c.l.b16 %v509
      %v526 = vunpack.c.l.b16 %v510
      %v527 = vunpack.c.l.b16 %v511
      %v528 = vunpack.c.l.b16 %v512
      %v529 = vunpack.c.l.b16 %v513
      %v530 = vunpack.c.l.b16 %v514
      %v531 = vunpack.c.l.b16 %v515
      %v532 = vpack.c.b16 %v525, %v524
      %v533 = vpack.c.b16 %v527, %v526
      %v534 = vpack.c.b16 %v529, %v528
      %v535 = vpack.c.b16 %v531, %v530
      %v541 = vsel %vm450, %v507, 0
      %543 = vmatpush.bf16.msra.mxu0 0
      %544 = vmatpush.bf16.msra.mxu0 0
      %545 = vmatpush.bf16.msra.mxu0 0
      %546 = vmatpush.bf16.msra.mxu0 0
      %547 = vmatpush.bf16.msra.mxu0 %v535
      %548 = vmatpush.bf16.msra.mxu0 %v534
      %549 = vmatpush.bf16.msra.mxu0 %v533
      %550 = vmatpush.bf16.msra.mxu0 %v532
      %551 = vmatmul.bf16.gmra.mxu0 %v541
      %v552 = vpop.f32.mrf.mxu0
      %v553 = vadd.f32 0.0, %v552
      %v554 = vpop.f32.mrf.mxu0
      %555 = vdwg.mxu0
      %v556 = vadd.f32 %v504, %v553
      %v557 = vld [vmem:[%s402] sm:$0x3]
      %v558 = vld [vmem:[%s7] sm:$0xf]
      %v559 = vld [vmem:[%s7 + $0x4] sm:$0xf]
      %v560 = vld [vmem:[%s7 + $0x8] sm:$0xf]
      %v561 = vld [vmem:[%s7 + $0xc] sm:$0xf]
      %v562 = vld [vmem:[%s7 + $0x10] sm:$0xf]
      %v563 = vld [vmem:[%s7 + $0x14] sm:$0xf]
      %v564 = vld [vmem:[%s7 + $0x18] sm:$0xf]
      %v565 = vld [vmem:[%s7 + $0x1c] sm:$0xf]
      %v574 = vunpack.c.l.b16 %v558
      %v575 = vunpack.c.l.b16 %v559
      %v576 = vunpack.c.l.b16 %v560
      %v577 = vunpack.c.l.b16 %v561
      %v578 = vunpack.c.l.b16 %v562
      %v579 = vunpack.c.l.b16 %v563
      %v580 = vunpack.c.l.b16 %v564
      %v581 = vunpack.c.l.b16 %v565
      %v582 = vpack.c.b16 %v575, %v574
      %v583 = vpack.c.b16 %v577, %v576
      %v584 = vpack.c.b16 %v579, %v578
      %v585 = vpack.c.b16 %v581, %v580
      %v591 = vsel %vm450, %v557, 0
      %593 = vmatpush.bf16.msra.mxu0 0
      %594 = vmatpush.bf16.msra.mxu0 0
      %595 = vmatpush.bf16.msra.mxu0 0
      %596 = vmatpush.bf16.msra.mxu0 0
      %597 = vmatpush.bf16.msra.mxu0 %v585
      %598 = vmatpush.bf16.msra.mxu0 %v584
      %599 = vmatpush.bf16.msra.mxu0 %v583
      %600 = vmatpush.bf16.msra.mxu0 %v582
      %601 = vmatmul.bf16.gmra.mxu0 %v591
      %v602 = vpop.f32.mrf.mxu0
      %v603 = vadd.f32 0.0, %v602
      %v604 = vpop.f32.mrf.mxu0
      %605 = vdwg.mxu0
      %v606 = vadd.f32 %v556, %v603
      %v607 = vld [vmem:[%s8] sm:$0x1]
      %v609 = vperm.slane %v607, 0
      %v611 = vadd.f32 %v606, %v609
      %vm612 = vcmask 1043456
      %v613 = vsel %vm612, %v611, 0.0
      %v614 = vrot.slane %v613, 4
      %v615 = vadd.f32 %v613, %v614
      %v616 = vrot.slane %v615, 2
      %v617 = vadd.f32 %v615, %v616
      %v618 = vrot.slane %v617, 1
      %v619 = vadd.f32 %v617, %v618
      %v620 = vmul.f32 %v611, %v611
      %v621 = vsel %vm612, %v620, 0.0
      %v622 = vrot.slane %v621, 4
      %v623 = vadd.f32 %v621, %v622
      %v624 = vrot.slane %v623, 2
      %v625 = vadd.f32 %v623, %v624
      %v626 = vrot.slane %v625, 1
      %v627 = vadd.f32 %v625, %v626
      %629 = vrot.lane.b32.xlu0 %v619, 96
      %v630 = vpop.permute.xlu0 %629
      %v632 = vadd.f32 %v619, %v630
      %633 = vrot.lane.b32.xlu0 %v619, 64
      %v634 = vpop.permute.xlu0 %633
      %v636 = vadd.f32 %v632, %v634
      %637 = vrot.lane.b32.xlu0 %v619, 32
      %v638 = vpop.permute.xlu0 %637
      %v640 = vadd.f32 %v636, %v638
      %v641 = vrcp.pop 16.0
      %v642 = vmul.f32 16.0, %v641
      %v643 = vsub.f32 1.0, %v642
      %v644 = vmul.f32 %v641, %v643
      %v645 = vadd.f32 %v641, %v644
      %vm646 = vweird.f32 %v641
      %v647 = vsel %vm646, %v641, %v645
      %v648 = vmul.f32 %v640, %v647
      %650 = vrot.lane.b32.xlu0 %v627, 96
      %v651 = vpop.permute.xlu0 %650
      %v653 = vadd.f32 %v627, %v651
      %654 = vrot.lane.b32.xlu0 %v627, 64
      %v655 = vpop.permute.xlu0 %654
      %v657 = vadd.f32 %v653, %v655
      %658 = vrot.lane.b32.xlu0 %v627, 32
      %v659 = vpop.permute.xlu0 %658
      %v661 = vadd.f32 %v657, %v659
      %v662 = vmul.f32 %v661, %v647
      %v663 = vmul.f32 %v648, %v648
      %v664 = vsub.f32 %v662, %v663
      %v665 = vmax.f32 %v664, 0.0
      %v666 = vadd.f32 %v665, 1e-05
      %v667 = vrsqrt.pop %v666
      %v668 = vmul.f32 %v667, %v666
      %v669 = vmul.f32 %v668, %v667
      %v670 = vmul.f32 0.5, %v669
      %v671 = vsub.f32 1.5, %v670
      %v672 = vmul.f32 %v667, %v671
      %vm673 = vweird.f32 %v666
      %vm674 = vweird.f32 %v667
      %vm675 = vmor %vm673, %vm674
      %v676 = vsel %vm675, %v667, %v672
      %678 = vrot.lane.b32.xlu0 %v648, 32
      %v679 = vpop.permute.xlu0 %678
      %681 = vrot.lane.b32.xlu0 %v648, 64
      %v682 = vpop.permute.xlu0 %681
      %684 = vrot.lane.b32.xlu0 %v648, 96
      %v685 = vpop.permute.xlu0 %684
      %vm687 = vcmask 261120
      %v688 = vsel %vm687, %v648, %v679
      %v689 = vsel %vm450, %v688, %v682
      %vm690 = vcmask 785408
      %v691 = vsel %vm690, %v689, %v685
      %v692 = vperm.slane %v691, 0
      %v693 = vsub.f32 %v611, %v692
      %695 = vrot.lane.b32.xlu0 %v676, 32
      %v696 = vpop.permute.xlu0 %695
      %698 = vrot.lane.b32.xlu0 %v676, 64
      %v699 = vpop.permute.xlu0 %698
      %701 = vrot.lane.b32.xlu0 %v676, 96
      %v702 = vpop.permute.xlu0 %701
      %v704 = vsel %vm687, %v676, %v696
      %v705 = vsel %vm450, %v704, %v699
      %v706 = vsel %vm690, %v705, %v702
      %v707 = vperm.slane %v706, 0
      %v708 = vmul.f32 %v693, %v707
      %s709 = sld [smem:[#allocation2]]
      %vm710 = vcmp.gt.f32.partialorder %v708, 0.0
      %v711 = vstv %s709
      %v712 = vmul.f32 %v711, %v708
      %v713 = vsel %vm710, %v708, %v712
      %v714 = vpack.c.bf16 %v713, %v713
      %715 = vst [vmem:[%s406] sm:$0x3] %v714
      %p716 = scmp.lt.s32.totalorder %s22, 1
      %s717 = scalar_select %p716, %s22, 1
      %s718 = smul.addr %s717, 2
      %s719 = scalar_lea.vmem %s10, %s718
      // Predicated region
      $region61: #{supervised_autoencoder_forward.9} parent=59 // pred_check
        %p720 = pneg %p270
      $region62: #{supervised_autoencoder_forward.9} parent=59 // pred_check_branch
        %722 = sbr.rel (%p720) target = $region64
      $region63: #{supervised_autoencoder_forward.9} parent=59 // pred_region
        _
      $region64: #{supervised_autoencoder_forward.9} parent=59 // pred_fallthru
        _
    $region60: #{supervised_autoencoder_forward.9} parent=5 // pred_fallthru
      _
    %p723 = scmp.le.s32.totalorder 2, %s17
    // Predicated region
    $region65: #{supervised_autoencoder_forward.9} parent=5 // pred_check
      %p724 = pneg %p723
    $region66: #{supervised_autoencoder_forward.9} parent=5 // pred_check_branch
      %726 = sbr.rel (%p724) target = $region68
    $region67: #{supervised_autoencoder_forward.9} parent=5 // pred_region
      %s727 = ssub.s32 %s17, 2
      // Predicated region
      $region69: #{supervised_autoencoder_forward.9} parent=67 // pred_check
        %p728 = pneg %p276
      $region70: #{supervised_autoencoder_forward.9} parent=67 // pred_check_branch
        %730 = sbr.rel (%p728) target = $region72
      $region71: #{supervised_autoencoder_forward.9} parent=67 // pred_region
        %p731 = scmp.lt.s32.totalorder %s23, 1
        %s732 = scalar_select %p731, %s23, 1
        %s733 = smul.addr %s732, 2
        %s734 = scalar_lea.vmem %s10, %s733
      $region72: #{supervised_autoencoder_forward.9} parent=67 // pred_fallthru
        _
    $region68: #{supervised_autoencoder_forward.9} parent=5 // pred_fallthru
      _
  $region6: #{supervised_autoencoder_forward.9} parent=0 // loop_footer
    %s21 = sadd.s32 1, %s17
  $region7: #{supervised_autoencoder_forward.9} parent=0 // loop_footer_branch
    %16 = sbr.rel target = $region3
  $region8: #{supervised_autoencoder_forward.9} parent=0 // loop_exit
    _

// kernel: supervised_autoencoder_forward.10
$region0: #{supervised_autoencoder_forward.10}
  #allocation0 [shape = 'u32[]', space=smem, size = 0x4, offset = 0x4, fixed_abs, tag = 'smem constant byte address 0x4 - core index']
  #allocation1 [shape = 'u32[72,128]{1,0:T(1,128)}', space=vmem, size = 0x9000, scoped, tag = 'internal scratch']
  #allocation2 [shape = 'f32[1,1]{1,0:T(1,128)S(6)}', space=smem, size = 0x200, scoped, tag = 'scoped memory for supervised_autoencoder_forward.10']
  %s0 = inlined_call_operand.vmem [shape: bf16[2,16,32], index: 0, kind: input, shape index: {}]
  %s1 = inlined_call_operand.vmem [shape: bf16[2,16,32], index: 1, kind: input, shape index: {}]
  %s2 = inlined_call_operand.vmem [shape: bf16[2,16,32], index: 2, kind: input, shape index: {}]
  %s3 = inlined_call_operand.vmem [shape: bf16[2,16,32], index: 3, kind: input, shape index: {}]
  %s4 = inlined_call_operand.vmem [shape: bf16[32,64], index: 4, kind: input, shape index: {}]
  %s5 = inlined_call_operand.vmem [shape: bf16[32,64], index: 5, kind: input, shape index: {}]
  %s6 = inlined_call_operand.vmem [shape: bf16[32,64], index: 6, kind: input, shape index: {}]
  %s7 = inlined_call_operand.vmem [shape: bf16[32,64], index: 7, kind: input, shape index: {}]
  %s8 = inlined_call_operand.vmem [shape: f32[1,64], index: 8, kind: input, shape index: {}]
  %s9 = inlined_call_operand.<no memory space> [shape: f32[1,1], index: 9, kind: input, shape index: {}]
  %s10 = inlined_call_operand.vmem [shape: bf16[2,16,64], index: 10, kind: output, shape index: {}]
  %s11 = sld [smem:[#allocation0]]
  $region73: #{supervised_autoencoder_forward.10} parent=0
    _
  %s13 = ssub.s32 1, %s11
  %s14 = scalar_select 0, %s13, %s11
  %15 = sst [smem:[#allocation2]] %s9
  loop: start=0, step=1, limit=4
  $region2: #{supervised_autoencoder_forward.10} parent=0 // loop_pre_header
    _
  $region3: #{supervised_autoencoder_forward.10} parent=0 // loop_header
    %s17 = sphi 0, %s21
    %p18 = scmp.ge.s32.totalorder %s17, 4
    %s27 = sphi 0, %s29
    %s30 = sphi 0, %s27
    %s31 = sphi 0, %s30
    %s47 = sphi 0, %s31
    %s53 = sphi 0, %s55
    %s56 = sphi 0, %s53
    %s57 = sphi 0, %s56
    %s73 = sphi 0, %s57
    %s79 = sphi 0, %s81
    %s82 = sphi 0, %s79
    %s83 = sphi 0, %s82
    %s99 = sphi 0, %s83
    %s105 = sphi 0, %s107
    %s108 = sphi 0, %s105
    %s109 = sphi 0, %s108
    %s125 = sphi 0, %s109
    %s129 = sphi 0, %s129
    %s131 = sphi 0, %s129
    %s132 = sphi 0, %s131
    %s146 = sphi 0, %s132
    %s150 = sphi 0, %s150
    %s152 = sphi 0, %s150
    %s153 = sphi 0, %s152
    %s167 = sphi 0, %s153
    %s171 = sphi 0, %s171
    %s173 = sphi 0, %s171
    %s174 = sphi 0, %s173
    %s188 = sphi 0, %s174
    %s192 = sphi 0, %s192
    %s194 = sphi 0, %s192
    %s195 = sphi 0, %s194
    %s209 = sphi 0, %s195
    %s213 = sphi 0, %s213
    %s215 = sphi 0, %s213
    %s216 = sphi 0, %s215
    %s230 = sphi 0, %s216
    %s234 = sphi 0, %s234
    %s236 = sphi 0, %s234
    %s237 = sphi 0, %s236
    %s251 = sphi 0, %s237
    %s257 = sphi 0, %s259
    %s260 = sphi 0, %s257
    %s261 = sphi 0, %s260
    %s277 = sphi 0, %s261
  $region4: #{supervised_autoencoder_forward.10} parent=0 // loop_header_branch
    %20 = sbr.rel (%p18) target = $region8
  $region5: #{supervised_autoencoder_forward.10} parent=0 // loop_body
    %s22 = ssub.s32 %s17, 1
    %s23 = ssub.s32 %s17, 2
    %s24 = sadd.s32 %s17, 1
    %s25 = ssub.s32 %s17, %s24
    %p26 = scmp.eq.s32.totalorder %s25, 0
    %s28 = sadd.s32 %s27, 1
    %s29 = scalar_select %p26, %s27, %s28
    %p32 = pneg %p26
    %p33 = scmp.eq.s32.totalorder %s17, 1
    %p34 = por %p32, %p33
    %p35 = scmp.ne.s32.totalorder %s27, %s30
    %p36 = scmp.eq.s32.totalorder %s17, 0
    %p37 = por %p35, %p36
    %p38 = scmp.ne.s32.totalorder %s27, %s30
    %p39 = scmp.eq.s32.totalorder %s22, 1
    %p40 = por %p38, %p39
    %p41 = scmp.ne.s32.totalorder %s30, %s31
    %p42 = scmp.eq.s32.totalorder %s22, 0
    %p43 = por %p41, %p42
    %p44 = scmp.ne.s32.totalorder %s30, %s31
    %p45 = scmp.eq.s32.totalorder %s23, 1
    %p46 = por %p44, %p45
    %p48 = scmp.ne.s32.totalorder %s31, %s47
    %p49 = scmp.eq.s32.totalorder %s23, 0
    %p50 = por %p48, %p49
    %s51 = ssub.s32 %s17, %s24
    %p52 = scmp.eq.s32.totalorder %s51, 0
    %s54 = sadd.s32 %s53, 1
    %s55 = scalar_select %p52, %s53, %s54
    %p58 = pneg %p52
    %p59 = scmp.eq.s32.totalorder %s17, 1
    %p60 = por %p58, %p59
    %p61 = scmp.ne.s32.totalorder %s53, %s56
    %p62 = scmp.eq.s32.totalorder %s17, 0
    %p63 = por %p61, %p62
    %p64 = scmp.ne.s32.totalorder %s53, %s56
    %p65 = scmp.eq.s32.totalorder %s22, 1
    %p66 = por %p64, %p65
    %p67 = scmp.ne.s32.totalorder %s56, %s57
    %p68 = scmp.eq.s32.totalorder %s22, 0
    %p69 = por %p67, %p68
    %p70 = scmp.ne.s32.totalorder %s56, %s57
    %p71 = scmp.eq.s32.totalorder %s23, 1
    %p72 = por %p70, %p71
    %p74 = scmp.ne.s32.totalorder %s57, %s73
    %p75 = scmp.eq.s32.totalorder %s23, 0
    %p76 = por %p74, %p75
    %s77 = ssub.s32 %s17, %s24
    %p78 = scmp.eq.s32.totalorder %s77, 0
    %s80 = sadd.s32 %s79, 1
    %s81 = scalar_select %p78, %s79, %s80
    %p84 = pneg %p78
    %p85 = scmp.eq.s32.totalorder %s17, 1
    %p86 = por %p84, %p85
    %p87 = scmp.ne.s32.totalorder %s79, %s82
    %p88 = scmp.eq.s32.totalorder %s17, 0
    %p89 = por %p87, %p88
    %p90 = scmp.ne.s32.totalorder %s79, %s82
    %p91 = scmp.eq.s32.totalorder %s22, 1
    %p92 = por %p90, %p91
    %p93 = scmp.ne.s32.totalorder %s82, %s83
    %p94 = scmp.eq.s32.totalorder %s22, 0
    %p95 = por %p93, %p94
    %p96 = scmp.ne.s32.totalorder %s82, %s83
    %p97 = scmp.eq.s32.totalorder %s23, 1
    %p98 = por %p96, %p97
    %p100 = scmp.ne.s32.totalorder %s83, %s99
    %p101 = scmp.eq.s32.totalorder %s23, 0
    %p102 = por %p100, %p101
    %s103 = ssub.s32 %s17, %s24
    %p104 = scmp.eq.s32.totalorder %s103, 0
    %s106 = sadd.s32 %s105, 1
    %s107 = scalar_select %p104, %s105, %s106
    %p110 = pneg %p104
    %p111 = scmp.eq.s32.totalorder %s17, 1
    %p112 = por %p110, %p111
    %p113 = scmp.ne.s32.totalorder %s105, %s108
    %p114 = scmp.eq.s32.totalorder %s17, 0
    %p115 = por %p113, %p114
    %p116 = scmp.ne.s32.totalorder %s105, %s108
    %p117 = scmp.eq.s32.totalorder %s22, 1
    %p118 = por %p116, %p117
    %p119 = scmp.ne.s32.totalorder %s108, %s109
    %p120 = scmp.eq.s32.totalorder %s22, 0
    %p121 = por %p119, %p120
    %p122 = scmp.ne.s32.totalorder %s108, %s109
    %p123 = scmp.eq.s32.totalorder %s23, 1
    %p124 = por %p122, %p123
    %p126 = scmp.ne.s32.totalorder %s109, %s125
    %p127 = scmp.eq.s32.totalorder %s23, 0
    %p128 = por %p126, %p127
    %s130 = sadd.s32 %s129, 1
    %p133 = scmp.eq.s32.totalorder %s17, 1
    %p134 = scmp.ne.s32.totalorder %s129, %s131
    %p135 = scmp.eq.s32.totalorder %s17, 0
    %p136 = por %p134, %p135
    %p137 = scmp.ne.s32.totalorder %s129, %s131
    %p138 = scmp.eq.s32.totalorder %s22, 1
    %p139 = por %p137, %p138
    %p140 = scmp.ne.s32.totalorder %s131, %s132
    %p141 = scmp.eq.s32.totalorder %s22, 0
    %p142 = por %p140, %p141
    %p143 = scmp.ne.s32.totalorder %s131, %s132
    %p144 = scmp.eq.s32.totalorder %s23, 1
    %p145 = por %p143, %p144
    %p147 = scmp.ne.s32.totalorder %s132, %s146
    %p148 = scmp.eq.s32.totalorder %s23, 0
    %p149 = por %p147, %p148
    %s151 = sadd.s32 %s150, 1
    %p154 = scmp.eq.s32.totalorder %s17, 1
    %p155 = scmp.ne.s32.totalorder %s150, %s152
    %p156 = scmp.eq.s32.totalorder %s17, 0
    %p157 = por %p155, %p156
    %p158 = scmp.ne.s32.totalorder %s150, %s152
    %p159 = scmp.eq.s32.totalorder %s22, 1
    %p160 = por %p158, %p159
    %p161 = scmp.ne.s32.totalorder %s152, %s153
    %p162 = scmp.eq.s32.totalorder %s22, 0
    %p163 = por %p161, %p162
    %p164 = scmp.ne.s32.totalorder %s152, %s153
    %p165 = scmp.eq.s32.totalorder %s23, 1
    %p166 = por %p164, %p165
    %p168 = scmp.ne.s32.totalorder %s153, %s167
    %p169 = scmp.eq.s32.totalorder %s23, 0
    %p170 = por %p168, %p169
    %s172 = sadd.s32 %s171, 1
    %p175 = scmp.eq.s32.totalorder %s17, 1
    %p176 = scmp.ne.s32.totalorder %s171, %s173
    %p177 = scmp.eq.s32.totalorder %s17, 0
    %p178 = por %p176, %p177
    %p179 = scmp.ne.s32.totalorder %s171, %s173
    %p180 = scmp.eq.s32.totalorder %s22, 1
    %p181 = por %p179, %p180
    %p182 = scmp.ne.s32.totalorder %s173, %s174
    %p183 = scmp.eq.s32.totalorder %s22, 0
    %p184 = por %p182, %p183
    %p185 = scmp.ne.s32.totalorder %s173, %s174
    %p186 = scmp.eq.s32.totalorder %s23, 1
    %p187 = por %p185, %p186
    %p189 = scmp.ne.s32.totalorder %s174, %s188
    %p190 = scmp.eq.s32.totalorder %s23, 0
    %p191 = por %p189, %p190
    %s193 = sadd.s32 %s192, 1
    %p196 = scmp.eq.s32.totalorder %s17, 1
    %p197 = scmp.ne.s32.totalorder %s192, %s194
    %p198 = scmp.eq.s32.totalorder %s17, 0
    %p199 = por %p197, %p198
    %p200 = scmp.ne.s32.totalorder %s192, %s194
    %p201 = scmp.eq.s32.totalorder %s22, 1
    %p202 = por %p200, %p201
    %p203 = scmp.ne.s32.totalorder %s194, %s195
    %p204 = scmp.eq.s32.totalorder %s22, 0
    %p205 = por %p203, %p204
    %p206 = scmp.ne.s32.totalorder %s194, %s195
    %p207 = scmp.eq.s32.totalorder %s23, 1
    %p208 = por %p206, %p207
    %p210 = scmp.ne.s32.totalorder %s195, %s209
    %p211 = scmp.eq.s32.totalorder %s23, 0
    %p212 = por %p210, %p211
    %s214 = sadd.s32 %s213, 1
    %p217 = scmp.eq.s32.totalorder %s17, 1
    %p218 = scmp.ne.s32.totalorder %s213, %s215
    %p219 = scmp.eq.s32.totalorder %s17, 0
    %p220 = por %p218, %p219
    %p221 = scmp.ne.s32.totalorder %s213, %s215
    %p222 = scmp.eq.s32.totalorder %s22, 1
    %p223 = por %p221, %p222
    %p224 = scmp.ne.s32.totalorder %s215, %s216
    %p225 = scmp.eq.s32.totalorder %s22, 0
    %p226 = por %p224, %p225
    %p227 = scmp.ne.s32.totalorder %s215, %s216
    %p228 = scmp.eq.s32.totalorder %s23, 1
    %p229 = por %p227, %p228
    %p231 = scmp.ne.s32.totalorder %s216, %s230
    %p232 = scmp.eq.s32.totalorder %s23, 0
    %p233 = por %p231, %p232
    %s235 = sadd.s32 %s234, 1
    %p238 = scmp.eq.s32.totalorder %s17, 1
    %p239 = scmp.ne.s32.totalorder %s234, %s236
    %p240 = scmp.eq.s32.totalorder %s17, 0
    %p241 = por %p239, %p240
    %p242 = scmp.ne.s32.totalorder %s234, %s236
    %p243 = scmp.eq.s32.totalorder %s22, 1
    %p244 = por %p242, %p243
    %p245 = scmp.ne.s32.totalorder %s236, %s237
    %p246 = scmp.eq.s32.totalorder %s22, 0
    %p247 = por %p245, %p246
    %p248 = scmp.ne.s32.totalorder %s236, %s237
    %p249 = scmp.eq.s32.totalorder %s23, 1
    %p250 = por %p248, %p249
    %p252 = scmp.ne.s32.totalorder %s237, %s251
    %p253 = scmp.eq.s32.totalorder %s23, 0
    %p254 = por %p252, %p253
    %s255 = ssub.s32 %s17, %s24
    %p256 = scmp.eq.s32.totalorder %s255, 0
    %s258 = sadd.s32 %s257, 1
    %s259 = scalar_select %p256, %s257, %s258
    %p262 = pneg %p256
    %p263 = scmp.eq.s32.totalorder %s17, 1
    %p264 = por %p262, %p263
    %p265 = scmp.ne.s32.totalorder %s257, %s260
    %p266 = scmp.eq.s32.totalorder %s17, 0
    %p267 = por %p265, %p266
    %p268 = scmp.ne.s32.totalorder %s257, %s260
    %p269 = scmp.eq.s32.totalorder %s22, 1
    %p270 = por %p268, %p269
    %p271 = scmp.ne.s32.totalorder %s260, %s261
    %p272 = scmp.eq.s32.totalorder %s22, 0
    %p273 = por %p271, %p272
    %p274 = scmp.ne.s32.totalorder %s260, %s261
    %p275 = scmp.eq.s32.totalorder %s23, 1
    %p276 = por %p274, %p275
    %p278 = scmp.ne.s32.totalorder %s261, %s277
    %p279 = scmp.eq.s32.totalorder %s23, 0
    %p280 = por %p278, %p279
    %p281 = scmp.le.s32.totalorder 1, %s17
    %p282 = scmp.lt.s32.totalorder %s17, 3
    %p283 = pnand %p281, %p282
    %p284 = pneg %p283
    // Predicated region
    $region9: #{supervised_autoencoder_forward.10} parent=5 // pred_check
      _
    $region10: #{supervised_autoencoder_forward.10} parent=5 // pred_check_branch
      %286 = sbr.rel (%p283) target = $region12
    $region11: #{supervised_autoencoder_forward.10} parent=5 // pred_region
      %s287 = ssub.s32 %s17, 1
      // Predicated region
      $region13: #{supervised_autoencoder_forward.10} parent=11 // pred_check
        %p288 = pneg %p142
      $region14: #{supervised_autoencoder_forward.10} parent=11 // pred_check_branch
        %290 = sbr.rel (%p288) target = $region16
      $region15: #{supervised_autoencoder_forward.10} parent=11 // pred_region
        _
      $region16: #{supervised_autoencoder_forward.10} parent=11 // pred_fallthru
        _
      // Predicated region
      $region17: #{supervised_autoencoder_forward.10} parent=11 // pred_check
        %p291 = pneg %p163
      $region18: #{supervised_autoencoder_forward.10} parent=11 // pred_check_branch
        %293 = sbr.rel (%p291) target = $region20
      $region19: #{supervised_autoencoder_forward.10} parent=11 // pred_region
        _
      $region20: #{supervised_autoencoder_forward.10} parent=11 // pred_fallthru
        _
      // Predicated region
      $region21: #{supervised_autoencoder_forward.10} parent=11 // pred_check
        %p294 = pneg %p184
      $region22: #{supervised_autoencoder_forward.10} parent=11 // pred_check_branch
        %296 = sbr.rel (%p294) target = $region24
      $region23: #{supervised_autoencoder_forward.10} parent=11 // pred_region
        _
      $region24: #{supervised_autoencoder_forward.10} parent=11 // pred_fallthru
        _
      // Predicated region
      $region25: #{supervised_autoencoder_forward.10} parent=11 // pred_check
        %p297 = pneg %p205
      $region26: #{supervised_autoencoder_forward.10} parent=11 // pred_check_branch
        %299 = sbr.rel (%p297) target = $region28
      $region27: #{supervised_autoencoder_forward.10} parent=11 // pred_region
        _
      $region28: #{supervised_autoencoder_forward.10} parent=11 // pred_fallthru
        _
      // Predicated region
      $region29: #{supervised_autoencoder_forward.10} parent=11 // pred_check
        %p300 = pneg %p226
      $region30: #{supervised_autoencoder_forward.10} parent=11 // pred_check_branch
        %302 = sbr.rel (%p300) target = $region32
      $region31: #{supervised_autoencoder_forward.10} parent=11 // pred_region
        _
      $region32: #{supervised_autoencoder_forward.10} parent=11 // pred_fallthru
        _
      // Predicated region
      $region33: #{supervised_autoencoder_forward.10} parent=11 // pred_check
        %p303 = pneg %p247
      $region34: #{supervised_autoencoder_forward.10} parent=11 // pred_check_branch
        %305 = sbr.rel (%p303) target = $region36
      $region35: #{supervised_autoencoder_forward.10} parent=11 // pred_region
        _
      $region36: #{supervised_autoencoder_forward.10} parent=11 // pred_fallthru
        _
    $region12: #{supervised_autoencoder_forward.10} parent=5 // pred_fallthru
      _
    %p306 = scmp.lt.s32.totalorder %s17, 2
    // Predicated region
    $region37: #{supervised_autoencoder_forward.10} parent=5 // pred_check
      %p307 = pneg %p306
    $region38: #{supervised_autoencoder_forward.10} parent=5 // pred_check_branch
      %309 = sbr.rel (%p307) target = $region40
    $region39: #{supervised_autoencoder_forward.10} parent=5 // pred_region
      // Predicated region
      $region41: #{supervised_autoencoder_forward.10} parent=39 // pred_check
        %p310 = pneg %p37
      $region42: #{supervised_autoencoder_forward.10} parent=39 // pred_check_branch
        %312 = sbr.rel (%p310) target = $region44
      $region43: #{supervised_autoencoder_forward.10} parent=39 // pred_region
        %p313 = scmp.lt.s32.totalorder %s17, 1
        %s314 = scalar_select %p313, %s17, 1
        %s315 = smul.addr %s314, 2
        %s316 = smul.addr %s315, 4
        %s317 = scalar_lea.vmem %s0, %s316
      $region44: #{supervised_autoencoder_forward.10} parent=39 // pred_fallthru
        _
      // Predicated region
      $region45: #{supervised_autoencoder_forward.10} parent=39 // pred_check
        %p318 = pneg %p63
      $region46: #{supervised_autoencoder_forward.10} parent=39 // pred_check_branch
        %320 = sbr.rel (%p318) target = $region48
      $region47: #{supervised_autoencoder_forward.10} parent=39 // pred_region
        %p321 = scmp.lt.s32.totalorder %s17, 1
        %s322 = scalar_select %p321, %s17, 1
        %s323 = smul.addr %s322, 2
        %s324 = smul.addr %s323, 4
        %s325 = scalar_lea.vmem %s1, %s324
      $region48: #{supervised_autoencoder_forward.10} parent=39 // pred_fallthru
        _
      // Predicated region
      $region49: #{supervised_autoencoder_forward.10} parent=39 // pred_check
        %p326 = pneg %p89
      $region50: #{supervised_autoencoder_forward.10} parent=39 // pred_check_branch
        %328 = sbr.rel (%p326) target = $region52
      $region51: #{supervised_autoencoder_forward.10} parent=39 // pred_region
        %p329 = scmp.lt.s32.totalorder %s17, 1
        %s330 = scalar_select %p329, %s17, 1
        %s331 = smul.addr %s330, 2
        %s332 = smul.addr %s331, 4
        %s333 = scalar_lea.vmem %s2, %s332
      $region52: #{supervised_autoencoder_forward.10} parent=39 // pred_fallthru
        _
      // Predicated region
      $region53: #{supervised_autoencoder_forward.10} parent=39 // pred_check
        %p334 = pneg %p115
      $region54: #{supervised_autoencoder_forward.10} parent=39 // pred_check_branch
        %336 = sbr.rel (%p334) target = $region56
      $region55: #{supervised_autoencoder_forward.10} parent=39 // pred_region
        %p337 = scmp.lt.s32.totalorder %s17, 1
        %s338 = scalar_select %p337, %s17, 1
        %s339 = smul.addr %s338, 2
        %s340 = smul.addr %s339, 4
        %s341 = scalar_lea.vmem %s3, %s340
      $region56: #{supervised_autoencoder_forward.10} parent=39 // pred_fallthru
        _
    $region40: #{supervised_autoencoder_forward.10} parent=5 // pred_fallthru
      _
    %p342 = scmp.le.s32.totalorder 1, %s17
    %p343 = scmp.lt.s32.totalorder %s17, 3
    %p344 = pnand %p342, %p343
    %p345 = pneg %p344
    // Predicated region
    $region57: #{supervised_autoencoder_forward.10} parent=5 // pred_check
      _
    $region58: #{supervised_autoencoder_forward.10} parent=5 // pred_check_branch
      %347 = sbr.rel (%p344) target = $region60
    $region59: #{supervised_autoencoder_forward.10} parent=5 // pred_region
      %s348 = ssub.s32 %s17, 1
      %p349 = scmp.lt.s32.totalorder %s22, 1
      %s350 = scalar_select %p349, %s22, 1
      %s351 = smul.addr %s350, 2
      %s352 = smul.addr %s351, 4
      %s353 = scalar_lea.vmem %s0, %s352
      %p354 = pneg %p43
      %p355 = pneg %p40
      %p356 = scmp.lt.s32.totalorder %s22, 1
      %s357 = scalar_select %p356, %s22, 1
      %s358 = smul.addr %s357, 2
      %s359 = smul.addr %s358, 4
      %s360 = scalar_lea.vmem %s1, %s359
      %p361 = pneg %p69
      %p362 = pneg %p66
      %p363 = scmp.lt.s32.totalorder %s22, 1
      %s364 = scalar_select %p363, %s22, 1
      %s365 = smul.addr %s364, 2
      %s366 = smul.addr %s365, 4
      %s367 = scalar_lea.vmem %s2, %s366
      %p368 = pneg %p95
      %p369 = pneg %p92
      %p370 = scmp.lt.s32.totalorder %s22, 1
      %s371 = scalar_select %p370, %s22, 1
      %s372 = smul.addr %s371, 2
      %s373 = smul.addr %s372, 4
      %s374 = scalar_lea.vmem %s3, %s373
      %p375 = pneg %p121
      %p376 = pneg %p118
      %p377 = pneg %p142
      %p378 = pneg %p139
      %p379 = pneg %p163
      %p380 = pneg %p160
      %p381 = pneg %p184
      %p382 = pneg %p181
      %p383 = pneg %p205
      %p384 = pneg %p202
      %p385 = pneg %p226
      %p386 = pneg %p223
      %p387 = pneg %p247
      %p388 = pneg %p244
      %p389 = pneg %p273
      %p390 = pneg %p270
      %p391 = scmp.lt.s32.totalorder %s22, 1
      %s392 = scalar_select %p391, %s22, 1
      %s393 = smul.addr %s392, 2
      %s394 = smul.addr %s393, 4
      %s395 = scalar_lea.vmem %s10, %s394
      %p396 = scmp.lt.s32.totalorder %s22, 1
      %s397 = scalar_select %p396, %s22, 1
      %s398 = smul.addr %s397, 2
      %s399 = smul.addr %s398, 4
      %s400 = scalar_lea.vmem %s0, %s399
      %p401 = scmp.lt.s32.totalorder %s22, 1
      %s402 = scalar_select %p401, %s22, 1
      %s403 = smul.addr %s402, 2
      %s404 = smul.addr %s403, 4
      %s405 = scalar_lea.vmem %s1, %s404
      %p406 = scmp.lt.s32.totalorder %s22, 1
      %s407 = scalar_select %p406, %s22, 1
      %s408 = smul.addr %s407, 2
      %s409 = smul.addr %s408, 4
      %s410 = scalar_lea.vmem %s2, %s409
      %p411 = scmp.lt.s32.totalorder %s22, 1
      %s412 = scalar_select %p411, %s22, 1
      %s413 = smul.addr %s412, 2
      %s414 = smul.addr %s413, 4
      %s415 = scalar_lea.vmem %s3, %s414
      %p416 = scmp.lt.s32.totalorder %s22, 1
      %s417 = scalar_select %p416, %s22, 1
      %s418 = smul.addr %s417, 2
      %s419 = smul.addr %s418, 4
      %s420 = scalar_lea.vmem %s10, %s419
      %v422 = vld [vmem:[%s400] sm:$0xf]
      %v423 = vld [vmem:[%s400 + $0x4] sm:$0xf]
      %v424 = vld [vmem:[%s4] sm:$0xf]
      %v425 = vld [vmem:[%s4 + $0x4] sm:$0xf]
      %v426 = vld [vmem:[%s4 + $0x8] sm:$0xf]
      %v427 = vld [vmem:[%s4 + $0xc] sm:$0xf]
      %v428 = vld [vmem:[%s405] sm:$0xf]
      %v429 = vld [vmem:[%s405 + $0x4] sm:$0xf]
      %v430 = vld [vmem:[%s5] sm:$0xf]
      %v431 = vld [vmem:[%s5 + $0x4] sm:$0xf]
      %v432 = vld [vmem:[%s5 + $0x8] sm:$0xf]
      %v433 = vld [vmem:[%s5 + $0xc] sm:$0xf]
      %v436 = vunpack.c.l.b16 %v428
      %v437 = vunpack.c.l.b16 %v429
      %v438 = vpack.c.b16 %v437, %v436
      %v443 = vunpack.c.l.b16 %v430
      %v444 = vunpack.c.l.b16 %v431
      %v445 = vunpack.c.l.b16 %v432
      %v446 = vunpack.c.l.b16 %v433
      %v447 = vpack.c.b16 %v444, %v443
      %v448 = vpack.c.b16 %v446, %v445
      %vm451 = vcmask 261120
      %v453 = vsel %vm451, %v438, 0
      %455 = vmatpush.bf16.msra.mxu0 0
      %456 = vmatpush.bf16.msra.mxu0 0
      %457 = vmatpush.bf16.msra.mxu0 0
      %458 = vmatpush.bf16.msra.mxu0 0
      %459 = vmatpush.bf16.msra.mxu0 0
      %460 = vmatpush.bf16.msra.mxu0 0
      %461 = vmatpush.bf16.msra.mxu0 %v448
      %462 = vmatpush.bf16.msra.mxu0 %v447
      %463 = vmatmul.bf16.gmra.mxu0 %v453
      %v464 = vpop.f32.mrf.mxu0
      %v465 = vadd.f32 0.0, %v464
      %v466 = vpop.f32.mrf.mxu0
      %v467 = vadd.f32 0.0, %v466
      %468 = vdwg.mxu0
      %v471 = vunpack.c.l.b16 %v422
      %v472 = vunpack.c.l.b16 %v423
      %v473 = vpack.c.b16 %v472, %v471
      %v478 = vunpack.c.l.b16 %v424
      %v479 = vunpack.c.l.b16 %v425
      %v480 = vunpack.c.l.b16 %v426
      %v481 = vunpack.c.l.b16 %v427
      %v482 = vpack.c.b16 %v479, %v478
      %v483 = vpack.c.b16 %v481, %v480
      %v487 = vsel %vm451, %v473, 0
      %489 = vmatpush.bf16.msra.mxu0 0
      %490 = vmatpush.bf16.msra.mxu0 0
      %491 = vmatpush.bf16.msra.mxu0 0
      %492 = vmatpush.bf16.msra.mxu0 0
      %493 = vmatpush.bf16.msra.mxu0 0
      %494 = vmatpush.bf16.msra.mxu0 0
      %495 = vmatpush.bf16.msra.mxu0 %v483
      %496 = vmatpush.bf16.msra.mxu0 %v482
      %497 = vmatmul.bf16.gmra.mxu0 %v487
      %v498 = vpop.f32.mrf.mxu0
      %v499 = vadd.f32 %v465, %v498
      %v500 = vpop.f32.mrf.mxu0
      %v501 = vadd.f32 %v467, %v500
      %502 = vdwg.mxu0
      %v503 = vld [vmem:[%s410] sm:$0xf]
      %v504 = vld [vmem:[%s410 + $0x4] sm:$0xf]
      %v505 = vld [vmem:[%s6] sm:$0xf]
      %v506 = vld [vmem:[%s6 + $0x4] sm:$0xf]
      %v507 = vld [vmem:[%s6 + $0x8] sm:$0xf]
      %v508 = vld [vmem:[%s6 + $0xc] sm:$0xf]
      %v511 = vunpack.c.l.b16 %v503
      %v512 = vunpack.c.l.b16 %v504
      %v513 = vpack.c.b16 %v512, %v511
      %v518 = vunpack.c.l.b16 %v505
      %v519 = vunpack.c.l.b16 %v506
      %v520 = vunpack.c.l.b16 %v507
      %v521 = vunpack.c.l.b16 %v508
      %v522 = vpack.c.b16 %v519, %v518
      %v523 = vpack.c.b16 %v521, %v520
      %v527 = vsel %vm451, %v513, 0
      %529 = vmatpush.bf16.msra.mxu0 0
      %530 = vmatpush.bf16.msra.mxu0 0
      %531 = vmatpush.bf16.msra.mxu0 0
      %532 = vmatpush.bf16.msra.mxu0 0
      %533 = vmatpush.bf16.msra.mxu0 0
      %534 = vmatpush.bf16.msra.mxu0 0
      %535 = vmatpush.bf16.msra.mxu0 %v523
      %536 = vmatpush.bf16.msra.mxu0 %v522
      %537 = vmatmul.bf16.gmra.mxu0 %v527
      %v538 = vpop.f32.mrf.mxu0
      %v539 = vadd.f32 0.0, %v538
      %v540 = vpop.f32.mrf.mxu0
      %v541 = vadd.f32 0.0, %v540
      %542 = vdwg.mxu0
      %v543 = vadd.f32 %v499, %v539
      %v544 = vadd.f32 %v501, %v541
      %v545 = vld [vmem:[%s415] sm:$0xf]
      %v546 = vld [vmem:[%s415 + $0x4] sm:$0xf]
      %v547 = vld [vmem:[%s7] sm:$0xf]
      %v548 = vld [vmem:[%s7 + $0x4] sm:$0xf]
      %v549 = vld [vmem:[%s7 + $0x8] sm:$0xf]
      %v550 = vld [vmem:[%s7 + $0xc] sm:$0xf]
      %v553 = vunpack.c.l.b16 %v545
      %v554 = vunpack.c.l.b16 %v546
      %v555 = vpack.c.b16 %v554, %v553
      %v560 = vunpack.c.l.b16 %v547
      %v561 = vunpack.c.l.b16 %v548
      %v562 = vunpack.c.l.b16 %v549
      %v563 = vunpack.c.l.b16 %v550
      %v564 = vpack.c.b16 %v561, %v560
      %v565 = vpack.c.b16 %v563, %v562
      %v569 = vsel %vm451, %v555, 0
      %571 = vmatpush.bf16.msra.mxu0 0
      %572 = vmatpush.bf16.msra.mxu0 0
      %573 = vmatpush.bf16.msra.mxu0 0
      %574 = vmatpush.bf16.msra.mxu0 0
      %575 = vmatpush.bf16.msra.mxu0 0
      %576 = vmatpush.bf16.msra.mxu0 0
      %577 = vmatpush.bf16.msra.mxu0 %v565
      %578 = vmatpush.bf16.msra.mxu0 %v564
      %579 = vmatmul.bf16.gmra.mxu0 %v569
      %v580 = vpop.f32.mrf.mxu0
      %v581 = vadd.f32 0.0, %v580
      %v582 = vpop.f32.mrf.mxu0
      %v583 = vadd.f32 0.0, %v582
      %584 = vdwg.mxu0
      %v585 = vadd.f32 %v543, %v581
      %v586 = vadd.f32 %v544, %v583
      %v587 = vld [vmem:[%s8] sm:$0x1]
      %v589 = vperm.slane %v587, 0
      %v591 = vadd.f32 %v585, %v589
      %v592 = vadd.f32 %v586, %v589
      %vm593 = vcmask 523264
      %v594 = vsel %vm593, %v591, 0.0
      %v595 = vsel %vm593, %v592, 0.0
      %v596 = vadd.f32 %v594, %v595
      %v597 = vrot.slane %v596, 4
      %v598 = vadd.f32 %v596, %v597
      %v599 = vrot.slane %v598, 2
      %v600 = vadd.f32 %v598, %v599
      %v601 = vrot.slane %v600, 1
      %v602 = vadd.f32 %v600, %v601
      %v603 = vmul.f32 %v591, %v591
      %v604 = vmul.f32 %v592, %v592
      %v605 = vsel %vm593, %v603, 0.0
      %v606 = vsel %vm593, %v604, 0.0
      %v607 = vadd.f32 %v605, %v606
      %v608 = vrot.slane %v607, 4
      %v609 = vadd.f32 %v607, %v608
      %v610 = vrot.slane %v609, 2
      %v611 = vadd.f32 %v609, %v610
      %v612 = vrot.slane %v611, 1
      %v613 = vadd.f32 %v611, %v612
      %615 = vrot.lane.b32.xlu0 %v602, 112
      %v616 = vpop.permute.xlu0 %615
      %v618 = vadd.f32 %v602, %v616
      %619 = vrot.lane.b32.xlu0 %v602, 96
      %v620 = vpop.permute.xlu0 %619
      %v622 = vadd.f32 %v618, %v620
      %623 = vrot.lane.b32.xlu0 %v602, 80
      %v624 = vpop.permute.xlu0 %623
      %v626 = vadd.f32 %v622, %v624
      %v627 = vrcp.pop 64.0
      %v628 = vmul.f32 64.0, %v627
      %v629 = vsub.f32 1.0, %v628
      %v630 = vmul.f32 %v627, %v629
      %v631 = vadd.f32 %v627, %v630
      %vm632 = vweird.f32 %v627
      %v633 = vsel %vm632, %v627, %v631
      %v634 = vmul.f32 %v626, %v633
      %636 = vrot.lane.b32.xlu0 %v613, 112
      %v637 = vpop.permute.xlu0 %636
      %v639 = vadd.f32 %v613, %v637
      %640 = vrot.lane.b32.xlu0 %v613, 96
      %v641 = vpop.permute.xlu0 %640
      %v643 = vadd.f32 %v639, %v641
      %644 = vrot.lane.b32.xlu0 %v613, 80
      %v645 = vpop.permute.xlu0 %644
      %v647 = vadd.f32 %v643, %v645
      %v648 = vmul.f32 %v647, %v633
      %v649 = vmul.f32 %v634, %v634
      %v650 = vsub.f32 %v648, %v649
      %v651 = vmax.f32 %v650, 0.0
      %v652 = vadd.f32 %v651, 1e-05
      %v653 = vrsqrt.pop %v652
      %v654 = vmul.f32 %v653, %v652
      %v655 = vmul.f32 %v654, %v653
      %v656 = vmul.f32 0.5, %v655
      %v657 = vsub.f32 1.5, %v656
      %v658 = vmul.f32 %v653, %v657
      %vm659 = vweird.f32 %v652
      %vm660 = vweird.f32 %v653
      %vm661 = vmor %vm659, %vm660
      %v662 = vsel %vm661, %v653, %v658
      %664 = vrot.lane.b32.xlu0 %v634, 16
      %v665 = vpop.permute.xlu0 %664
      %667 = vrot.lane.b32.xlu0 %v634, 32
      %v668 = vpop.permute.xlu0 %667
      %670 = vrot.lane.b32.xlu0 %v634, 48
      %v671 = vpop.permute.xlu0 %670
      %vm673 = vcmask 130048
      %v674 = vsel %vm673, %v634, %v665
      %v675 = vsel %vm451, %v674, %v668
      %vm676 = vcmask 392192
      %v677 = vsel %vm676, %v675, %v671
      %v678 = vperm.slane %v677, 0
      %v679 = vsub.f32 %v591, %v678
      %v680 = vsub.f32 %v592, %v678
      %682 = vrot.lane.b32.xlu0 %v662, 16
      %v683 = vpop.permute.xlu0 %682
      %685 = vrot.lane.b32.xlu0 %v662, 32
      %v686 = vpop.permute.xlu0 %685
      %688 = vrot.lane.b32.xlu0 %v662, 48
      %v689 = vpop.permute.xlu0 %688
      %v691 = vsel %vm673, %v662, %v683
      %v692 = vsel %vm451, %v691, %v686
      %v693 = vsel %vm676, %v692, %v689
      %v694 = vperm.slane %v693, 0
      %v695 = vmul.f32 %v679, %v694
      %v696 = vmul.f32 %v680, %v694
      %s697 = sld [smem:[#allocation2]]
      %vm698 = vcmp.gt.f32.partialorder %v695, 0.0
      %vm699 = vcmp.gt.f32.partialorder %v696, 0.0
      %v700 = vstv %s697
      %v701 = vmul.f32 %v700, %v695
      %v702 = vmul.f32 %v700, %v696
      %v703 = vsel %vm698, %v695, %v701
      %v704 = vsel %vm699, %v696, %v702
      %v705 = vpack.c.bf16 %v703, %v703
      %v706 = vpack.c.bf16 %v704, %v704
      %vm707 = vcmask 519168
      %708 = vst.msk [vmem:[%s420] sm:$0xf] %vm707, %v705
      %709 = vst.msk [vmem:[%s420 + $0x4] sm:$0xf] %vm707, %v706
      %p710 = scmp.lt.s32.totalorder %s22, 1
      %s711 = scalar_select %p710, %s22, 1
      %s712 = smul.addr %s711, 2
      %s713 = smul.addr %s712, 4
      %s714 = scalar_lea.vmem %s10, %s713
      // Predicated region
      $region61: #{supervised_autoencoder_forward.10} parent=59 // pred_check
        %p715 = pneg %p270
      $region62: #{supervised_autoencoder_forward.10} parent=59 // pred_check_branch
        %717 = sbr.rel (%p715) target = $region64
      $region63: #{supervised_autoencoder_forward.10} parent=59 // pred_region
        _
      $region64: #{supervised_autoencoder_forward.10} parent=59 // pred_fallthru
        _
    $region60: #{supervised_autoencoder_forward.10} parent=5 // pred_fallthru
      _
    %p718 = scmp.le.s32.totalorder 2, %s17
    // Predicated region
    $region65: #{supervised_autoencoder_forward.10} parent=5 // pred_check
      %p719 = pneg %p718
    $region66: #{supervised_autoencoder_forward.10} parent=5 // pred_check_branch
      %721 = sbr.rel (%p719) target = $region68
    $region67: #{supervised_autoencoder_forward.10} parent=5 // pred_region
      %s722 = ssub.s32 %s17, 2
      // Predicated region
      $region69: #{supervised_autoencoder_forward.10} parent=67 // pred_check
        %p723 = pneg %p276
      $region70: #{supervised_autoencoder_forward.10} parent=67 // pred_check_branch
        %725 = sbr.rel (%p723) target = $region72
      $region71: #{supervised_autoencoder_forward.10} parent=67 // pred_region
        %p726 = scmp.lt.s32.totalorder %s23, 1
        %s727 = scalar_select %p726, %s23, 1
        %s728 = smul.addr %s727, 2
        %s729 = smul.addr %s728, 4
        %s730 = scalar_lea.vmem %s10, %s729
      $region72: #{supervised_autoencoder_forward.10} parent=67 // pred_fallthru
        _
    $region68: #{supervised_autoencoder_forward.10} parent=5 // pred_fallthru
      _
  $region6: #{supervised_autoencoder_forward.10} parent=0 // loop_footer
    %s21 = sadd.s32 1, %s17
  $region7: #{supervised_autoencoder_forward.10} parent=0 // loop_footer_branch
    %16 = sbr.rel target = $region3
  $region8: #{supervised_autoencoder_forward.10} parent=0 // loop_exit
    _

// kernel: supervised_autoencoder_forward.11
$region0: #{supervised_autoencoder_forward.11}
  #allocation0 [shape = 'u32[]', space=smem, size = 0x4, offset = 0x4, fixed_abs, tag = 'smem constant byte address 0x4 - core index']
  #allocation1 [shape = 'u32[72,128]{1,0:T(1,128)}', space=vmem, size = 0x9000, scoped, tag = 'internal scratch']
  #allocation2 [shape = 'f32[1,1]{1,0:T(1,128)S(6)}', space=smem, size = 0x200, scoped, tag = 'scoped memory for supervised_autoencoder_forward.11']
  %s0 = inlined_call_operand.vmem [shape: bf16[2,64,16], index: 0, kind: input, shape index: {}]
  %s1 = inlined_call_operand.vmem [shape: bf16[2,64,16], index: 1, kind: input, shape index: {}]
  %s2 = inlined_call_operand.vmem [shape: bf16[2,64,16], index: 2, kind: input, shape index: {}]
  %s3 = inlined_call_operand.vmem [shape: bf16[2,64,16], index: 3, kind: input, shape index: {}]
  %s4 = inlined_call_operand.vmem [shape: bf16[16,4], index: 4, kind: input, shape index: {}]
  %s5 = inlined_call_operand.vmem [shape: bf16[16,4], index: 5, kind: input, shape index: {}]
  %s6 = inlined_call_operand.vmem [shape: bf16[16,4], index: 6, kind: input, shape index: {}]
  %s7 = inlined_call_operand.vmem [shape: bf16[16,4], index: 7, kind: input, shape index: {}]
  %s8 = inlined_call_operand.vmem [shape: f32[1,4], index: 8, kind: input, shape index: {}]
  %s9 = inlined_call_operand.<no memory space> [shape: f32[1,1], index: 9, kind: input, shape index: {}]
  %s10 = inlined_call_operand.vmem [shape: f32[2,64,4], index: 10, kind: output, shape index: {}]
  %s11 = sld [smem:[#allocation0]]
  $region73: #{supervised_autoencoder_forward.11} parent=0
    _
  %s13 = ssub.s32 1, %s11
  %s14 = scalar_select 0, %s13, %s11
  %15 = sst [smem:[#allocation2]] %s9
  loop: start=0, step=1, limit=4
  $region2: #{supervised_autoencoder_forward.11} parent=0 // loop_pre_header
    _
  $region3: #{supervised_autoencoder_forward.11} parent=0 // loop_header
    %s17 = sphi 0, %s21
    %p18 = scmp.ge.s32.totalorder %s17, 4
    %s27 = sphi 0, %s29
    %s30 = sphi 0, %s27
    %s31 = sphi 0, %s30
    %s47 = sphi 0, %s31
    %s53 = sphi 0, %s55
    %s56 = sphi 0, %s53
    %s57 = sphi 0, %s56
    %s73 = sphi 0, %s57
    %s79 = sphi 0, %s81
    %s82 = sphi 0, %s79
    %s83 = sphi 0, %s82
    %s99 = sphi 0, %s83
    %s105 = sphi 0, %s107
    %s108 = sphi 0, %s105
    %s109 = sphi 0, %s108
    %s125 = sphi 0, %s109
    %s129 = sphi 0, %s129
    %s131 = sphi 0, %s129
    %s132 = sphi 0, %s131
    %s146 = sphi 0, %s132
    %s150 = sphi 0, %s150
    %s152 = sphi 0, %s150
    %s153 = sphi 0, %s152
    %s167 = sphi 0, %s153
    %s171 = sphi 0, %s171
    %s173 = sphi 0, %s171
    %s174 = sphi 0, %s173
    %s188 = sphi 0, %s174
    %s192 = sphi 0, %s192
    %s194 = sphi 0, %s192
    %s195 = sphi 0, %s194
    %s209 = sphi 0, %s195
    %s213 = sphi 0, %s213
    %s215 = sphi 0, %s213
    %s216 = sphi 0, %s215
    %s230 = sphi 0, %s216
    %s234 = sphi 0, %s234
    %s236 = sphi 0, %s234
    %s237 = sphi 0, %s236
    %s251 = sphi 0, %s237
    %s257 = sphi 0, %s259
    %s260 = sphi 0, %s257
    %s261 = sphi 0, %s260
    %s277 = sphi 0, %s261
  $region4: #{supervised_autoencoder_forward.11} parent=0 // loop_header_branch
    %20 = sbr.rel (%p18) target = $region8
  $region5: #{supervised_autoencoder_forward.11} parent=0 // loop_body
    %s22 = ssub.s32 %s17, 1
    %s23 = ssub.s32 %s17, 2
    %s24 = sadd.s32 %s17, 1
    %s25 = ssub.s32 %s17, %s24
    %p26 = scmp.eq.s32.totalorder %s25, 0
    %s28 = sadd.s32 %s27, 1
    %s29 = scalar_select %p26, %s27, %s28
    %p32 = pneg %p26
    %p33 = scmp.eq.s32.totalorder %s17, 1
    %p34 = por %p32, %p33
    %p35 = scmp.ne.s32.totalorder %s27, %s30
    %p36 = scmp.eq.s32.totalorder %s17, 0
    %p37 = por %p35, %p36
    %p38 = scmp.ne.s32.totalorder %s27, %s30
    %p39 = scmp.eq.s32.totalorder %s22, 1
    %p40 = por %p38, %p39
    %p41 = scmp.ne.s32.totalorder %s30, %s31
    %p42 = scmp.eq.s32.totalorder %s22, 0
    %p43 = por %p41, %p42
    %p44 = scmp.ne.s32.totalorder %s30, %s31
    %p45 = scmp.eq.s32.totalorder %s23, 1
    %p46 = por %p44, %p45
    %p48 = scmp.ne.s32.totalorder %s31, %s47
    %p49 = scmp.eq.s32.totalorder %s23, 0
    %p50 = por %p48, %p49
    %s51 = ssub.s32 %s17, %s24
    %p52 = scmp.eq.s32.totalorder %s51, 0
    %s54 = sadd.s32 %s53, 1
    %s55 = scalar_select %p52, %s53, %s54
    %p58 = pneg %p52
    %p59 = scmp.eq.s32.totalorder %s17, 1
    %p60 = por %p58, %p59
    %p61 = scmp.ne.s32.totalorder %s53, %s56
    %p62 = scmp.eq.s32.totalorder %s17, 0
    %p63 = por %p61, %p62
    %p64 = scmp.ne.s32.totalorder %s53, %s56
    %p65 = scmp.eq.s32.totalorder %s22, 1
    %p66 = por %p64, %p65
    %p67 = scmp.ne.s32.totalorder %s56, %s57
    %p68 = scmp.eq.s32.totalorder %s22, 0
    %p69 = por %p67, %p68
    %p70 = scmp.ne.s32.totalorder %s56, %s57
    %p71 = scmp.eq.s32.totalorder %s23, 1
    %p72 = por %p70, %p71
    %p74 = scmp.ne.s32.totalorder %s57, %s73
    %p75 = scmp.eq.s32.totalorder %s23, 0
    %p76 = por %p74, %p75
    %s77 = ssub.s32 %s17, %s24
    %p78 = scmp.eq.s32.totalorder %s77, 0
    %s80 = sadd.s32 %s79, 1
    %s81 = scalar_select %p78, %s79, %s80
    %p84 = pneg %p78
    %p85 = scmp.eq.s32.totalorder %s17, 1
    %p86 = por %p84, %p85
    %p87 = scmp.ne.s32.totalorder %s79, %s82
    %p88 = scmp.eq.s32.totalorder %s17, 0
    %p89 = por %p87, %p88
    %p90 = scmp.ne.s32.totalorder %s79, %s82
    %p91 = scmp.eq.s32.totalorder %s22, 1
    %p92 = por %p90, %p91
    %p93 = scmp.ne.s32.totalorder %s82, %s83
    %p94 = scmp.eq.s32.totalorder %s22, 0
    %p95 = por %p93, %p94
    %p96 = scmp.ne.s32.totalorder %s82, %s83
    %p97 = scmp.eq.s32.totalorder %s23, 1
    %p98 = por %p96, %p97
    %p100 = scmp.ne.s32.totalorder %s83, %s99
    %p101 = scmp.eq.s32.totalorder %s23, 0
    %p102 = por %p100, %p101
    %s103 = ssub.s32 %s17, %s24
    %p104 = scmp.eq.s32.totalorder %s103, 0
    %s106 = sadd.s32 %s105, 1
    %s107 = scalar_select %p104, %s105, %s106
    %p110 = pneg %p104
    %p111 = scmp.eq.s32.totalorder %s17, 1
    %p112 = por %p110, %p111
    %p113 = scmp.ne.s32.totalorder %s105, %s108
    %p114 = scmp.eq.s32.totalorder %s17, 0
    %p115 = por %p113, %p114
    %p116 = scmp.ne.s32.totalorder %s105, %s108
    %p117 = scmp.eq.s32.totalorder %s22, 1
    %p118 = por %p116, %p117
    %p119 = scmp.ne.s32.totalorder %s108, %s109
    %p120 = scmp.eq.s32.totalorder %s22, 0
    %p121 = por %p119, %p120
    %p122 = scmp.ne.s32.totalorder %s108, %s109
    %p123 = scmp.eq.s32.totalorder %s23, 1
    %p124 = por %p122, %p123
    %p126 = scmp.ne.s32.totalorder %s109, %s125
    %p127 = scmp.eq.s32.totalorder %s23, 0
    %p128 = por %p126, %p127
    %s130 = sadd.s32 %s129, 1
    %p133 = scmp.eq.s32.totalorder %s17, 1
    %p134 = scmp.ne.s32.totalorder %s129, %s131
    %p135 = scmp.eq.s32.totalorder %s17, 0
    %p136 = por %p134, %p135
    %p137 = scmp.ne.s32.totalorder %s129, %s131
    %p138 = scmp.eq.s32.totalorder %s22, 1
    %p139 = por %p137, %p138
    %p140 = scmp.ne.s32.totalorder %s131, %s132
    %p141 = scmp.eq.s32.totalorder %s22, 0
    %p142 = por %p140, %p141
    %p143 = scmp.ne.s32.totalorder %s131, %s132
    %p144 = scmp.eq.s32.totalorder %s23, 1
    %p145 = por %p143, %p144
    %p147 = scmp.ne.s32.totalorder %s132, %s146
    %p148 = scmp.eq.s32.totalorder %s23, 0
    %p149 = por %p147, %p148
    %s151 = sadd.s32 %s150, 1
    %p154 = scmp.eq.s32.totalorder %s17, 1
    %p155 = scmp.ne.s32.totalorder %s150, %s152
    %p156 = scmp.eq.s32.totalorder %s17, 0
    %p157 = por %p155, %p156
    %p158 = scmp.ne.s32.totalorder %s150, %s152
    %p159 = scmp.eq.s32.totalorder %s22, 1
    %p160 = por %p158, %p159
    %p161 = scmp.ne.s32.totalorder %s152, %s153
    %p162 = scmp.eq.s32.totalorder %s22, 0
    %p163 = por %p161, %p162
    %p164 = scmp.ne.s32.totalorder %s152, %s153
    %p165 = scmp.eq.s32.totalorder %s23, 1
    %p166 = por %p164, %p165
    %p168 = scmp.ne.s32.totalorder %s153, %s167
    %p169 = scmp.eq.s32.totalorder %s23, 0
    %p170 = por %p168, %p169
    %s172 = sadd.s32 %s171, 1
    %p175 = scmp.eq.s32.totalorder %s17, 1
    %p176 = scmp.ne.s32.totalorder %s171, %s173
    %p177 = scmp.eq.s32.totalorder %s17, 0
    %p178 = por %p176, %p177
    %p179 = scmp.ne.s32.totalorder %s171, %s173
    %p180 = scmp.eq.s32.totalorder %s22, 1
    %p181 = por %p179, %p180
    %p182 = scmp.ne.s32.totalorder %s173, %s174
    %p183 = scmp.eq.s32.totalorder %s22, 0
    %p184 = por %p182, %p183
    %p185 = scmp.ne.s32.totalorder %s173, %s174
    %p186 = scmp.eq.s32.totalorder %s23, 1
    %p187 = por %p185, %p186
    %p189 = scmp.ne.s32.totalorder %s174, %s188
    %p190 = scmp.eq.s32.totalorder %s23, 0
    %p191 = por %p189, %p190
    %s193 = sadd.s32 %s192, 1
    %p196 = scmp.eq.s32.totalorder %s17, 1
    %p197 = scmp.ne.s32.totalorder %s192, %s194
    %p198 = scmp.eq.s32.totalorder %s17, 0
    %p199 = por %p197, %p198
    %p200 = scmp.ne.s32.totalorder %s192, %s194
    %p201 = scmp.eq.s32.totalorder %s22, 1
    %p202 = por %p200, %p201
    %p203 = scmp.ne.s32.totalorder %s194, %s195
    %p204 = scmp.eq.s32.totalorder %s22, 0
    %p205 = por %p203, %p204
    %p206 = scmp.ne.s32.totalorder %s194, %s195
    %p207 = scmp.eq.s32.totalorder %s23, 1
    %p208 = por %p206, %p207
    %p210 = scmp.ne.s32.totalorder %s195, %s209
    %p211 = scmp.eq.s32.totalorder %s23, 0
    %p212 = por %p210, %p211
    %s214 = sadd.s32 %s213, 1
    %p217 = scmp.eq.s32.totalorder %s17, 1
    %p218 = scmp.ne.s32.totalorder %s213, %s215
    %p219 = scmp.eq.s32.totalorder %s17, 0
    %p220 = por %p218, %p219
    %p221 = scmp.ne.s32.totalorder %s213, %s215
    %p222 = scmp.eq.s32.totalorder %s22, 1
    %p223 = por %p221, %p222
    %p224 = scmp.ne.s32.totalorder %s215, %s216
    %p225 = scmp.eq.s32.totalorder %s22, 0
    %p226 = por %p224, %p225
    %p227 = scmp.ne.s32.totalorder %s215, %s216
    %p228 = scmp.eq.s32.totalorder %s23, 1
    %p229 = por %p227, %p228
    %p231 = scmp.ne.s32.totalorder %s216, %s230
    %p232 = scmp.eq.s32.totalorder %s23, 0
    %p233 = por %p231, %p232
    %s235 = sadd.s32 %s234, 1
    %p238 = scmp.eq.s32.totalorder %s17, 1
    %p239 = scmp.ne.s32.totalorder %s234, %s236
    %p240 = scmp.eq.s32.totalorder %s17, 0
    %p241 = por %p239, %p240
    %p242 = scmp.ne.s32.totalorder %s234, %s236
    %p243 = scmp.eq.s32.totalorder %s22, 1
    %p244 = por %p242, %p243
    %p245 = scmp.ne.s32.totalorder %s236, %s237
    %p246 = scmp.eq.s32.totalorder %s22, 0
    %p247 = por %p245, %p246
    %p248 = scmp.ne.s32.totalorder %s236, %s237
    %p249 = scmp.eq.s32.totalorder %s23, 1
    %p250 = por %p248, %p249
    %p252 = scmp.ne.s32.totalorder %s237, %s251
    %p253 = scmp.eq.s32.totalorder %s23, 0
    %p254 = por %p252, %p253
    %s255 = ssub.s32 %s17, %s24
    %p256 = scmp.eq.s32.totalorder %s255, 0
    %s258 = sadd.s32 %s257, 1
    %s259 = scalar_select %p256, %s257, %s258
    %p262 = pneg %p256
    %p263 = scmp.eq.s32.totalorder %s17, 1
    %p264 = por %p262, %p263
    %p265 = scmp.ne.s32.totalorder %s257, %s260
    %p266 = scmp.eq.s32.totalorder %s17, 0
    %p267 = por %p265, %p266
    %p268 = scmp.ne.s32.totalorder %s257, %s260
    %p269 = scmp.eq.s32.totalorder %s22, 1
    %p270 = por %p268, %p269
    %p271 = scmp.ne.s32.totalorder %s260, %s261
    %p272 = scmp.eq.s32.totalorder %s22, 0
    %p273 = por %p271, %p272
    %p274 = scmp.ne.s32.totalorder %s260, %s261
    %p275 = scmp.eq.s32.totalorder %s23, 1
    %p276 = por %p274, %p275
    %p278 = scmp.ne.s32.totalorder %s261, %s277
    %p279 = scmp.eq.s32.totalorder %s23, 0
    %p280 = por %p278, %p279
    %p281 = scmp.le.s32.totalorder 1, %s17
    %p282 = scmp.lt.s32.totalorder %s17, 3
    %p283 = pnand %p281, %p282
    %p284 = pneg %p283
    // Predicated region
    $region9: #{supervised_autoencoder_forward.11} parent=5 // pred_check
      _
    $region10: #{supervised_autoencoder_forward.11} parent=5 // pred_check_branch
      %286 = sbr.rel (%p283) target = $region12
    $region11: #{supervised_autoencoder_forward.11} parent=5 // pred_region
      %s287 = ssub.s32 %s17, 1
      // Predicated region
      $region13: #{supervised_autoencoder_forward.11} parent=11 // pred_check
        %p288 = pneg %p142
      $region14: #{supervised_autoencoder_forward.11} parent=11 // pred_check_branch
        %290 = sbr.rel (%p288) target = $region16
      $region15: #{supervised_autoencoder_forward.11} parent=11 // pred_region
        _
      $region16: #{supervised_autoencoder_forward.11} parent=11 // pred_fallthru
        _
      // Predicated region
      $region17: #{supervised_autoencoder_forward.11} parent=11 // pred_check
        %p291 = pneg %p163
      $region18: #{supervised_autoencoder_forward.11} parent=11 // pred_check_branch
        %293 = sbr.rel (%p291) target = $region20
      $region19: #{supervised_autoencoder_forward.11} parent=11 // pred_region
        _
      $region20: #{supervised_autoencoder_forward.11} parent=11 // pred_fallthru
        _
      // Predicated region
      $region21: #{supervised_autoencoder_forward.11} parent=11 // pred_check
        %p294 = pneg %p184
      $region22: #{supervised_autoencoder_forward.11} parent=11 // pred_check_branch
        %296 = sbr.rel (%p294) target = $region24
      $region23: #{supervised_autoencoder_forward.11} parent=11 // pred_region
        _
      $region24: #{supervised_autoencoder_forward.11} parent=11 // pred_fallthru
        _
      // Predicated region
      $region25: #{supervised_autoencoder_forward.11} parent=11 // pred_check
        %p297 = pneg %p205
      $region26: #{supervised_autoencoder_forward.11} parent=11 // pred_check_branch
        %299 = sbr.rel (%p297) target = $region28
      $region27: #{supervised_autoencoder_forward.11} parent=11 // pred_region
        _
      $region28: #{supervised_autoencoder_forward.11} parent=11 // pred_fallthru
        _
      // Predicated region
      $region29: #{supervised_autoencoder_forward.11} parent=11 // pred_check
        %p300 = pneg %p226
      $region30: #{supervised_autoencoder_forward.11} parent=11 // pred_check_branch
        %302 = sbr.rel (%p300) target = $region32
      $region31: #{supervised_autoencoder_forward.11} parent=11 // pred_region
        _
      $region32: #{supervised_autoencoder_forward.11} parent=11 // pred_fallthru
        _
      // Predicated region
      $region33: #{supervised_autoencoder_forward.11} parent=11 // pred_check
        %p303 = pneg %p247
      $region34: #{supervised_autoencoder_forward.11} parent=11 // pred_check_branch
        %305 = sbr.rel (%p303) target = $region36
      $region35: #{supervised_autoencoder_forward.11} parent=11 // pred_region
        _
      $region36: #{supervised_autoencoder_forward.11} parent=11 // pred_fallthru
        _
    $region12: #{supervised_autoencoder_forward.11} parent=5 // pred_fallthru
      _
    %p306 = scmp.lt.s32.totalorder %s17, 2
    // Predicated region
    $region37: #{supervised_autoencoder_forward.11} parent=5 // pred_check
      %p307 = pneg %p306
    $region38: #{supervised_autoencoder_forward.11} parent=5 // pred_check_branch
      %309 = sbr.rel (%p307) target = $region40
    $region39: #{supervised_autoencoder_forward.11} parent=5 // pred_region
      // Predicated region
      $region41: #{supervised_autoencoder_forward.11} parent=39 // pred_check
        %p310 = pneg %p37
      $region42: #{supervised_autoencoder_forward.11} parent=39 // pred_check_branch
        %312 = sbr.rel (%p310) target = $region44
      $region43: #{supervised_autoencoder_forward.11} parent=39 // pred_region
        %p313 = scmp.lt.s32.totalorder %s17, 1
        %s314 = scalar_select %p313, %s17, 1
        %s315 = smul.addr %s314, 8
        %s316 = smul.addr %s315, 4
        %s317 = scalar_lea.vmem %s0, %s316
      $region44: #{supervised_autoencoder_forward.11} parent=39 // pred_fallthru
        _
      // Predicated region
      $region45: #{supervised_autoencoder_forward.11} parent=39 // pred_check
        %p318 = pneg %p63
      $region46: #{supervised_autoencoder_forward.11} parent=39 // pred_check_branch
        %320 = sbr.rel (%p318) target = $region48
      $region47: #{supervised_autoencoder_forward.11} parent=39 // pred_region
        %p321 = scmp.lt.s32.totalorder %s17, 1
        %s322 = scalar_select %p321, %s17, 1
        %s323 = smul.addr %s322, 8
        %s324 = smul.addr %s323, 4
        %s325 = scalar_lea.vmem %s1, %s324
      $region48: #{supervised_autoencoder_forward.11} parent=39 // pred_fallthru
        _
      // Predicated region
      $region49: #{supervised_autoencoder_forward.11} parent=39 // pred_check
        %p326 = pneg %p89
      $region50: #{supervised_autoencoder_forward.11} parent=39 // pred_check_branch
        %328 = sbr.rel (%p326) target = $region52
      $region51: #{supervised_autoencoder_forward.11} parent=39 // pred_region
        %p329 = scmp.lt.s32.totalorder %s17, 1
        %s330 = scalar_select %p329, %s17, 1
        %s331 = smul.addr %s330, 8
        %s332 = smul.addr %s331, 4
        %s333 = scalar_lea.vmem %s2, %s332
      $region52: #{supervised_autoencoder_forward.11} parent=39 // pred_fallthru
        _
      // Predicated region
      $region53: #{supervised_autoencoder_forward.11} parent=39 // pred_check
        %p334 = pneg %p115
      $region54: #{supervised_autoencoder_forward.11} parent=39 // pred_check_branch
        %336 = sbr.rel (%p334) target = $region56
      $region55: #{supervised_autoencoder_forward.11} parent=39 // pred_region
        %p337 = scmp.lt.s32.totalorder %s17, 1
        %s338 = scalar_select %p337, %s17, 1
        %s339 = smul.addr %s338, 8
        %s340 = smul.addr %s339, 4
        %s341 = scalar_lea.vmem %s3, %s340
      $region56: #{supervised_autoencoder_forward.11} parent=39 // pred_fallthru
        _
    $region40: #{supervised_autoencoder_forward.11} parent=5 // pred_fallthru
      _
    %p342 = scmp.le.s32.totalorder 1, %s17
    %p343 = scmp.lt.s32.totalorder %s17, 3
    %p344 = pnand %p342, %p343
    %p345 = pneg %p344
    // Predicated region
    $region57: #{supervised_autoencoder_forward.11} parent=5 // pred_check
      _
    $region58: #{supervised_autoencoder_forward.11} parent=5 // pred_check_branch
      %347 = sbr.rel (%p344) target = $region60
    $region59: #{supervised_autoencoder_forward.11} parent=5 // pred_region
      %s348 = ssub.s32 %s17, 1
      %p349 = scmp.lt.s32.totalorder %s22, 1
      %s350 = scalar_select %p349, %s22, 1
      %s351 = smul.addr %s350, 8
      %s352 = smul.addr %s351, 4
      %s353 = scalar_lea.vmem %s0, %s352
      %p354 = pneg %p43
      %p355 = pneg %p40
      %p356 = scmp.lt.s32.totalorder %s22, 1
      %s357 = scalar_select %p356, %s22, 1
      %s358 = smul.addr %s357, 8
      %s359 = smul.addr %s358, 4
      %s360 = scalar_lea.vmem %s1, %s359
      %p361 = pneg %p69
      %p362 = pneg %p66
      %p363 = scmp.lt.s32.totalorder %s22, 1
      %s364 = scalar_select %p363, %s22, 1
      %s365 = smul.addr %s364, 8
      %s366 = smul.addr %s365, 4
      %s367 = scalar_lea.vmem %s2, %s366
      %p368 = pneg %p95
      %p369 = pneg %p92
      %p370 = scmp.lt.s32.totalorder %s22, 1
      %s371 = scalar_select %p370, %s22, 1
      %s372 = smul.addr %s371, 8
      %s373 = smul.addr %s372, 4
      %s374 = scalar_lea.vmem %s3, %s373
      %p375 = pneg %p121
      %p376 = pneg %p118
      %p377 = pneg %p142
      %p378 = pneg %p139
      %p379 = pneg %p163
      %p380 = pneg %p160
      %p381 = pneg %p184
      %p382 = pneg %p181
      %p383 = pneg %p205
      %p384 = pneg %p202
      %p385 = pneg %p226
      %p386 = pneg %p223
      %p387 = pneg %p247
      %p388 = pneg %p244
      %p389 = pneg %p273
      %p390 = pneg %p270
      %p391 = scmp.lt.s32.totalorder %s22, 1
      %s392 = scalar_select %p391, %s22, 1
      %s393 = smul.addr %s392, 8
      %s394 = smul.addr %s393, 8
      %s395 = scalar_lea.vmem %s10, %s394
      %p396 = scmp.lt.s32.totalorder %s22, 1
      %s397 = scalar_select %p396, %s22, 1
      %s398 = smul.addr %s397, 8
      %s399 = smul.addr %s398, 4
      %s400 = scalar_lea.vmem %s0, %s399
      %p401 = scmp.lt.s32.totalorder %s22, 1
      %s402 = scalar_select %p401, %s22, 1
      %s403 = smul.addr %s402, 8
      %s404 = smul.addr %s403, 4
      %s405 = scalar_lea.vmem %s1, %s404
      %p406 = scmp.lt.s32.totalorder %s22, 1
      %s407 = scalar_select %p406, %s22, 1
      %s408 = smul.addr %s407, 8
      %s409 = smul.addr %s408, 4
      %s410 = scalar_lea.vmem %s2, %s409
      %p411 = scmp.lt.s32.totalorder %s22, 1
      %s412 = scalar_select %p411, %s22, 1
      %s413 = smul.addr %s412, 8
      %s414 = smul.addr %s413, 4
      %s415 = scalar_lea.vmem %s3, %s414
      %p416 = scmp.lt.s32.totalorder %s22, 1
      %s417 = scalar_select %p416, %s22, 1
      %s418 = smul.addr %s417, 8
      %s419 = smul.addr %s418, 8
      %s420 = scalar_lea.vmem %s10, %s419
      %v422 = vld [vmem:[%s400] sm:$0xf]
      %v423 = vld [vmem:[%s400 + $0x4] sm:$0xf]
      %v424 = vld [vmem:[%s400 + $0x8] sm:$0xf]
      %v425 = vld [vmem:[%s400 + $0xc] sm:$0xf]
      %v426 = vld [vmem:[%s400 + $0x10] sm:$0xf]
      %v427 = vld [vmem:[%s400 + $0x14] sm:$0xf]
      %v428 = vld [vmem:[%s400 + $0x18] sm:$0xf]
      %v429 = vld [vmem:[%s400 + $0x1c] sm:$0xf]
      %v430 = vld [vmem:[%s4] sm:$0xf]
      %v431 = vld [vmem:[%s4 + $0x4] sm:$0xf]
      %v432 = vld [vmem:[%s405] sm:$0xf]
      %v433 = vld [vmem:[%s405 + $0x4] sm:$0xf]
      %v434 = vld [vmem:[%s405 + $0x8] sm:$0xf]
      %v435 = vld [vmem:[%s405 + $0xc] sm:$0xf]
      %v436 = vld [vmem:[%s405 + $0x10] sm:$0xf]
      %v437 = vld [vmem:[%s405 + $0x14] sm:$0xf]
      %v438 = vld [vmem:[%s405 + $0x18] sm:$0xf]
      %v439 = vld [vmem:[%s405 + $0x1c] sm:$0xf]
      %v440 = vld [vmem:[%s5] sm:$0xf]
      %v441 = vld [vmem:[%s5 + $0x4] sm:$0xf]
      %v450 = vunpack.c.l.b16 %v432
      %v451 = vunpack.c.l.b16 %v433
      %v452 = vunpack.c.l.b16 %v434
      %v453 = vunpack.c.l.b16 %v435
      %v454 = vunpack.c.l.b16 %v436
      %v455 = vunpack.c.l.b16 %v437
      %v456 = vunpack.c.l.b16 %v438
      %v457 = vunpack.c.l.b16 %v439
      %v458 = vpack.c.b16 %v451, %v450
      %v459 = vpack.c.b16 %v453, %v452
      %v460 = vpack.c.b16 %v455, %v454
      %v461 = vpack.c.b16 %v457, %v456
      %v464 = vunpack.c.l.b16 %v440
      %v465 = vunpack.c.l.b16 %v441
      %v466 = vpack.c.b16 %v465, %v464
      %vm468 = vcmask 130048
      %v470 = vsel %vm468, %v458, 0
      %v473 = vsel %vm468, %v459, 0
      %v476 = vsel %vm468, %v460, 0
      %v479 = vsel %vm468, %v461, 0
      %481 = vmatpush.bf16.msra.mxu0 0
      %482 = vmatpush.bf16.msra.mxu0 0
      %483 = vmatpush.bf16.msra.mxu0 0
      %484 = vmatpush.bf16.msra.mxu0 0
      %485 = vmatpush.bf16.msra.mxu0 0
      %486 = vmatpush.bf16.msra.mxu0 0
      %487 = vmatpush.bf16.msra.mxu0 0
      %488 = vmatpush.bf16.msra.mxu0 %v466
      %489 = vmatmul.bf16.gmra.mxu0 %v470
      %v490 = vpop.f32.mrf.mxu0
      %v491 = vadd.f32 0.0, %v490
      %v492 = vpop.f32.mrf.mxu0
      %v493 = vadd.f32 0.0, %v492
      %494 = vmatmul.bf16.gmra.mxu0 %v473
      %v495 = vpop.f32.mrf.mxu0
      %v496 = vadd.f32 0.0, %v495
      %v497 = vpop.f32.mrf.mxu0
      %v498 = vadd.f32 0.0, %v497
      %499 = vmatmul.bf16.gmra.mxu0 %v476
      %v500 = vpop.f32.mrf.mxu0
      %v501 = vadd.f32 0.0, %v500
      %v502 = vpop.f32.mrf.mxu0
      %v503 = vadd.f32 0.0, %v502
      %504 = vmatmul.bf16.gmra.mxu0 %v479
      %v505 = vpop.f32.mrf.mxu0
      %v506 = vadd.f32 0.0, %v505
      %v507 = vpop.f32.mrf.mxu0
      %v508 = vadd.f32 0.0, %v507
      %509 = vdwg.mxu0
      %v518 = vunpack.c.l.b16 %v422
      %v519 = vunpack.c.l.b16 %v423
      %v520 = vunpack.c.l.b16 %v424
      %v521 = vunpack.c.l.b16 %v425
      %v522 = vunpack.c.l.b16 %v426
      %v523 = vunpack.c.l.b16 %v427
      %v524 = vunpack.c.l.b16 %v428
      %v525 = vunpack.c.l.b16 %v429
      %v526 = vpack.c.b16 %v519, %v518
      %v527 = vpack.c.b16 %v521, %v520
      %v528 = vpack.c.b16 %v523, %v522
      %v529 = vpack.c.b16 %v525, %v524
      %v532 = vunpack.c.l.b16 %v430
      %v533 = vunpack.c.l.b16 %v431
      %v534 = vpack.c.b16 %v533, %v532
      %v537 = vsel %vm468, %v526, 0
      %v540 = vsel %vm468, %v527, 0
      %v543 = vsel %vm468, %v528, 0
      %v546 = vsel %vm468, %v529, 0
      %548 = vmatpush.bf16.msra.mxu0 0
      %549 = vmatpush.bf16.msra.mxu0 0
      %550 = vmatpush.bf16.msra.mxu0 0
      %551 = vmatpush.bf16.msra.mxu0 0
      %552 = vmatpush.bf16.msra.mxu0 0
      %553 = vmatpush.bf16.msra.mxu0 0
      %554 = vmatpush.bf16.msra.mxu0 0
      %555 = vmatpush.bf16.msra.mxu0 %v534
      %556 = vmatmul.bf16.gmra.mxu0 %v537
      %v557 = vpop.f32.mrf.mxu0
      %v558 = vadd.f32 %v491, %v557
      %v559 = vpop.f32.mrf.mxu0
      %v560 = vadd.f32 %v493, %v559
      %561 = vmatmul.bf16.gmra.mxu0 %v540
      %v562 = vpop.f32.mrf.mxu0
      %v563 = vadd.f32 %v496, %v562
      %v564 = vpop.f32.mrf.mxu0
      %v565 = vadd.f32 %v498, %v564
      %566 = vmatmul.bf16.gmra.mxu0 %v543
      %v567 = vpop.f32.mrf.mxu0
      %v568 = vadd.f32 %v501, %v567
      %v569 = vpop.f32.mrf.mxu0
      %v570 = vadd.f32 %v503, %v569
      %571 = vmatmul.bf16.gmra.mxu0 %v546
      %v572 = vpop.f32.mrf.mxu0
      %v573 = vadd.f32 %v506, %v572
      %v574 = vpop.f32.mrf.mxu0
      %v575 = vadd.f32 %v508, %v574
      %576 = vdwg.mxu0
      %v577 = vld [vmem:[%s410] sm:$0xf]
      %v578 = vld [vmem:[%s410 + $0x4] sm:$0xf]
      %v579 = vld [vmem:[%s410 + $0x8] sm:$0xf]
      %v580 = vld [vmem:[%s410 + $0xc] sm:$0xf]
      %v581 = vld [vmem:[%s410 + $0x10] sm:$0xf]
      %v582 = vld [vmem:[%s410 + $0x14] sm:$0xf]
      %v583 = vld [vmem:[%s410 + $0x18] sm:$0xf]
      %v584 = vld [vmem:[%s410 + $0x1c] sm:$0xf]
      %v585 = vld [vmem:[%s6] sm:$0xf]
      %v586 = vld [vmem:[%s6 + $0x4] sm:$0xf]
      %v595 = vunpack.c.l.b16 %v577
      %v596 = vunpack.c.l.b16 %v578
      %v597 = vunpack.c.l.b16 %v579
      %v598 = vunpack.c.l.b16 %v580
      %v599 = vunpack.c.l.b16 %v581
      %v600 = vunpack.c.l.b16 %v582
      %v601 = vunpack.c.l.b16 %v583
      %v602 = vunpack.c.l.b16 %v584
      %v603 = vpack.c.b16 %v596, %v595
      %v604 = vpack.c.b16 %v598, %v597
      %v605 = vpack.c.b16 %v600, %v599
      %v606 = vpack.c.b16 %v602, %v601
      %v609 = vunpack.c.l.b16 %v585
      %v610 = vunpack.c.l.b16 %v586
      %v611 = vpack.c.b16 %v610, %v609
      %v614 = vsel %vm468, %v603, 0
      %v617 = vsel %vm468, %v604, 0
      %v620 = vsel %vm468, %v605, 0
      %v623 = vsel %vm468, %v606, 0
      %625 = vmatpush.bf16.msra.mxu0 0
      %626 = vmatpush.bf16.msra.mxu0 0
      %627 = vmatpush.bf16.msra.mxu0 0
      %628 = vmatpush.bf16.msra.mxu0 0
      %629 = vmatpush.bf16.msra.mxu0 0
      %630 = vmatpush.bf16.msra.mxu0 0
      %631 = vmatpush.bf16.msra.mxu0 0
      %632 = vmatpush.bf16.msra.mxu0 %v611
      %633 = vmatmul.bf16.gmra.mxu0 %v614
      %v634 = vpop.f32.mrf.mxu0
      %v635 = vadd.f32 0.0, %v634
      %v636 = vpop.f32.mrf.mxu0
      %v637 = vadd.f32 0.0, %v636
      %638 = vmatmul.bf16.gmra.mxu0 %v617
      %v639 = vpop.f32.mrf.mxu0
      %v640 = vadd.f32 0.0, %v639
      %v641 = vpop.f32.mrf.mxu0
      %v642 = vadd.f32 0.0, %v641
      %643 = vmatmul.bf16.gmra.mxu0 %v620
      %v644 = vpop.f32.mrf.mxu0
      %v645 = vadd.f32 0.0, %v644
      %v646 = vpop.f32.mrf.mxu0
      %v647 = vadd.f32 0.0, %v646
      %648 = vmatmul.bf16.gmra.mxu0 %v623
      %v649 = vpop.f32.mrf.mxu0
      %v650 = vadd.f32 0.0, %v649
      %v651 = vpop.f32.mrf.mxu0
      %v652 = vadd.f32 0.0, %v651
      %653 = vdwg.mxu0
      %v654 = vadd.f32 %v558, %v635
      %v655 = vadd.f32 %v560, %v637
      %v656 = vadd.f32 %v563, %v640
      %v657 = vadd.f32 %v565, %v642
      %v658 = vadd.f32 %v568, %v645
      %v659 = vadd.f32 %v570, %v647
      %v660 = vadd.f32 %v573, %v650
      %v661 = vadd.f32 %v575, %v652
      %v662 = vld [vmem:[%s415] sm:$0xf]
      %v663 = vld [vmem:[%s415 + $0x4] sm:$0xf]
      %v664 = vld [vmem:[%s415 + $0x8] sm:$0xf]
      %v665 = vld [vmem:[%s415 + $0xc] sm:$0xf]
      %v666 = vld [vmem:[%s415 + $0x10] sm:$0xf]
      %v667 = vld [vmem:[%s415 + $0x14] sm:$0xf]
      %v668 = vld [vmem:[%s415 + $0x18] sm:$0xf]
      %v669 = vld [vmem:[%s415 + $0x1c] sm:$0xf]
      %v670 = vld [vmem:[%s7] sm:$0xf]
      %v671 = vld [vmem:[%s7 + $0x4] sm:$0xf]
      %v680 = vunpack.c.l.b16 %v662
      %v681 = vunpack.c.l.b16 %v663
      %v682 = vunpack.c.l.b16 %v664
      %v683 = vunpack.c.l.b16 %v665
      %v684 = vunpack.c.l.b16 %v666
      %v685 = vunpack.c.l.b16 %v667
      %v686 = vunpack.c.l.b16 %v668
      %v687 = vunpack.c.l.b16 %v669
      %v688 = vpack.c.b16 %v681, %v680
      %v689 = vpack.c.b16 %v683, %v682
      %v690 = vpack.c.b16 %v685, %v684
      %v691 = vpack.c.b16 %v687, %v686
      %v694 = vunpack.c.l.b16 %v670
      %v695 = vunpack.c.l.b16 %v671
      %v696 = vpack.c.b16 %v695, %v694
      %v699 = vsel %vm468, %v688, 0
      %v702 = vsel %vm468, %v689, 0
      %v705 = vsel %vm468, %v690, 0
      %v708 = vsel %vm468, %v691, 0
      %710 = vmatpush.bf16.msra.mxu0 0
      %711 = vmatpush.bf16.msra.mxu0 0
      %712 = vmatpush.bf16.msra.mxu0 0
      %713 = vmatpush.bf16.msra.mxu0 0
      %714 = vmatpush.bf16.msra.mxu0 0
      %715 = vmatpush.bf16.msra.mxu0 0
      %716 = vmatpush.bf16.msra.mxu0 0
      %717 = vmatpush.bf16.msra.mxu0 %v696
      %718 = vmatmul.bf16.gmra.mxu0 %v699
      %v719 = vpop.f32.mrf.mxu0
      %v720 = vadd.f32 0.0, %v719
      %v721 = vpop.f32.mrf.mxu0
      %v722 = vadd.f32 0.0, %v721
      %723 = vmatmul.bf16.gmra.mxu0 %v702
      %v724 = vpop.f32.mrf.mxu0
      %v725 = vadd.f32 0.0, %v724
      %v726 = vpop.f32.mrf.mxu0
      %v727 = vadd.f32 0.0, %v726
      %728 = vmatmul.bf16.gmra.mxu0 %v705
      %v729 = vpop.f32.mrf.mxu0
      %v730 = vadd.f32 0.0, %v729
      %v731 = vpop.f32.mrf.mxu0
      %v732 = vadd.f32 0.0, %v731
      %733 = vmatmul.bf16.gmra.mxu0 %v708
      %v734 = vpop.f32.mrf.mxu0
      %v735 = vadd.f32 0.0, %v734
      %v736 = vpop.f32.mrf.mxu0
      %v737 = vadd.f32 0.0, %v736
      %738 = vdwg.mxu0
      %v739 = vadd.f32 %v654, %v720
      %v740 = vadd.f32 %v655, %v722
      %v741 = vadd.f32 %v656, %v725
      %v742 = vadd.f32 %v657, %v727
      %v743 = vadd.f32 %v658, %v730
      %v744 = vadd.f32 %v659, %v732
      %v745 = vadd.f32 %v660, %v735
      %v746 = vadd.f32 %v661, %v737
      %v747 = vld [vmem:[%s8] sm:$0x1]
      %v749 = vperm.slane %v747, 0
      %v751 = vadd.f32 %v739, %v749
      %v752 = vadd.f32 %v740, %v749
      %v753 = vadd.f32 %v741, %v749
      %v754 = vadd.f32 %v742, %v749
      %v755 = vadd.f32 %v743, %v749
      %v756 = vadd.f32 %v744, %v749
      %v757 = vadd.f32 %v745, %v749
      %v758 = vadd.f32 %v746, %v749
      %vm759 = vcmask 31744
      %760 = vst.msk [vmem:[%s420] sm:$0xff] %vm759, %v751
      %761 = vst.msk [vmem:[%s420 + $0x8] sm:$0xff] %vm759, %v752
      %762 = vst.msk [vmem:[%s420 + $0x10] sm:$0xff] %vm759, %v753
      %763 = vst.msk [vmem:[%s420 + $0x18] sm:$0xff] %vm759, %v754
      %764 = vst.msk [vmem:[%s420 + $0x20] sm:$0xff] %vm759, %v755
      %765 = vst.msk [vmem:[%s420 + $0x28] sm:$0xff] %vm759, %v756
      %766 = vst.msk [vmem:[%s420 + $0x30] sm:$0xff] %vm759, %v757
      %767 = vst.msk [vmem:[%s420 + $0x38] sm:$0xff] %vm759, %v758
      %p768 = scmp.lt.s32.totalorder %s22, 1
      %s769 = scalar_select %p768, %s22, 1
      %s770 = smul.addr %s769, 8
      %s771 = smul.addr %s770, 8
      %s772 = scalar_lea.vmem %s10, %s771
      // Predicated region
      $region61: #{supervised_autoencoder_forward.11} parent=59 // pred_check
        %p773 = pneg %p270
      $region62: #{supervised_autoencoder_forward.11} parent=59 // pred_check_branch
        %775 = sbr.rel (%p773) target = $region64
      $region63: #{supervised_autoencoder_forward.11} parent=59 // pred_region
        _
      $region64: #{supervised_autoencoder_forward.11} parent=59 // pred_fallthru
        _
    $region60: #{supervised_autoencoder_forward.11} parent=5 // pred_fallthru
      _
    %p776 = scmp.le.s32.totalorder 2, %s17
    // Predicated region
    $region65: #{supervised_autoencoder_forward.11} parent=5 // pred_check
      %p777 = pneg %p776
    $region66: #{supervised_autoencoder_forward.11} parent=5 // pred_check_branch
      %779 = sbr.rel (%p777) target = $region68
    $region67: #{supervised_autoencoder_forward.11} parent=5 // pred_region
      %s780 = ssub.s32 %s17, 2
      // Predicated region
      $region69: #{supervised_autoencoder_forward.11} parent=67 // pred_check
        %p781 = pneg %p276
      $region70: #{supervised_autoencoder_forward.11} parent=67 // pred_check_branch
        %783 = sbr.rel (%p781) target = $region72
      $region71: #{supervised_autoencoder_forward.11} parent=67 // pred_region
        %p784 = scmp.lt.s32.totalorder %s23, 1
        %s785 = scalar_select %p784, %s23, 1
        %s786 = smul.addr %s785, 8
        %s787 = smul.addr %s786, 8
        %s788 = scalar_lea.vmem %s10, %s787
      $region72: #{supervised_autoencoder_forward.11} parent=67 // pred_fallthru
        _
    $region68: #{supervised_autoencoder_forward.11} parent=5 // pred_fallthru
      _
  $region6: #{supervised_autoencoder_forward.11} parent=0 // loop_footer
    %s21 = sadd.s32 1, %s17
  $region7: #{supervised_autoencoder_forward.11} parent=0 // loop_footer_branch
    %16 = sbr.rel target = $region3
  $region8: #{supervised_autoencoder_forward.11} parent=0 // loop_exit
    _

</llo_original>
